<compile_context>
chip_gen: v7x
topology: tpu7x:2x2x1
jax: 0.10.0
libtpu: 0.0.40
codegen_flags: <defaults>
</compile_context>

<pallas_src>
import jax
import jax.numpy as jnp
from jax import lax
from jax.experimental import pallas as pl
from jax.experimental.pallas import tpu as pltpu


VMEM_LIMIT_BYTES = 32 * 1024 * 1024


def _round_up(x, m):
    return ((x + m - 1) // m) * m


def _cdiv(a, b):
    return (a + b - 1) // b


def _choose_tile(m16, max_tile, min_steps=2):
    """m16 is a multiple of 16. Pick a 16-aligned tile, preferring >= min_steps
    grid steps (keeps both v7x TensorCores busy) while capping at max_tile."""
    t = min(max_tile, m16)
    if m16 >= 16 * min_steps:
        t = min(t, _round_up(_cdiv(m16, min_steps), 16))
    return max(t, 16)


# ---------------------------------------------------------------------------
# Pallas kernels
# ---------------------------------------------------------------------------
def _conv_relu_pool_kernel(p0_ref, p1_ref, p2_ref, p3_ref, w_ref, b_ref, o_ref):
    """Fused conv-as-matmul + bias + relu + 2x2/2 max-pool.

    p{0..3}_ref : (TILE_M, K) bf16  im2col patches, one per pool-window offset
    w_ref       : (K, C)      bf16
    b_ref       : (1, C)      f32
    o_ref       : (TILE_M, C) bf16  pooled output rows, ordered (image, p, q)
    """
    w = w_ref[...]
    z0 = jnp.dot(p0_ref[...], w, preferred_element_type=jnp.float32)
    z1 = jnp.dot(p1_ref[...], w, preferred_element_type=jnp.float32)
    z2 = jnp.dot(p2_ref[...], w, preferred_element_type=jnp.float32)
    z3 = jnp.dot(p3_ref[...], w, preferred_element_type=jnp.float32)
    # relu and 2x2 max-pool commute; per-channel bias is shared by the 4 offsets.
    z = jnp.maximum(jnp.maximum(z0, z1), jnp.maximum(z2, z3))
    o_ref[...] = jnp.maximum(z + b_ref[...], 0.0).astype(o_ref.dtype)


def _mlp_head_kernel(x_ref, w1_ref, b1_ref, w2_ref, b2_ref, o_ref):
    """fc1 + relu + fc2 + log_softmax fused in a single kernel (f32 math)."""
    h = jnp.dot(x_ref[...], w1_ref[...], preferred_element_type=jnp.float32)
    h = jnp.maximum(h + b1_ref[...], 0.0)
    z = jnp.dot(h.astype(jnp.bfloat16), w2_ref[...],
                preferred_element_type=jnp.float32)
    z = z + b2_ref[...]
    m = jnp.max(z, axis=-1, keepdims=True)
    lse = m + jnp.log(jnp.sum(jnp.exp(z - m), axis=-1, keepdims=True))
    o_ref[...] = (z - lse).astype(o_ref.dtype)


# ---------------------------------------------------------------------------
# pallas_call wrappers (M-tiled grids, resident weights, bf16 MXU inputs)
# ---------------------------------------------------------------------------
def conv_relu_pool(patches, w, b, *, max_tile=1024):
    """patches: 4-tuple of (M, K) bf16 ; w: (K, C) bf16 ; b: (1, C) f32.

    Returns the pooled+relu'd conv output of shape (M, C) in bf16."""
    m, k = patches[0].shape
    c = w.shape[1]
    m16 = _round_up(m, 16)
    if m16 != m:
        patches = tuple(jnp.pad(p, ((0, m16 - m), (0, 0))) for p in patches)
    t = _choose_tile(m16, max_tile)
    grid = (_cdiv(m16, t),)
    cost = pl.CostEstimate(
        flops=2 * 4 * m16 * k * c,
        transcendentals=0,
        bytes_accessed=4 * m16 * k * 2 + k * c * 2 + c * 4 + m16 * c * 2,
    )
    patch_spec = pl.BlockSpec((t, k), lambda i: (i, 0))
    out = pl.pallas_call(
        _conv_relu_pool_kernel,
        out_shape=jax.ShapeDtypeStruct((m16, c), jnp.bfloat16),
        grid=grid,
        in_specs=[
            patch_spec, patch_spec, patch_spec, patch_spec,
            pl.BlockSpec((k, c), lambda i: (0, 0)),
            pl.BlockSpec((1, c), lambda i: (0, 0)),
        ],
        out_specs=pl.BlockSpec((t, c), lambda i: (i, 0)),
        compiler_params=pltpu.CompilerParams(
            dimension_semantics=("parallel",),
            vmem_limit_bytes=VMEM_LIMIT_BYTES,
        ),
        cost_estimate=cost,
    )(*patches, w, b)
    return out[:m]


def mlp_head(x, w1, b1, w2, b2, *, max_tile=512):
    """x: (N, K1) bf16 ; w1: (K1, C1) bf16 ; w2: (C1, C2) bf16 -> (N, C2) f32."""
    n, k1 = x.shape
    c1 = w1.shape[1]
    c2 = w2.shape[1]
    n16 = _round_up(n, 16)
    if n16 != n:
        x = jnp.pad(x, ((0, n16 - n), (0, 0)))
    t = _choose_tile(n16, max_tile)
    grid = (_cdiv(n16, t),)
    cost = pl.CostEstimate(
        flops=2 * n16 * (k1 * c1 + c1 * c2),
        transcendentals=n16 * (c2 + 1),
        bytes_accessed=(n16 * k1 * 2 + k1 * c1 * 2 + c1 * c2 * 2
                        + (c1 + c2) * 4 + n16 * c2 * 4),
    )
    out = pl.pallas_call(
        _mlp_head_kernel,
        out_shape=jax.ShapeDtypeStruct((n16, c2), jnp.float32),
        grid=grid,
        in_specs=[
            pl.BlockSpec((t, k1), lambda i: (i, 0)),
            pl.BlockSpec((k1, c1), lambda i: (0, 0)),
            pl.BlockSpec((1, c1), lambda i: (0, 0)),
            pl.BlockSpec((c1, c2), lambda i: (0, 0)),
            pl.BlockSpec((1, c2), lambda i: (0, 0)),
        ],
        out_specs=pl.BlockSpec((t, c2), lambda i: (i, 0)),
        compiler_params=pltpu.CompilerParams(
            dimension_semantics=("parallel",),
            vmem_limit_bytes=VMEM_LIMIT_BYTES,
        ),
        cost_estimate=cost,
    )(x, w1, b1, w2, b2)
    return out[:n]


# ---------------------------------------------------------------------------
# Glue: pool-offset im2col (strided slices only), param prep, forward pass
# ---------------------------------------------------------------------------
def im2col_pooled_offsets(x, kh, kw):
    """x: (N, H, W, C) NHWC. Valid kh x kw conv (stride 1) followed by a 2x2/2
    max-pool. Returns 4 patch matrices (one per pool-window offset d=di*2+dj),
    each of shape (N*Hp*Wp, kh*kw*C) with rows ordered (image, p, q) and
    columns ordered (i, j, c). Built from strided slices + channel concat only:
    no materialized transpose pass."""
    n, h, w, c = x.shape
    ho, wo = h - kh + 1, w - kw + 1
    hp, wp = ho // 2, wo // 2
    k = kh * kw * c
    mats = []
    for di in range(2):
        for dj in range(2):
            cols = []
            for i in range(kh):
                for j in range(kw):
                    cols.append(x[:, di + i: di + i + 2 * hp: 2,
                                     dj + j: dj + j + 2 * wp: 2, :])
            pat = jnp.concatenate(cols, axis=-1)            # (N, Hp, Wp, K)
            mats.append(pat.reshape(n * hp * wp, k))
    return tuple(mats), (n, hp, wp)


def init_params(key):
    ks = jax.random.split(key, 8)

    def u(k, shape, fan_in):
        bound = 1.0 / jnp.sqrt(fan_in)
        return jax.random.uniform(k, shape, jnp.float32, -bound, bound)

    return {
        # PyTorch shapes: conv weight (Cout, Cin, kh, kw), linear (out, in)
        "conv1_w": u(ks[0], (20, 1, 5, 5), 1 * 5 * 5),
        "conv1_b": u(ks[1], (20,), 1 * 5 * 5),
        "conv2_w": u(ks[2], (50, 20, 5, 5), 20 * 5 * 5),
        "conv2_b": u(ks[3], (50,), 20 * 5 * 5),
        "fc1_w": u(ks[4], (500, 4 * 4 * 50), 4 * 4 * 50),
        "fc1_b": u(ks[5], (500,), 4 * 4 * 50),
        "fc2_w": u(ks[6], (10, 500), 500),
        "fc2_b": u(ks[7], (10,), 500),
    }


def prepare_params(params):
    """One-time weight relayout (hoisted out of the forward pass)."""
    w1 = jnp.transpose(params["conv1_w"], (2, 3, 1, 0)).reshape(25, 20)
    w2 = jnp.transpose(params["conv2_w"], (2, 3, 1, 0)).reshape(500, 50)
    # fc1 expects PyTorch (C, H, W) flatten order; permute its input rows so it
    # directly consumes our NHWC (H, W, C) flatten -> no per-forward transpose.
    fw1 = jnp.transpose(params["fc1_w"].reshape(500, 50, 4, 4),
                        (2, 3, 1, 0)).reshape(800, 500)
    fw2 = params["fc2_w"].T                                    # (500, 10)
    return {
        "w1": w1.astype(jnp.bfloat16),
        "b1": params["conv1_b"].reshape(1, 20).astype(jnp.float32),
        "w2": w2.astype(jnp.bfloat16),
        "b2": params["conv2_b"].reshape(1, 50).astype(jnp.float32),
        "fw1": fw1.astype(jnp.bfloat16),
        "fb1": params["fc1_b"].reshape(1, 500).astype(jnp.float32),
        "fw2": fw2.astype(jnp.bfloat16),
        "fb2": params["fc2_b"].reshape(1, 10).astype(jnp.float32),
    }


def net_forward(x_nchw, p):
    n = x_nchw.shape[0]
    x = jnp.transpose(x_nchw, (0, 2, 3, 1)).astype(jnp.bfloat16)     # NHWC bf16

    # conv1 (1->20, 5x5) + relu + max_pool2d(2,2)
    p1, (_, hp1, wp1) = im2col_pooled_offsets(x, 5, 5)               # 4 x (N*144, 25)
    y1 = conv_relu_pool(p1, p["w1"], p["b1"], max_tile=2048)         # (N*144, 20) bf16
    y1 = y1.reshape(n, hp1, wp1, 20)                                 # (N,12,12,20) bf16

    # conv2 (20->50, 5x5) + relu + max_pool2d(2,2)
    p2, (_, hp2, wp2) = im2col_pooled_offsets(y1, 5, 5)              # 4 x (N*16, 500)
    y2 = conv_relu_pool(p2, p["w2"], p["b2"], max_tile=1024)         # (N*16, 50) bf16

    # flatten: rows (image, p, q) with channels last -> (N, 800) in HWC order;
    # fc1 weights were pre-permuted to match.
    xf = y2.reshape(n, hp2 * wp2 * 50)

    # fc1 + relu + fc2 + log_softmax (single fused kernel)
    return mlp_head(xf, p["fw1"], p["fb1"], p["fw2"], p["fb2"])      # (N, 10) f32


net_forward_jit = jax.jit(net_forward)


# ---------------------------------------------------------------------------
# Pure-XLA reference (same bf16 weight/input quantization, f32 math)
# ---------------------------------------------------------------------------
def reference_forward(x_nchw, params):
    def q(a):
        return a.astype(jnp.bfloat16).astype(jnp.float32)

    def conv(x, w, b):
        y = lax.conv_general_dilated(
            x, w, (1, 1), "VALID",
            dimension_numbers=("NCHW", "OIHW", "NCHW"))
        return y + b[None, :, None, None]

    def pool(x):
        return lax.reduce_window(x, jnp.array(-jnp.inf, x.dtype), lax.max,
                                 (1, 1, 2, 2), (1, 1, 2, 2), "VALID")

    x = q(x_nchw)
    y = pool(jnp.maximum(conv(x, q(params["conv1_w"]), params["conv1_b"]), 0.0))
    y = pool(jnp.maximum(conv(y, q(params["conv2_w"]), params["conv2_b"]), 0.0))
    flat = y.reshape(y.shape[0], -1)                  # (N, 800) in (C,H,W) order
    h = jnp.maximum(flat @ q(params["fc1_w"]).T + params["fc1_b"], 0.0)
    z = h @ q(params["fc2_w"]).T + params["fc2_b"]
    return jax.nn.log_softmax(z, axis=-1)


if __name__ == "__main__":
    key = jax.random.PRNGKey(0)
    k_x, k_p = jax.random.split(key)
    # fc1 (4*4*50 inputs) implies 28x28 single-channel images.
    x = jax.random.normal(k_x, (2, 1, 28, 28), jnp.float32)
    params = init_params(k_p)
    prepped = prepare_params(params)

    out = net_forward_jit(x, prepped)
    out = jax.block_until_ready(out)

    assert out.shape == (2, 10)
    # log_softmax rows must exponentiate-and-sum to ~1
    assert bool(jnp.all(jnp.abs(jnp.sum(jnp.exp(out), axis=1) - 1.0) < 1e-4))

    # loose tolerance: bf16 weights/activations vs f32 reference
    ref = jax.jit(reference_forward)(x, params)
    max_err = float(jnp.max(jnp.abs(out - ref)))
    assert max_err < 1e-1, f"mismatch vs XLA reference: {max_err}"

    print("KERNEL_OK")
</pallas_src>

<mosaic_0001>
module attributes {stable_mosaic.version = 11 : i64} {
  func.func @_conv_relu_pool_kernel(%arg0: i32, %arg1: memref<144x25xbf16, #tpu.memory_space<vmem>>, %arg2: memref<144x25xbf16, #tpu.memory_space<vmem>>, %arg3: memref<144x25xbf16, #tpu.memory_space<vmem>>, %arg4: memref<144x25xbf16, #tpu.memory_space<vmem>>, %arg5: memref<25x20xbf16, #tpu.memory_space<vmem>>, %arg6: memref<1x20xf32, #tpu.memory_space<vmem>>, %arg7: memref<144x20xbf16, #tpu.memory_space<vmem>>) attributes {dimension_semantics = [#tpu.dimension_semantics<parallel>], iteration_bounds = array<i64: 2>, scalar_prefetch = 0 : i64, scratch_operands = 0 : i64, tpu.core_type = #tpu.core_type<tc>, window_params = [{transform_indices = @transform_0, window_bounds = array<i64: 144, 25>}, {transform_indices = @transform_1, window_bounds = array<i64: 144, 25>}, {transform_indices = @transform_2, window_bounds = array<i64: 144, 25>}, {transform_indices = @transform_3, window_bounds = array<i64: 144, 25>}, {pipeline_mode = #tpu.pipeline_mode<synchronous>, transform_indices = @transform_4, window_bounds = array<i64: 25, 20>}, {pipeline_mode = #tpu.pipeline_mode<synchronous>, transform_indices = @transform_5, window_bounds = array<i64: 1, 20>}, {transform_indices = @transform_6, window_bounds = array<i64: 144, 20>}]} {
    %c0 = arith.constant 0 : index
    %c0_0 = arith.constant 0 : index
    %0 = vector.load %arg5[%c0, %c0_0] : memref<25x20xbf16, #tpu.memory_space<vmem>>, vector<25x20xbf16>
    %c0_1 = arith.constant 0 : index
    %c0_2 = arith.constant 0 : index
    %1 = vector.load %arg1[%c0_1, %c0_2] : memref<144x25xbf16, #tpu.memory_space<vmem>>, vector<144x25xbf16>
    %cst = arith.constant dense<0.000000e+00> : vector<144x20xf32>
    %2 = tpu.matmul %1, %0, %cst {dimension_numbers = #tpu.dot_dimension_numbers<[1], [0], [0], [1], [0, 0, 1, 1], [], []>} : vector<144x25xbf16>, vector<25x20xbf16>, vector<144x20xf32> -> vector<144x20xf32>
    %c0_3 = arith.constant 0 : index
    %c0_4 = arith.constant 0 : index
    %3 = vector.load %arg2[%c0_3, %c0_4] : memref<144x25xbf16, #tpu.memory_space<vmem>>, vector<144x25xbf16>
    %cst_5 = arith.constant dense<0.000000e+00> : vector<144x20xf32>
    %4 = tpu.matmul %3, %0, %cst_5 {dimension_numbers = #tpu.dot_dimension_numbers<[1], [0], [0], [1], [0, 0, 1, 1], [], []>} : vector<144x25xbf16>, vector<25x20xbf16>, vector<144x20xf32> -> vector<144x20xf32>
    %c0_6 = arith.constant 0 : index
    %c0_7 = arith.constant 0 : index
    %5 = vector.load %arg3[%c0_6, %c0_7] : memref<144x25xbf16, #tpu.memory_space<vmem>>, vector<144x25xbf16>
    %cst_8 = arith.constant dense<0.000000e+00> : vector<144x20xf32>
    %6 = tpu.matmul %5, %0, %cst_8 {dimension_numbers = #tpu.dot_dimension_numbers<[1], [0], [0], [1], [0, 0, 1, 1], [], []>} : vector<144x25xbf16>, vector<25x20xbf16>, vector<144x20xf32> -> vector<144x20xf32>
    %c0_9 = arith.constant 0 : index
    %c0_10 = arith.constant 0 : index
    %7 = vector.load %arg4[%c0_9, %c0_10] : memref<144x25xbf16, #tpu.memory_space<vmem>>, vector<144x25xbf16>
    %cst_11 = arith.constant dense<0.000000e+00> : vector<144x20xf32>
    %8 = tpu.matmul %7, %0, %cst_11 {dimension_numbers = #tpu.dot_dimension_numbers<[1], [0], [0], [1], [0, 0, 1, 1], [], []>} : vector<144x25xbf16>, vector<25x20xbf16>, vector<144x20xf32> -> vector<144x20xf32>
    %9 = arith.maximumf %2, %4 : vector<144x20xf32>
    %10 = arith.maximumf %6, %8 : vector<144x20xf32>
    %11 = arith.maximumf %9, %10 : vector<144x20xf32>
    %c0_12 = arith.constant 0 : index
    %c0_13 = arith.constant 0 : index
    %12 = vector.load %arg6[%c0_12, %c0_13] : memref<1x20xf32, #tpu.memory_space<vmem>>, vector<1x20xf32>
    %13 = vector.broadcast %12 : vector<1x20xf32> to vector<144x20xf32>
    %14 = arith.addf %11, %13 : vector<144x20xf32>
    %cst_14 = arith.constant 0.000000e+00 : f32
    %15 = vector.broadcast %cst_14 : f32 to vector<144x20xf32>
    %16 = arith.maximumf %14, %15 : vector<144x20xf32>
    %17 = arith.truncf %16 : vector<144x20xf32> to vector<144x20xbf16>
    %c0_15 = arith.constant 0 : index
    %c0_16 = arith.constant 0 : index
    %18 = vector.load %arg7[%c0_15, %c0_16] : memref<144x20xbf16, #tpu.memory_space<vmem>>, vector<144x20xbf16>
    tpu.vector_store %arg7[%c0_15, %c0_16], %17 {strides = array<i32>} : memref<144x20xbf16, #tpu.memory_space<vmem>>, vector<144x20xbf16>,
    return
  }
  func.func @transform_0(%arg0: i32) -> (i32, i32) {
    %c0_i32 = arith.constant 0 : i32
    %c0_i32_0 = arith.constant 0 : i32
    return %arg0, %c0_i32 : i32, i32
  }
  func.func @transform_1(%arg0: i32) -> (i32, i32) {
    %c0_i32 = arith.constant 0 : i32
    %c0_i32_0 = arith.constant 0 : i32
    return %arg0, %c0_i32 : i32, i32
  }
  func.func @transform_2(%arg0: i32) -> (i32, i32) {
    %c0_i32 = arith.constant 0 : i32
    %c0_i32_0 = arith.constant 0 : i32
    return %arg0, %c0_i32 : i32, i32
  }
  func.func @transform_3(%arg0: i32) -> (i32, i32) {
    %c0_i32 = arith.constant 0 : i32
    %c0_i32_0 = arith.constant 0 : i32
    return %arg0, %c0_i32 : i32, i32
  }
  func.func @transform_4(%arg0: i32) -> (i32, i32) {
    %c0_i32 = arith.constant 0 : i32
    %c0_i32_0 = arith.constant 0 : i32
    %c0_i32_1 = arith.constant 0 : i32
    return %c0_i32, %c0_i32_0 : i32, i32
  }
  func.func @transform_5(%arg0: i32) -> (i32, i32) {
    %c0_i32 = arith.constant 0 : i32
    %c0_i32_0 = arith.constant 0 : i32
    %c0_i32_1 = arith.constant 0 : i32
    return %c0_i32, %c0_i32_0 : i32, i32
  }
  func.func @transform_6(%arg0: i32) -> (i32, i32) {
    %c0_i32 = arith.constant 0 : i32
    %c0_i32_0 = arith.constant 0 : i32
    return %arg0, %c0_i32 : i32, i32
  }
}

module attributes {stable_mosaic.version = 11 : i64} {
  func.func @_conv_relu_pool_kernel(%arg0: i32, %arg1: memref<16x500xbf16, #tpu.memory_space<vmem>>, %arg2: memref<16x500xbf16, #tpu.memory_space<vmem>>, %arg3: memref<16x500xbf16, #tpu.memory_space<vmem>>, %arg4: memref<16x500xbf16, #tpu.memory_space<vmem>>, %arg5: memref<500x50xbf16, #tpu.memory_space<vmem>>, %arg6: memref<1x50xf32, #tpu.memory_space<vmem>>, %arg7: memref<16x50xbf16, #tpu.memory_space<vmem>>) attributes {dimension_semantics = [#tpu.dimension_semantics<parallel>], iteration_bounds = array<i64: 2>, scalar_prefetch = 0 : i64, scratch_operands = 0 : i64, tpu.core_type = #tpu.core_type<tc>, window_params = [{transform_indices = @transform_0, window_bounds = array<i64: 16, 500>}, {transform_indices = @transform_1, window_bounds = array<i64: 16, 500>}, {transform_indices = @transform_2, window_bounds = array<i64: 16, 500>}, {transform_indices = @transform_3, window_bounds = array<i64: 16, 500>}, {pipeline_mode = #tpu.pipeline_mode<synchronous>, transform_indices = @transform_4, window_bounds = array<i64: 500, 50>}, {pipeline_mode = #tpu.pipeline_mode<synchronous>, transform_indices = @transform_5, window_bounds = array<i64: 1, 50>}, {transform_indices = @transform_6, window_bounds = array<i64: 16, 50>}]} {
    %c0 = arith.constant 0 : index
    %c0_0 = arith.constant 0 : index
    %0 = vector.load %arg5[%c0, %c0_0] : memref<500x50xbf16, #tpu.memory_space<vmem>>, vector<500x50xbf16>
    %c0_1 = arith.constant 0 : index
    %c0_2 = arith.constant 0 : index
    %1 = vector.load %arg1[%c0_1, %c0_2] : memref<16x500xbf16, #tpu.memory_space<vmem>>, vector<16x500xbf16>
    %cst = arith.constant dense<0.000000e+00> : vector<16x50xf32>
    %2 = tpu.matmul %1, %0, %cst {dimension_numbers = #tpu.dot_dimension_numbers<[1], [0], [0], [1], [0, 0, 1, 1], [], []>} : vector<16x500xbf16>, vector<500x50xbf16>, vector<16x50xf32> -> vector<16x50xf32>
    %c0_3 = arith.constant 0 : index
    %c0_4 = arith.constant 0 : index
    %3 = vector.load %arg2[%c0_3, %c0_4] : memref<16x500xbf16, #tpu.memory_space<vmem>>, vector<16x500xbf16>
    %cst_5 = arith.constant dense<0.000000e+00> : vector<16x50xf32>
    %4 = tpu.matmul %3, %0, %cst_5 {dimension_numbers = #tpu.dot_dimension_numbers<[1], [0], [0], [1], [0, 0, 1, 1], [], []>} : vector<16x500xbf16>, vector<500x50xbf16>, vector<16x50xf32> -> vector<16x50xf32>
    %c0_6 = arith.constant 0 : index
    %c0_7 = arith.constant 0 : index
    %5 = vector.load %arg3[%c0_6, %c0_7] : memref<16x500xbf16, #tpu.memory_space<vmem>>, vector<16x500xbf16>
    %cst_8 = arith.constant dense<0.000000e+00> : vector<16x50xf32>
    %6 = tpu.matmul %5, %0, %cst_8 {dimension_numbers = #tpu.dot_dimension_numbers<[1], [0], [0], [1], [0, 0, 1, 1], [], []>} : vector<16x500xbf16>, vector<500x50xbf16>, vector<16x50xf32> -> vector<16x50xf32>
    %c0_9 = arith.constant 0 : index
    %c0_10 = arith.constant 0 : index
    %7 = vector.load %arg4[%c0_9, %c0_10] : memref<16x500xbf16, #tpu.memory_space<vmem>>, vector<16x500xbf16>
    %cst_11 = arith.constant dense<0.000000e+00> : vector<16x50xf32>
    %8 = tpu.matmul %7, %0, %cst_11 {dimension_numbers = #tpu.dot_dimension_numbers<[1], [0], [0], [1], [0, 0, 1, 1], [], []>} : vector<16x500xbf16>, vector<500x50xbf16>, vector<16x50xf32> -> vector<16x50xf32>
    %9 = arith.maximumf %2, %4 : vector<16x50xf32>
    %10 = arith.maximumf %6, %8 : vector<16x50xf32>
    %11 = arith.maximumf %9, %10 : vector<16x50xf32>
    %c0_12 = arith.constant 0 : index
    %c0_13 = arith.constant 0 : index
    %12 = vector.load %arg6[%c0_12, %c0_13] : memref<1x50xf32, #tpu.memory_space<vmem>>, vector<1x50xf32>
    %13 = vector.broadcast %12 : vector<1x50xf32> to vector<16x50xf32>
    %14 = arith.addf %11, %13 : vector<16x50xf32>
    %cst_14 = arith.constant 0.000000e+00 : f32
    %15 = vector.broadcast %cst_14 : f32 to vector<16x50xf32>
    %16 = arith.maximumf %14, %15 : vector<16x50xf32>
    %17 = arith.truncf %16 : vector<16x50xf32> to vector<16x50xbf16>
    %c0_15 = arith.constant 0 : index
    %c0_16 = arith.constant 0 : index
    %18 = vector.load %arg7[%c0_15, %c0_16] : memref<16x50xbf16, #tpu.memory_space<vmem>>, vector<16x50xbf16>
    tpu.vector_store %arg7[%c0_15, %c0_16], %17 {strides = array<i32>} : memref<16x50xbf16, #tpu.memory_space<vmem>>, vector<16x50xbf16>,
    return
  }
  func.func @transform_0(%arg0: i32) -> (i32, i32) {
    %c0_i32 = arith.constant 0 : i32
    %c0_i32_0 = arith.constant 0 : i32
    return %arg0, %c0_i32 : i32, i32
  }
  func.func @transform_1(%arg0: i32) -> (i32, i32) {
    %c0_i32 = arith.constant 0 : i32
    %c0_i32_0 = arith.constant 0 : i32
    return %arg0, %c0_i32 : i32, i32
  }
  func.func @transform_2(%arg0: i32) -> (i32, i32) {
    %c0_i32 = arith.constant 0 : i32
    %c0_i32_0 = arith.constant 0 : i32
    return %arg0, %c0_i32 : i32, i32
  }
  func.func @transform_3(%arg0: i32) -> (i32, i32) {
    %c0_i32 = arith.constant 0 : i32
    %c0_i32_0 = arith.constant 0 : i32
    return %arg0, %c0_i32 : i32, i32
  }
  func.func @transform_4(%arg0: i32) -> (i32, i32) {
    %c0_i32 = arith.constant 0 : i32
    %c0_i32_0 = arith.constant 0 : i32
    %c0_i32_1 = arith.constant 0 : i32
    return %c0_i32, %c0_i32_0 : i32, i32
  }
  func.func @transform_5(%arg0: i32) -> (i32, i32) {
    %c0_i32 = arith.constant 0 : i32
    %c0_i32_0 = arith.constant 0 : i32
    %c0_i32_1 = arith.constant 0 : i32
    return %c0_i32, %c0_i32_0 : i32, i32
  }
  func.func @transform_6(%arg0: i32) -> (i32, i32) {
    %c0_i32 = arith.constant 0 : i32
    %c0_i32_0 = arith.constant 0 : i32
    return %arg0, %c0_i32 : i32, i32
  }
}

module attributes {stable_mosaic.version = 11 : i64} {
  func.func @_mlp_head_kernel(%arg0: i32, %arg1: memref<16x800xbf16, #tpu.memory_space<vmem>>, %arg2: memref<800x500xbf16, #tpu.memory_space<vmem>>, %arg3: memref<1x500xf32, #tpu.memory_space<vmem>>, %arg4: memref<500x10xbf16, #tpu.memory_space<vmem>>, %arg5: memref<1x10xf32, #tpu.memory_space<vmem>>, %arg6: memref<16x10xf32, #tpu.memory_space<vmem>>) attributes {dimension_semantics = [#tpu.dimension_semantics<parallel>], iteration_bounds = array<i64: 1>, scalar_prefetch = 0 : i64, scratch_operands = 0 : i64, tpu.core_type = #tpu.core_type<tc>, window_params = [{transform_indices = @transform_0, window_bounds = array<i64: 16, 800>}, {pipeline_mode = #tpu.pipeline_mode<synchronous>, transform_indices = @transform_1, window_bounds = array<i64: 800, 500>}, {pipeline_mode = #tpu.pipeline_mode<synchronous>, transform_indices = @transform_2, window_bounds = array<i64: 1, 500>}, {pipeline_mode = #tpu.pipeline_mode<synchronous>, transform_indices = @transform_3, window_bounds = array<i64: 500, 10>}, {pipeline_mode = #tpu.pipeline_mode<synchronous>, transform_indices = @transform_4, window_bounds = array<i64: 1, 10>}, {transform_indices = @transform_5, window_bounds = array<i64: 16, 10>}]} {
    %c0 = arith.constant 0 : index
    %c0_0 = arith.constant 0 : index
    %0 = vector.load %arg1[%c0, %c0_0] : memref<16x800xbf16, #tpu.memory_space<vmem>>, vector<16x800xbf16>
    %c0_1 = arith.constant 0 : index
    %c0_2 = arith.constant 0 : index
    %1 = vector.load %arg2[%c0_1, %c0_2] : memref<800x500xbf16, #tpu.memory_space<vmem>>, vector<800x500xbf16>
    %cst = arith.constant dense<0.000000e+00> : vector<16x500xf32>
    %2 = tpu.matmul %0, %1, %cst {dimension_numbers = #tpu.dot_dimension_numbers<[1], [0], [0], [1], [0, 0, 1, 1], [], []>} : vector<16x800xbf16>, vector<800x500xbf16>, vector<16x500xf32> -> vector<16x500xf32>
    %c0_3 = arith.constant 0 : index
    %c0_4 = arith.constant 0 : index
    %3 = vector.load %arg3[%c0_3, %c0_4] : memref<1x500xf32, #tpu.memory_space<vmem>>, vector<1x500xf32>
    %4 = vector.broadcast %3 : vector<1x500xf32> to vector<16x500xf32>
    %5 = arith.addf %2, %4 : vector<16x500xf32>
    %cst_5 = arith.constant 0.000000e+00 : f32
    %6 = vector.broadcast %cst_5 : f32 to vector<16x500xf32>
    %7 = arith.maximumf %5, %6 : vector<16x500xf32>
    %8 = arith.truncf %7 : vector<16x500xf32> to vector<16x500xbf16>
    %c0_6 = arith.constant 0 : index
    %c0_7 = arith.constant 0 : index
    %9 = vector.load %arg4[%c0_6, %c0_7] : memref<500x10xbf16, #tpu.memory_space<vmem>>, vector<500x10xbf16>
    %cst_8 = arith.constant dense<0.000000e+00> : vector<16x10xf32>
    %10 = tpu.matmul %8, %9, %cst_8 {dimension_numbers = #tpu.dot_dimension_numbers<[1], [0], [0], [1], [0, 0, 1, 1], [], []>} : vector<16x500xbf16>, vector<500x10xbf16>, vector<16x10xf32> -> vector<16x10xf32>
    %c0_9 = arith.constant 0 : index
    %c0_10 = arith.constant 0 : index
    %11 = vector.load %arg5[%c0_9, %c0_10] : memref<1x10xf32, #tpu.memory_space<vmem>>, vector<1x10xf32>
    %12 = vector.broadcast %11 : vector<1x10xf32> to vector<16x10xf32>
    %13 = arith.addf %10, %12 : vector<16x10xf32>
    %cst_11 = arith.constant dense<0xFF800000> : vector<16xf32>
    %14 = vector.multi_reduction <maximumf>, %13, %cst_11 [1] : vector<16x10xf32> to vector<16xf32>
    %15 = vector.shape_cast %14 : vector<16xf32> to vector<16x1xf32>
    %16 = vector.broadcast %15 : vector<16x1xf32> to vector<16x10xf32>
    %17 = arith.subf %13, %16 : vector<16x10xf32>
    %18 = math.exp %17 : vector<16x10xf32>
    %cst_12 = arith.constant dense<0.000000e+00> : vector<16xf32>
    %19 = vector.multi_reduction <add>, %18, %cst_12 [1] : vector<16x10xf32> to vector<16xf32>
    %20 = vector.shape_cast %19 : vector<16xf32> to vector<16x1xf32>
    %21 = math.log %20 : vector<16x1xf32>
    %22 = arith.addf %15, %21 : vector<16x1xf32>
    %23 = vector.broadcast %22 : vector<16x1xf32> to vector<16x10xf32>
    %24 = arith.subf %13, %23 : vector<16x10xf32>
    %c0_13 = arith.constant 0 : index
    %c0_14 = arith.constant 0 : index
    %25 = vector.load %arg6[%c0_13, %c0_14] : memref<16x10xf32, #tpu.memory_space<vmem>>, vector<16x10xf32>
    tpu.vector_store %arg6[%c0_13, %c0_14], %24 {strides = array<i32>} : memref<16x10xf32, #tpu.memory_space<vmem>>, vector<16x10xf32>,
    return
  }
  func.func @transform_0(%arg0: i32) -> (i32, i32) {
    %c0_i32 = arith.constant 0 : i32
    %c0_i32_0 = arith.constant 0 : i32
    return %arg0, %c0_i32 : i32, i32
  }
  func.func @transform_1(%arg0: i32) -> (i32, i32) {
    %c0_i32 = arith.constant 0 : i32
    %c0_i32_0 = arith.constant 0 : i32
    %c0_i32_1 = arith.constant 0 : i32
    return %c0_i32, %c0_i32_0 : i32, i32
  }
  func.func @transform_2(%arg0: i32) -> (i32, i32) {
    %c0_i32 = arith.constant 0 : i32
    %c0_i32_0 = arith.constant 0 : i32
    %c0_i32_1 = arith.constant 0 : i32
    return %c0_i32, %c0_i32_0 : i32, i32
  }
  func.func @transform_3(%arg0: i32) -> (i32, i32) {
    %c0_i32 = arith.constant 0 : i32
    %c0_i32_0 = arith.constant 0 : i32
    %c0_i32_1 = arith.constant 0 : i32
    return %c0_i32, %c0_i32_0 : i32, i32
  }
  func.func @transform_4(%arg0: i32) -> (i32, i32) {
    %c0_i32 = arith.constant 0 : i32
    %c0_i32_0 = arith.constant 0 : i32
    %c0_i32_1 = arith.constant 0 : i32
    return %c0_i32, %c0_i32_0 : i32, i32
  }
  func.func @transform_5(%arg0: i32) -> (i32, i32) {
    %c0_i32 = arith.constant 0 : i32
    %c0_i32_0 = arith.constant 0 : i32
    return %arg0, %c0_i32 : i32, i32
  }
}

</mosaic_0001>

<llo_original>
// kernel: net_forward.3
$region0: #{net_forward.3}
  #allocation0 [shape = 'u32[]', space=smem, size = 0x4, offset = 0x4, fixed_abs, tag = 'smem constant byte address 0x4 - core index']
  #allocation1 [shape = 'u32[144,128]{1,0:T(1,128)}', space=vmem, size = 0x12000, scoped, tag = 'internal scratch']
  %s0 = inlined_call_operand.vmem [shape: bf16[288,25], index: 0, kind: input, shape index: {}]
  %s1 = inlined_call_operand.vmem [shape: bf16[288,25], index: 1, kind: input, shape index: {}]
  %s2 = inlined_call_operand.vmem [shape: bf16[288,25], index: 2, kind: input, shape index: {}]
  %s3 = inlined_call_operand.vmem [shape: bf16[288,25], index: 3, kind: input, shape index: {}]
  %s4 = inlined_call_operand.vmem [shape: bf16[25,20], index: 4, kind: input, shape index: {}]
  %s5 = inlined_call_operand.vmem [shape: f32[1,20], index: 5, kind: input, shape index: {}]
  %s6 = inlined_call_operand.vmem [shape: bf16[288,20], index: 6, kind: output, shape index: {}]
  %s7 = sld [smem:[#allocation0]]
  $region57: #{net_forward.3} parent=0
    _
  %s9 = ssub.s32 1, %s7
  %s10 = scalar_select 0, %s9, %s7
  loop: start=0, step=1, limit=4
  $region2: #{net_forward.3} parent=0 // loop_pre_header
    _
  $region3: #{net_forward.3} parent=0 // loop_header
    %s12 = sphi 0, %s16
    %p13 = scmp.ge.s32.totalorder %s12, 4
    %s22 = sphi 0, %s24
    %s25 = sphi 0, %s22
    %s26 = sphi 0, %s25
    %s42 = sphi 0, %s26
    %s48 = sphi 0, %s50
    %s51 = sphi 0, %s48
    %s52 = sphi 0, %s51
    %s68 = sphi 0, %s52
    %s74 = sphi 0, %s76
    %s77 = sphi 0, %s74
    %s78 = sphi 0, %s77
    %s94 = sphi 0, %s78
    %s100 = sphi 0, %s102
    %s103 = sphi 0, %s100
    %s104 = sphi 0, %s103
    %s120 = sphi 0, %s104
    %s124 = sphi 0, %s124
    %s126 = sphi 0, %s124
    %s127 = sphi 0, %s126
    %s141 = sphi 0, %s127
    %s145 = sphi 0, %s145
    %s147 = sphi 0, %s145
    %s148 = sphi 0, %s147
    %s162 = sphi 0, %s148
    %s168 = sphi 0, %s170
    %s171 = sphi 0, %s168
    %s172 = sphi 0, %s171
    %s188 = sphi 0, %s172
  $region4: #{net_forward.3} parent=0 // loop_header_branch
    %15 = sbr.rel (%p13) target = $region8
  $region5: #{net_forward.3} parent=0 // loop_body
    %s17 = ssub.s32 %s12, 1
    %s18 = ssub.s32 %s12, 2
    %s19 = sadd.s32 %s12, 1
    %s20 = ssub.s32 %s12, %s19
    %p21 = scmp.eq.s32.totalorder %s20, 0
    %s23 = sadd.s32 %s22, 1
    %s24 = scalar_select %p21, %s22, %s23
    %p27 = pneg %p21
    %p28 = scmp.eq.s32.totalorder %s12, 1
    %p29 = por %p27, %p28
    %p30 = scmp.ne.s32.totalorder %s22, %s25
    %p31 = scmp.eq.s32.totalorder %s12, 0
    %p32 = por %p30, %p31
    %p33 = scmp.ne.s32.totalorder %s22, %s25
    %p34 = scmp.eq.s32.totalorder %s17, 1
    %p35 = por %p33, %p34
    %p36 = scmp.ne.s32.totalorder %s25, %s26
    %p37 = scmp.eq.s32.totalorder %s17, 0
    %p38 = por %p36, %p37
    %p39 = scmp.ne.s32.totalorder %s25, %s26
    %p40 = scmp.eq.s32.totalorder %s18, 1
    %p41 = por %p39, %p40
    %p43 = scmp.ne.s32.totalorder %s26, %s42
    %p44 = scmp.eq.s32.totalorder %s18, 0
    %p45 = por %p43, %p44
    %s46 = ssub.s32 %s12, %s19
    %p47 = scmp.eq.s32.totalorder %s46, 0
    %s49 = sadd.s32 %s48, 1
    %s50 = scalar_select %p47, %s48, %s49
    %p53 = pneg %p47
    %p54 = scmp.eq.s32.totalorder %s12, 1
    %p55 = por %p53, %p54
    %p56 = scmp.ne.s32.totalorder %s48, %s51
    %p57 = scmp.eq.s32.totalorder %s12, 0
    %p58 = por %p56, %p57
    %p59 = scmp.ne.s32.totalorder %s48, %s51
    %p60 = scmp.eq.s32.totalorder %s17, 1
    %p61 = por %p59, %p60
    %p62 = scmp.ne.s32.totalorder %s51, %s52
    %p63 = scmp.eq.s32.totalorder %s17, 0
    %p64 = por %p62, %p63
    %p65 = scmp.ne.s32.totalorder %s51, %s52
    %p66 = scmp.eq.s32.totalorder %s18, 1
    %p67 = por %p65, %p66
    %p69 = scmp.ne.s32.totalorder %s52, %s68
    %p70 = scmp.eq.s32.totalorder %s18, 0
    %p71 = por %p69, %p70
    %s72 = ssub.s32 %s12, %s19
    %p73 = scmp.eq.s32.totalorder %s72, 0
    %s75 = sadd.s32 %s74, 1
    %s76 = scalar_select %p73, %s74, %s75
    %p79 = pneg %p73
    %p80 = scmp.eq.s32.totalorder %s12, 1
    %p81 = por %p79, %p80
    %p82 = scmp.ne.s32.totalorder %s74, %s77
    %p83 = scmp.eq.s32.totalorder %s12, 0
    %p84 = por %p82, %p83
    %p85 = scmp.ne.s32.totalorder %s74, %s77
    %p86 = scmp.eq.s32.totalorder %s17, 1
    %p87 = por %p85, %p86
    %p88 = scmp.ne.s32.totalorder %s77, %s78
    %p89 = scmp.eq.s32.totalorder %s17, 0
    %p90 = por %p88, %p89
    %p91 = scmp.ne.s32.totalorder %s77, %s78
    %p92 = scmp.eq.s32.totalorder %s18, 1
    %p93 = por %p91, %p92
    %p95 = scmp.ne.s32.totalorder %s78, %s94
    %p96 = scmp.eq.s32.totalorder %s18, 0
    %p97 = por %p95, %p96
    %s98 = ssub.s32 %s12, %s19
    %p99 = scmp.eq.s32.totalorder %s98, 0
    %s101 = sadd.s32 %s100, 1
    %s102 = scalar_select %p99, %s100, %s101
    %p105 = pneg %p99
    %p106 = scmp.eq.s32.totalorder %s12, 1
    %p107 = por %p105, %p106
    %p108 = scmp.ne.s32.totalorder %s100, %s103
    %p109 = scmp.eq.s32.totalorder %s12, 0
    %p110 = por %p108, %p109
    %p111 = scmp.ne.s32.totalorder %s100, %s103
    %p112 = scmp.eq.s32.totalorder %s17, 1
    %p113 = por %p111, %p112
    %p114 = scmp.ne.s32.totalorder %s103, %s104
    %p115 = scmp.eq.s32.totalorder %s17, 0
    %p116 = por %p114, %p115
    %p117 = scmp.ne.s32.totalorder %s103, %s104
    %p118 = scmp.eq.s32.totalorder %s18, 1
    %p119 = por %p117, %p118
    %p121 = scmp.ne.s32.totalorder %s104, %s120
    %p122 = scmp.eq.s32.totalorder %s18, 0
    %p123 = por %p121, %p122
    %s125 = sadd.s32 %s124, 1
    %p128 = scmp.eq.s32.totalorder %s12, 1
    %p129 = scmp.ne.s32.totalorder %s124, %s126
    %p130 = scmp.eq.s32.totalorder %s12, 0
    %p131 = por %p129, %p130
    %p132 = scmp.ne.s32.totalorder %s124, %s126
    %p133 = scmp.eq.s32.totalorder %s17, 1
    %p134 = por %p132, %p133
    %p135 = scmp.ne.s32.totalorder %s126, %s127
    %p136 = scmp.eq.s32.totalorder %s17, 0
    %p137 = por %p135, %p136
    %p138 = scmp.ne.s32.totalorder %s126, %s127
    %p139 = scmp.eq.s32.totalorder %s18, 1
    %p140 = por %p138, %p139
    %p142 = scmp.ne.s32.totalorder %s127, %s141
    %p143 = scmp.eq.s32.totalorder %s18, 0
    %p144 = por %p142, %p143
    %s146 = sadd.s32 %s145, 1
    %p149 = scmp.eq.s32.totalorder %s12, 1
    %p150 = scmp.ne.s32.totalorder %s145, %s147
    %p151 = scmp.eq.s32.totalorder %s12, 0
    %p152 = por %p150, %p151
    %p153 = scmp.ne.s32.totalorder %s145, %s147
    %p154 = scmp.eq.s32.totalorder %s17, 1
    %p155 = por %p153, %p154
    %p156 = scmp.ne.s32.totalorder %s147, %s148
    %p157 = scmp.eq.s32.totalorder %s17, 0
    %p158 = por %p156, %p157
    %p159 = scmp.ne.s32.totalorder %s147, %s148
    %p160 = scmp.eq.s32.totalorder %s18, 1
    %p161 = por %p159, %p160
    %p163 = scmp.ne.s32.totalorder %s148, %s162
    %p164 = scmp.eq.s32.totalorder %s18, 0
    %p165 = por %p163, %p164
    %s166 = ssub.s32 %s12, %s19
    %p167 = scmp.eq.s32.totalorder %s166, 0
    %s169 = sadd.s32 %s168, 1
    %s170 = scalar_select %p167, %s168, %s169
    %p173 = pneg %p167
    %p174 = scmp.eq.s32.totalorder %s12, 1
    %p175 = por %p173, %p174
    %p176 = scmp.ne.s32.totalorder %s168, %s171
    %p177 = scmp.eq.s32.totalorder %s12, 0
    %p178 = por %p176, %p177
    %p179 = scmp.ne.s32.totalorder %s168, %s171
    %p180 = scmp.eq.s32.totalorder %s17, 1
    %p181 = por %p179, %p180
    %p182 = scmp.ne.s32.totalorder %s171, %s172
    %p183 = scmp.eq.s32.totalorder %s17, 0
    %p184 = por %p182, %p183
    %p185 = scmp.ne.s32.totalorder %s171, %s172
    %p186 = scmp.eq.s32.totalorder %s18, 1
    %p187 = por %p185, %p186
    %p189 = scmp.ne.s32.totalorder %s172, %s188
    %p190 = scmp.eq.s32.totalorder %s18, 0
    %p191 = por %p189, %p190
    %p192 = scmp.le.s32.totalorder 1, %s12
    %p193 = scmp.lt.s32.totalorder %s12, 3
    %p194 = pnand %p192, %p193
    %p195 = pneg %p194
    // Predicated region
    $region9: #{net_forward.3} parent=5 // pred_check
      _
    $region10: #{net_forward.3} parent=5 // pred_check_branch
      %197 = sbr.rel (%p194) target = $region12
    $region11: #{net_forward.3} parent=5 // pred_region
      %s198 = ssub.s32 %s12, 1
      // Predicated region
      $region13: #{net_forward.3} parent=11 // pred_check
        %p199 = pneg %p137
      $region14: #{net_forward.3} parent=11 // pred_check_branch
        %201 = sbr.rel (%p199) target = $region16
      $region15: #{net_forward.3} parent=11 // pred_region
        _
      $region16: #{net_forward.3} parent=11 // pred_fallthru
        _
      // Predicated region
      $region17: #{net_forward.3} parent=11 // pred_check
        %p202 = pneg %p158
      $region18: #{net_forward.3} parent=11 // pred_check_branch
        %204 = sbr.rel (%p202) target = $region20
      $region19: #{net_forward.3} parent=11 // pred_region
        _
      $region20: #{net_forward.3} parent=11 // pred_fallthru
        _
    $region12: #{net_forward.3} parent=5 // pred_fallthru
      _
    %p205 = scmp.lt.s32.totalorder %s12, 2
    // Predicated region
    $region21: #{net_forward.3} parent=5 // pred_check
      %p206 = pneg %p205
    $region22: #{net_forward.3} parent=5 // pred_check_branch
      %208 = sbr.rel (%p206) target = $region24
    $region23: #{net_forward.3} parent=5 // pred_region
      // Predicated region
      $region25: #{net_forward.3} parent=23 // pred_check
        %p209 = pneg %p32
      $region26: #{net_forward.3} parent=23 // pred_check_branch
        %211 = sbr.rel (%p209) target = $region28
      $region27: #{net_forward.3} parent=23 // pred_region
        %s212 = smul.u32 18, %s12
        %p213 = scmp.lt.s32.totalorder %s212, 35
        %s214 = scalar_select %p213, %s212, 35
        %s215 = smul.addr %s214, 4
        %s216 = scalar_lea.vmem %s0, %s215
        %s217 = smul.u32 18, %s12
      $region28: #{net_forward.3} parent=23 // pred_fallthru
        _
      // Predicated region
      $region29: #{net_forward.3} parent=23 // pred_check
        %p218 = pneg %p58
      $region30: #{net_forward.3} parent=23 // pred_check_branch
        %220 = sbr.rel (%p218) target = $region32
      $region31: #{net_forward.3} parent=23 // pred_region
        %s221 = smul.u32 18, %s12
        %p222 = scmp.lt.s32.totalorder %s221, 35
        %s223 = scalar_select %p222, %s221, 35
        %s224 = smul.addr %s223, 4
        %s225 = scalar_lea.vmem %s1, %s224
        %s226 = smul.u32 18, %s12
      $region32: #{net_forward.3} parent=23 // pred_fallthru
        _
      // Predicated region
      $region33: #{net_forward.3} parent=23 // pred_check
        %p227 = pneg %p84
      $region34: #{net_forward.3} parent=23 // pred_check_branch
        %229 = sbr.rel (%p227) target = $region36
      $region35: #{net_forward.3} parent=23 // pred_region
        %s230 = smul.u32 18, %s12
        %p231 = scmp.lt.s32.totalorder %s230, 35
        %s232 = scalar_select %p231, %s230, 35
        %s233 = smul.addr %s232, 4
        %s234 = scalar_lea.vmem %s2, %s233
        %s235 = smul.u32 18, %s12
      $region36: #{net_forward.3} parent=23 // pred_fallthru
        _
      // Predicated region
      $region37: #{net_forward.3} parent=23 // pred_check
        %p236 = pneg %p110
      $region38: #{net_forward.3} parent=23 // pred_check_branch
        %238 = sbr.rel (%p236) target = $region40
      $region39: #{net_forward.3} parent=23 // pred_region
        %s239 = smul.u32 18, %s12
        %p240 = scmp.lt.s32.totalorder %s239, 35
        %s241 = scalar_select %p240, %s239, 35
        %s242 = smul.addr %s241, 4
        %s243 = scalar_lea.vmem %s3, %s242
        %s244 = smul.u32 18, %s12
      $region40: #{net_forward.3} parent=23 // pred_fallthru
        _
    $region24: #{net_forward.3} parent=5 // pred_fallthru
      _
    %p245 = scmp.le.s32.totalorder 1, %s12
    %p246 = scmp.lt.s32.totalorder %s12, 3
    %p247 = pnand %p245, %p246
    %p248 = pneg %p247
    // Predicated region
    $region41: #{net_forward.3} parent=5 // pred_check
      _
    $region42: #{net_forward.3} parent=5 // pred_check_branch
      %250 = sbr.rel (%p247) target = $region44
    $region43: #{net_forward.3} parent=5 // pred_region
      %s251 = ssub.s32 %s12, 1
      %s252 = smul.u32 18, %s17
      %p253 = scmp.lt.s32.totalorder %s252, 35
      %s254 = scalar_select %p253, %s252, 35
      %s255 = smul.addr %s254, 4
      %s256 = scalar_lea.vmem %s0, %s255
      %p257 = pneg %p38
      %p258 = pneg %p35
      %s259 = smul.u32 18, %s17
      %p260 = scmp.lt.s32.totalorder %s259, 35
      %s261 = scalar_select %p260, %s259, 35
      %s262 = smul.addr %s261, 4
      %s263 = scalar_lea.vmem %s1, %s262
      %p264 = pneg %p64
      %p265 = pneg %p61
      %s266 = smul.u32 18, %s17
      %p267 = scmp.lt.s32.totalorder %s266, 35
      %s268 = scalar_select %p267, %s266, 35
      %s269 = smul.addr %s268, 4
      %s270 = scalar_lea.vmem %s2, %s269
      %p271 = pneg %p90
      %p272 = pneg %p87
      %s273 = smul.u32 18, %s17
      %p274 = scmp.lt.s32.totalorder %s273, 35
      %s275 = scalar_select %p274, %s273, 35
      %s276 = smul.addr %s275, 4
      %s277 = scalar_lea.vmem %s3, %s276
      %p278 = pneg %p116
      %p279 = pneg %p113
      %p280 = pneg %p137
      %p281 = pneg %p134
      %p282 = pneg %p158
      %p283 = pneg %p155
      %p284 = pneg %p184
      %p285 = pneg %p181
      %s286 = smul.u32 18, %s17
      %p287 = scmp.lt.s32.totalorder %s286, 35
      %s288 = scalar_select %p287, %s286, 35
      %s289 = smul.addr %s288, 4
      %s290 = scalar_lea.vmem %s6, %s289
      %s291 = smul.u32 18, %s17
      %p292 = scmp.lt.s32.totalorder %s291, 35
      %s293 = scalar_select %p292, %s291, 35
      %s294 = smul.addr %s293, 4
      %s295 = scalar_lea.vmem %s0, %s294
      %s296 = smul.u32 18, %s17
      %s297 = smul.u32 18, %s17
      %p298 = scmp.lt.s32.totalorder %s297, 35
      %s299 = scalar_select %p298, %s297, 35
      %s300 = smul.addr %s299, 4
      %s301 = scalar_lea.vmem %s1, %s300
      %s302 = smul.u32 18, %s17
      %s303 = smul.u32 18, %s17
      %p304 = scmp.lt.s32.totalorder %s303, 35
      %s305 = scalar_select %p304, %s303, 35
      %s306 = smul.addr %s305, 4
      %s307 = scalar_lea.vmem %s2, %s306
      %s308 = smul.u32 18, %s17
      %s309 = smul.u32 18, %s17
      %p310 = scmp.lt.s32.totalorder %s309, 35
      %s311 = scalar_select %p310, %s309, 35
      %s312 = smul.addr %s311, 4
      %s313 = scalar_lea.vmem %s3, %s312
      %s314 = smul.u32 18, %s17
      %s315 = smul.u32 18, %s17
      %p316 = scmp.lt.s32.totalorder %s315, 35
      %s317 = scalar_select %p316, %s315, 35
      %s318 = smul.addr %s317, 4
      %s319 = scalar_lea.vmem %s6, %s318
      %s320 = smul.u32 18, %s17
      %v322 = vld [vmem:[%s4] sm:$0xf]
      %v323 = vld [vmem:[%s4 + $0x4] sm:$0xf]
      %v324 = vld [vmem:[%s4 + $0x8] sm:$0xf]
      %v325 = vld [vmem:[%s4 + $0xc] sm:$0x1]
      %v326 = vld [vmem:[%s295] sm:$0xf]
      %v327 = vld [vmem:[%s295 + $0x4] sm:$0xf]
      %v328 = vld [vmem:[%s295 + $0x8] sm:$0xf]
      %v329 = vld [vmem:[%s295 + $0xc] sm:$0xf]
      %v330 = vld [vmem:[%s295 + $0x10] sm:$0xf]
      %v331 = vld [vmem:[%s295 + $0x14] sm:$0xf]
      %v332 = vld [vmem:[%s295 + $0x18] sm:$0xf]
      %v333 = vld [vmem:[%s295 + $0x1c] sm:$0xf]
      %v334 = vld [vmem:[%s295 + $0x20] sm:$0xf]
      %v335 = vld [vmem:[%s295 + $0x24] sm:$0xf]
      %v336 = vld [vmem:[%s295 + $0x28] sm:$0xf]
      %v337 = vld [vmem:[%s295 + $0x2c] sm:$0xf]
      %v338 = vld [vmem:[%s295 + $0x30] sm:$0xf]
      %v339 = vld [vmem:[%s295 + $0x34] sm:$0xf]
      %v340 = vld [vmem:[%s295 + $0x38] sm:$0xf]
      %v341 = vld [vmem:[%s295 + $0x3c] sm:$0xf]
      %v342 = vld [vmem:[%s295 + $0x40] sm:$0xf]
      %v343 = vld [vmem:[%s295 + $0x44] sm:$0xf]
      %v362 = vunpack.c.l.b16 %v326
      %v363 = vunpack.c.l.b16 %v327
      %v364 = vunpack.c.l.b16 %v328
      %v365 = vunpack.c.l.b16 %v329
      %v366 = vunpack.c.l.b16 %v330
      %v367 = vunpack.c.l.b16 %v331
      %v368 = vunpack.c.l.b16 %v332
      %v369 = vunpack.c.l.b16 %v333
      %v370 = vunpack.c.l.b16 %v334
      %v371 = vunpack.c.l.b16 %v335
      %v372 = vunpack.c.l.b16 %v336
      %v373 = vunpack.c.l.b16 %v337
      %v374 = vunpack.c.l.b16 %v338
      %v375 = vunpack.c.l.b16 %v339
      %v376 = vunpack.c.l.b16 %v340
      %v377 = vunpack.c.l.b16 %v341
      %v378 = vunpack.c.l.b16 %v342
      %v379 = vunpack.c.l.b16 %v343
      %v380 = vpack.c.b16 %v363, %v362
      %v381 = vpack.c.b16 %v365, %v364
      %v382 = vpack.c.b16 %v367, %v366
      %v383 = vpack.c.b16 %v369, %v368
      %v384 = vpack.c.b16 %v371, %v370
      %v385 = vpack.c.b16 %v373, %v372
      %v386 = vpack.c.b16 %v375, %v374
      %v387 = vpack.c.b16 %v377, %v376
      %v388 = vpack.c.b16 %v379, %v378
      %v393 = vunpack.c.l.b16 %v322
      %v394 = vunpack.c.l.b16 %v323
      %v395 = vunpack.c.l.b16 %v324
      %v396 = vunpack.c.l.b16 %v325
      %v397 = vpack.c.b16 %v394, %v393
      %v398 = vpack.c.b16 %v396, %v395
      %vm400 = vcmask 203776
      %v402 = vsel %vm400, %v380, 0
      %v405 = vsel %vm400, %v381, 0
      %v408 = vsel %vm400, %v382, 0
      %v411 = vsel %vm400, %v383, 0
      %v414 = vsel %vm400, %v384, 0
      %v417 = vsel %vm400, %v385, 0
      %v420 = vsel %vm400, %v386, 0
      %v423 = vsel %vm400, %v387, 0
      %v426 = vsel %vm400, %v388, 0
      %vm428 = vcmask 1043456
      %vm429 = vcmask 1044480
      %v430 = vsel %vm428, 4294967295, 65535
      %v431 = vsel %vm429, %v430, 0
      %v433 = vand.u32 %v398, %v431
      %435 = vmatprep.subr.bf16.mxu0 0
      %436 = vmatpush1.bf16.msra.mxu0 %v397
      %437 = vmatprep.subr.bf16.mxu0 0
      %438 = vmatpush1.bf16.msra.mxu0 %v433
      %439 = vmatprep.subr.bf16.mxu0 0
      %440 = vmatpush1.bf16.msra.mxu0 0
      %441 = vmatprep.subr.bf16.mxu0 0
      %442 = vmatpush1.bf16.msra.mxu0 0
      %443 = vmatprep.subr.bf16.mxu0 0
      %444 = vmatpush1.bf16.msra.mxu0 0
      %445 = vmatprep.subr.bf16.mxu0 0
      %446 = vmatpush1.bf16.msra.mxu0 0
      %447 = vmatprep.subr.bf16.mxu0 0
      %448 = vmatpush1.bf16.msra.mxu0 0
      %449 = vmatprep.subr.bf16.mxu0 0
      %450 = vmatpush1.bf16.msra.mxu0 0
      %451 = vmatprep.subr.bf16.mxu0 0
      %452 = vmatpush1.bf16.msra.mxu0 0
      %453 = vmatprep.subr.bf16.mxu0 0
      %454 = vmatpush1.bf16.msra.mxu0 0
      %455 = vmatprep.subr.bf16.mxu0 0
      %456 = vmatpush1.bf16.msra.mxu0 0
      %457 = vmatprep.subr.bf16.mxu0 0
      %458 = vmatpush1.bf16.msra.mxu0 0
      %459 = vmatprep.subr.bf16.mxu0 0
      %460 = vmatpush1.bf16.msra.mxu0 0
      %461 = vmatprep.subr.bf16.mxu0 0
      %462 = vmatpush1.bf16.msra.mxu0 0
      %463 = vmatprep.subr.bf16.mxu0 0
      %464 = vmatpush1.bf16.msra.mxu0 0
      %465 = vmatprep.subr.bf16.mxu0 0
      %466 = vmatpush1.bf16.msra.mxu0 0
      %467 = vmatprep.mubr.bf16.mxu0 0
      %468 = vmatmul.mubr.bf16.gmra.mrb[0].mxu0 %v402
      %v469 = vpop.f32.mrb[0].mxu0
      %v470 = vadd.f32 0.0, %v469
      %v471 = vpop.f32.mrb[0].mxu0
      %v472 = vpop.f32.mrb[0].mxu0
      %v473 = vadd.f32 0.0, %v472
      %v474 = vpop.f32.mrb[0].mxu0
      %475 = vmatprep.mubr.bf16.mxu0 0
      %476 = vmatmul.mubr.bf16.gmra.mrb[0].mxu0 %v405
      %v477 = vpop.f32.mrb[0].mxu0
      %v478 = vadd.f32 0.0, %v477
      %v479 = vpop.f32.mrb[0].mxu0
      %v480 = vpop.f32.mrb[0].mxu0
      %v481 = vadd.f32 0.0, %v480
      %v482 = vpop.f32.mrb[0].mxu0
      %483 = vmatprep.mubr.bf16.mxu0 0
      %484 = vmatmul.mubr.bf16.gmra.mrb[0].mxu0 %v408
      %v485 = vpop.f32.mrb[0].mxu0
      %v486 = vadd.f32 0.0, %v485
      %v487 = vpop.f32.mrb[0].mxu0
      %v488 = vpop.f32.mrb[0].mxu0
      %v489 = vadd.f32 0.0, %v488
      %v490 = vpop.f32.mrb[0].mxu0
      %491 = vmatprep.mubr.bf16.mxu0 0
      %492 = vmatmul.mubr.bf16.gmra.mrb[0].mxu0 %v411
      %v493 = vpop.f32.mrb[0].mxu0
      %v494 = vadd.f32 0.0, %v493
      %v495 = vpop.f32.mrb[0].mxu0
      %v496 = vpop.f32.mrb[0].mxu0
      %v497 = vadd.f32 0.0, %v496
      %v498 = vpop.f32.mrb[0].mxu0
      %499 = vmatprep.mubr.bf16.mxu0 0
      %500 = vmatmul.mubr.bf16.gmra.mrb[0].mxu0 %v414
      %v501 = vpop.f32.mrb[0].mxu0
      %v502 = vadd.f32 0.0, %v501
      %v503 = vpop.f32.mrb[0].mxu0
      %v504 = vpop.f32.mrb[0].mxu0
      %v505 = vadd.f32 0.0, %v504
      %v506 = vpop.f32.mrb[0].mxu0
      %507 = vmatprep.mubr.bf16.mxu0 0
      %508 = vmatmul.mubr.bf16.gmra.mrb[0].mxu0 %v417
      %v509 = vpop.f32.mrb[0].mxu0
      %v510 = vadd.f32 0.0, %v509
      %v511 = vpop.f32.mrb[0].mxu0
      %v512 = vpop.f32.mrb[0].mxu0
      %v513 = vadd.f32 0.0, %v512
      %v514 = vpop.f32.mrb[0].mxu0
      %515 = vmatprep.mubr.bf16.mxu0 0
      %516 = vmatmul.mubr.bf16.gmra.mrb[0].mxu0 %v420
      %v517 = vpop.f32.mrb[0].mxu0
      %v518 = vadd.f32 0.0, %v517
      %v519 = vpop.f32.mrb[0].mxu0
      %v520 = vpop.f32.mrb[0].mxu0
      %v521 = vadd.f32 0.0, %v520
      %v522 = vpop.f32.mrb[0].mxu0
      %523 = vmatprep.mubr.bf16.mxu0 0
      %524 = vmatmul.mubr.bf16.gmra.mrb[0].mxu0 %v423
      %v525 = vpop.f32.mrb[0].mxu0
      %v526 = vadd.f32 0.0, %v525
      %v527 = vpop.f32.mrb[0].mxu0
      %v528 = vpop.f32.mrb[0].mxu0
      %v529 = vadd.f32 0.0, %v528
      %v530 = vpop.f32.mrb[0].mxu0
      %531 = vmatprep.mubr.bf16.mxu0 0
      %532 = vmatmul.mubr.bf16.gmra.mrb[0].mxu0 %v426
      %v533 = vpop.f32.mrb[0].mxu0
      %v534 = vadd.f32 0.0, %v533
      %v535 = vpop.f32.mrb[0].mxu0
      %v536 = vpop.f32.mrb[0].mxu0
      %v537 = vadd.f32 0.0, %v536
      %v538 = vpop.f32.mrb[0].mxu0
      %539 = vdwg.mxu0
      %v540 = vld [vmem:[%s301] sm:$0xf]
      %v541 = vld [vmem:[%s301 + $0x4] sm:$0xf]
      %v542 = vld [vmem:[%s301 + $0x8] sm:$0xf]
      %v543 = vld [vmem:[%s301 + $0xc] sm:$0xf]
      %v544 = vld [vmem:[%s301 + $0x10] sm:$0xf]
      %v545 = vld [vmem:[%s301 + $0x14] sm:$0xf]
      %v546 = vld [vmem:[%s301 + $0x18] sm:$0xf]
      %v547 = vld [vmem:[%s301 + $0x1c] sm:$0xf]
      %v548 = vld [vmem:[%s301 + $0x20] sm:$0xf]
      %v549 = vld [vmem:[%s301 + $0x24] sm:$0xf]
      %v550 = vld [vmem:[%s301 + $0x28] sm:$0xf]
      %v551 = vld [vmem:[%s301 + $0x2c] sm:$0xf]
      %v552 = vld [vmem:[%s301 + $0x30] sm:$0xf]
      %v553 = vld [vmem:[%s301 + $0x34] sm:$0xf]
      %v554 = vld [vmem:[%s301 + $0x38] sm:$0xf]
      %v555 = vld [vmem:[%s301 + $0x3c] sm:$0xf]
      %v556 = vld [vmem:[%s301 + $0x40] sm:$0xf]
      %v557 = vld [vmem:[%s301 + $0x44] sm:$0xf]
      %v576 = vunpack.c.l.b16 %v540
      %v577 = vunpack.c.l.b16 %v541
      %v578 = vunpack.c.l.b16 %v542
      %v579 = vunpack.c.l.b16 %v543
      %v580 = vunpack.c.l.b16 %v544
      %v581 = vunpack.c.l.b16 %v545
      %v582 = vunpack.c.l.b16 %v546
      %v583 = vunpack.c.l.b16 %v547
      %v584 = vunpack.c.l.b16 %v548
      %v585 = vunpack.c.l.b16 %v549
      %v586 = vunpack.c.l.b16 %v550
      %v587 = vunpack.c.l.b16 %v551
      %v588 = vunpack.c.l.b16 %v552
      %v589 = vunpack.c.l.b16 %v553
      %v590 = vunpack.c.l.b16 %v554
      %v591 = vunpack.c.l.b16 %v555
      %v592 = vunpack.c.l.b16 %v556
      %v593 = vunpack.c.l.b16 %v557
      %v594 = vpack.c.b16 %v577, %v576
      %v595 = vpack.c.b16 %v579, %v578
      %v596 = vpack.c.b16 %v581, %v580
      %v597 = vpack.c.b16 %v583, %v582
      %v598 = vpack.c.b16 %v585, %v584
      %v599 = vpack.c.b16 %v587, %v586
      %v600 = vpack.c.b16 %v589, %v588
      %v601 = vpack.c.b16 %v591, %v590
      %v602 = vpack.c.b16 %v593, %v592
      %v604 = vsel %vm400, %v594, 0
      %v607 = vsel %vm400, %v595, 0
      %v610 = vsel %vm400, %v596, 0
      %v613 = vsel %vm400, %v597, 0
      %v616 = vsel %vm400, %v598, 0
      %v619 = vsel %vm400, %v599, 0
      %v622 = vsel %vm400, %v600, 0
      %v625 = vsel %vm400, %v601, 0
      %v628 = vsel %vm400, %v602, 0
      %630 = vmatprep.subr.bf16.mxu0 0
      %631 = vmatpush1.bf16.msra.mxu0 %v397
      %632 = vmatprep.subr.bf16.mxu0 0
      %633 = vmatpush1.bf16.msra.mxu0 %v433
      %634 = vmatprep.subr.bf16.mxu0 0
      %635 = vmatpush1.bf16.msra.mxu0 0
      %636 = vmatprep.subr.bf16.mxu0 0
      %637 = vmatpush1.bf16.msra.mxu0 0
      %638 = vmatprep.subr.bf16.mxu0 0
      %639 = vmatpush1.bf16.msra.mxu0 0
      %640 = vmatprep.subr.bf16.mxu0 0
      %641 = vmatpush1.bf16.msra.mxu0 0
      %642 = vmatprep.subr.bf16.mxu0 0
      %643 = vmatpush1.bf16.msra.mxu0 0
      %644 = vmatprep.subr.bf16.mxu0 0
      %645 = vmatpush1.bf16.msra.mxu0 0
      %646 = vmatprep.subr.bf16.mxu0 0
      %647 = vmatpush1.bf16.msra.mxu0 0
      %648 = vmatprep.subr.bf16.mxu0 0
      %649 = vmatpush1.bf16.msra.mxu0 0
      %650 = vmatprep.subr.bf16.mxu0 0
      %651 = vmatpush1.bf16.msra.mxu0 0
      %652 = vmatprep.subr.bf16.mxu0 0
      %653 = vmatpush1.bf16.msra.mxu0 0
      %654 = vmatprep.subr.bf16.mxu0 0
      %655 = vmatpush1.bf16.msra.mxu0 0
      %656 = vmatprep.subr.bf16.mxu0 0
      %657 = vmatpush1.bf16.msra.mxu0 0
      %658 = vmatprep.subr.bf16.mxu0 0
      %659 = vmatpush1.bf16.msra.mxu0 0
      %660 = vmatprep.subr.bf16.mxu0 0
      %661 = vmatpush1.bf16.msra.mxu0 0
      %662 = vmatprep.mubr.bf16.mxu0 0
      %663 = vmatmul.mubr.bf16.gmra.mrb[0].mxu0 %v604
      %v664 = vpop.f32.mrb[0].mxu0
      %v665 = vadd.f32 0.0, %v664
      %v666 = vpop.f32.mrb[0].mxu0
      %v667 = vpop.f32.mrb[0].mxu0
      %v668 = vadd.f32 0.0, %v667
      %v669 = vpop.f32.mrb[0].mxu0
      %670 = vmatprep.mubr.bf16.mxu0 0
      %671 = vmatmul.mubr.bf16.gmra.mrb[0].mxu0 %v607
      %v672 = vpop.f32.mrb[0].mxu0
      %v673 = vadd.f32 0.0, %v672
      %v674 = vpop.f32.mrb[0].mxu0
      %v675 = vpop.f32.mrb[0].mxu0
      %v676 = vadd.f32 0.0, %v675
      %v677 = vpop.f32.mrb[0].mxu0
      %678 = vmatprep.mubr.bf16.mxu0 0
      %679 = vmatmul.mubr.bf16.gmra.mrb[0].mxu0 %v610
      %v680 = vpop.f32.mrb[0].mxu0
      %v681 = vadd.f32 0.0, %v680
      %v682 = vpop.f32.mrb[0].mxu0
      %v683 = vpop.f32.mrb[0].mxu0
      %v684 = vadd.f32 0.0, %v683
      %v685 = vpop.f32.mrb[0].mxu0
      %686 = vmatprep.mubr.bf16.mxu0 0
      %687 = vmatmul.mubr.bf16.gmra.mrb[0].mxu0 %v613
      %v688 = vpop.f32.mrb[0].mxu0
      %v689 = vadd.f32 0.0, %v688
      %v690 = vpop.f32.mrb[0].mxu0
      %v691 = vpop.f32.mrb[0].mxu0
      %v692 = vadd.f32 0.0, %v691
      %v693 = vpop.f32.mrb[0].mxu0
      %694 = vmatprep.mubr.bf16.mxu0 0
      %695 = vmatmul.mubr.bf16.gmra.mrb[0].mxu0 %v616
      %v696 = vpop.f32.mrb[0].mxu0
      %v697 = vadd.f32 0.0, %v696
      %v698 = vpop.f32.mrb[0].mxu0
      %v699 = vpop.f32.mrb[0].mxu0
      %v700 = vadd.f32 0.0, %v699
      %v701 = vpop.f32.mrb[0].mxu0
      %702 = vmatprep.mubr.bf16.mxu0 0
      %703 = vmatmul.mubr.bf16.gmra.mrb[0].mxu0 %v619
      %v704 = vpop.f32.mrb[0].mxu0
      %v705 = vadd.f32 0.0, %v704
      %v706 = vpop.f32.mrb[0].mxu0
      %v707 = vpop.f32.mrb[0].mxu0
      %v708 = vadd.f32 0.0, %v707
      %v709 = vpop.f32.mrb[0].mxu0
      %710 = vmatprep.mubr.bf16.mxu0 0
      %711 = vmatmul.mubr.bf16.gmra.mrb[0].mxu0 %v622
      %v712 = vpop.f32.mrb[0].mxu0
      %v713 = vadd.f32 0.0, %v712
      %v714 = vpop.f32.mrb[0].mxu0
      %v715 = vpop.f32.mrb[0].mxu0
      %v716 = vadd.f32 0.0, %v715
      %v717 = vpop.f32.mrb[0].mxu0
      %718 = vmatprep.mubr.bf16.mxu0 0
      %719 = vmatmul.mubr.bf16.gmra.mrb[0].mxu0 %v625
      %v720 = vpop.f32.mrb[0].mxu0
      %v721 = vadd.f32 0.0, %v720
      %v722 = vpop.f32.mrb[0].mxu0
      %v723 = vpop.f32.mrb[0].mxu0
      %v724 = vadd.f32 0.0, %v723
      %v725 = vpop.f32.mrb[0].mxu0
      %726 = vmatprep.mubr.bf16.mxu0 0
      %727 = vmatmul.mubr.bf16.gmra.mrb[0].mxu0 %v628
      %v728 = vpop.f32.mrb[0].mxu0
      %v729 = vadd.f32 0.0, %v728
      %v730 = vpop.f32.mrb[0].mxu0
      %v731 = vpop.f32.mrb[0].mxu0
      %v732 = vadd.f32 0.0, %v731
      %v733 = vpop.f32.mrb[0].mxu0
      %734 = vdwg.mxu0
      %v735 = vld [vmem:[%s307] sm:$0xf]
      %v736 = vld [vmem:[%s307 + $0x4] sm:$0xf]
      %v737 = vld [vmem:[%s307 + $0x8] sm:$0xf]
      %v738 = vld [vmem:[%s307 + $0xc] sm:$0xf]
      %v739 = vld [vmem:[%s307 + $0x10] sm:$0xf]
      %v740 = vld [vmem:[%s307 + $0x14] sm:$0xf]
      %v741 = vld [vmem:[%s307 + $0x18] sm:$0xf]
      %v742 = vld [vmem:[%s307 + $0x1c] sm:$0xf]
      %v743 = vld [vmem:[%s307 + $0x20] sm:$0xf]
      %v744 = vld [vmem:[%s307 + $0x24] sm:$0xf]
      %v745 = vld [vmem:[%s307 + $0x28] sm:$0xf]
      %v746 = vld [vmem:[%s307 + $0x2c] sm:$0xf]
      %v747 = vld [vmem:[%s307 + $0x30] sm:$0xf]
      %v748 = vld [vmem:[%s307 + $0x34] sm:$0xf]
      %v749 = vld [vmem:[%s307 + $0x38] sm:$0xf]
      %v750 = vld [vmem:[%s307 + $0x3c] sm:$0xf]
      %v751 = vld [vmem:[%s307 + $0x40] sm:$0xf]
      %v752 = vld [vmem:[%s307 + $0x44] sm:$0xf]
      %v771 = vunpack.c.l.b16 %v735
      %v772 = vunpack.c.l.b16 %v736
      %v773 = vunpack.c.l.b16 %v737
      %v774 = vunpack.c.l.b16 %v738
      %v775 = vunpack.c.l.b16 %v739
      %v776 = vunpack.c.l.b16 %v740
      %v777 = vunpack.c.l.b16 %v741
      %v778 = vunpack.c.l.b16 %v742
      %v779 = vunpack.c.l.b16 %v743
      %v780 = vunpack.c.l.b16 %v744
      %v781 = vunpack.c.l.b16 %v745
      %v782 = vunpack.c.l.b16 %v746
      %v783 = vunpack.c.l.b16 %v747
      %v784 = vunpack.c.l.b16 %v748
      %v785 = vunpack.c.l.b16 %v749
      %v786 = vunpack.c.l.b16 %v750
      %v787 = vunpack.c.l.b16 %v751
      %v788 = vunpack.c.l.b16 %v752
      %v789 = vpack.c.b16 %v772, %v771
      %v790 = vpack.c.b16 %v774, %v773
      %v791 = vpack.c.b16 %v776, %v775
      %v792 = vpack.c.b16 %v778, %v777
      %v793 = vpack.c.b16 %v780, %v779
      %v794 = vpack.c.b16 %v782, %v781
      %v795 = vpack.c.b16 %v784, %v783
      %v796 = vpack.c.b16 %v786, %v785
      %v797 = vpack.c.b16 %v788, %v787
      %v799 = vsel %vm400, %v789, 0
      %v802 = vsel %vm400, %v790, 0
      %v805 = vsel %vm400, %v791, 0
      %v808 = vsel %vm400, %v792, 0
      %v811 = vsel %vm400, %v793, 0
      %v814 = vsel %vm400, %v794, 0
      %v817 = vsel %vm400, %v795, 0
      %v820 = vsel %vm400, %v796, 0
      %v823 = vsel %vm400, %v797, 0
      %825 = vmatprep.subr.bf16.mxu0 0
      %826 = vmatpush1.bf16.msra.mxu0 %v397
      %827 = vmatprep.subr.bf16.mxu0 0
      %828 = vmatpush1.bf16.msra.mxu0 %v433
      %829 = vmatprep.subr.bf16.mxu0 0
      %830 = vmatpush1.bf16.msra.mxu0 0
      %831 = vmatprep.subr.bf16.mxu0 0
      %832 = vmatpush1.bf16.msra.mxu0 0
      %833 = vmatprep.subr.bf16.mxu0 0
      %834 = vmatpush1.bf16.msra.mxu0 0
      %835 = vmatprep.subr.bf16.mxu0 0
      %836 = vmatpush1.bf16.msra.mxu0 0
      %837 = vmatprep.subr.bf16.mxu0 0
      %838 = vmatpush1.bf16.msra.mxu0 0
      %839 = vmatprep.subr.bf16.mxu0 0
      %840 = vmatpush1.bf16.msra.mxu0 0
      %841 = vmatprep.subr.bf16.mxu0 0
      %842 = vmatpush1.bf16.msra.mxu0 0
      %843 = vmatprep.subr.bf16.mxu0 0
      %844 = vmatpush1.bf16.msra.mxu0 0
      %845 = vmatprep.subr.bf16.mxu0 0
      %846 = vmatpush1.bf16.msra.mxu0 0
      %847 = vmatprep.subr.bf16.mxu0 0
      %848 = vmatpush1.bf16.msra.mxu0 0
      %849 = vmatprep.subr.bf16.mxu0 0
      %850 = vmatpush1.bf16.msra.mxu0 0
      %851 = vmatprep.subr.bf16.mxu0 0
      %852 = vmatpush1.bf16.msra.mxu0 0
      %853 = vmatprep.subr.bf16.mxu0 0
      %854 = vmatpush1.bf16.msra.mxu0 0
      %855 = vmatprep.subr.bf16.mxu0 0
      %856 = vmatpush1.bf16.msra.mxu0 0
      %857 = vmatprep.mubr.bf16.mxu0 0
      %858 = vmatmul.mubr.bf16.gmra.mrb[0].mxu0 %v799
      %v859 = vpop.f32.mrb[0].mxu0
      %v860 = vadd.f32 0.0, %v859
      %v861 = vpop.f32.mrb[0].mxu0
      %v862 = vpop.f32.mrb[0].mxu0
      %v863 = vadd.f32 0.0, %v862
      %v864 = vpop.f32.mrb[0].mxu0
      %865 = vmatprep.mubr.bf16.mxu0 0
      %866 = vmatmul.mubr.bf16.gmra.mrb[0].mxu0 %v802
      %v867 = vpop.f32.mrb[0].mxu0
      %v868 = vadd.f32 0.0, %v867
      %v869 = vpop.f32.mrb[0].mxu0
      %v870 = vpop.f32.mrb[0].mxu0
      %v871 = vadd.f32 0.0, %v870
      %v872 = vpop.f32.mrb[0].mxu0
      %873 = vmatprep.mubr.bf16.mxu0 0
      %874 = vmatmul.mubr.bf16.gmra.mrb[0].mxu0 %v805
      %v875 = vpop.f32.mrb[0].mxu0
      %v876 = vadd.f32 0.0, %v875
      %v877 = vpop.f32.mrb[0].mxu0
      %v878 = vpop.f32.mrb[0].mxu0
      %v879 = vadd.f32 0.0, %v878
      %v880 = vpop.f32.mrb[0].mxu0
      %881 = vmatprep.mubr.bf16.mxu0 0
      %882 = vmatmul.mubr.bf16.gmra.mrb[0].mxu0 %v808
      %v883 = vpop.f32.mrb[0].mxu0
      %v884 = vadd.f32 0.0, %v883
      %v885 = vpop.f32.mrb[0].mxu0
      %v886 = vpop.f32.mrb[0].mxu0
      %v887 = vadd.f32 0.0, %v886
      %v888 = vpop.f32.mrb[0].mxu0
      %889 = vmatprep.mubr.bf16.mxu0 0
      %890 = vmatmul.mubr.bf16.gmra.mrb[0].mxu0 %v811
      %v891 = vpop.f32.mrb[0].mxu0
      %v892 = vadd.f32 0.0, %v891
      %v893 = vpop.f32.mrb[0].mxu0
      %v894 = vpop.f32.mrb[0].mxu0
      %v895 = vadd.f32 0.0, %v894
      %v896 = vpop.f32.mrb[0].mxu0
      %897 = vmatprep.mubr.bf16.mxu0 0
      %898 = vmatmul.mubr.bf16.gmra.mrb[0].mxu0 %v814
      %v899 = vpop.f32.mrb[0].mxu0
      %v900 = vadd.f32 0.0, %v899
      %v901 = vpop.f32.mrb[0].mxu0
      %v902 = vpop.f32.mrb[0].mxu0
      %v903 = vadd.f32 0.0, %v902
      %v904 = vpop.f32.mrb[0].mxu0
      %905 = vmatprep.mubr.bf16.mxu0 0
      %906 = vmatmul.mubr.bf16.gmra.mrb[0].mxu0 %v817
      %v907 = vpop.f32.mrb[0].mxu0
      %v908 = vadd.f32 0.0, %v907
      %v909 = vpop.f32.mrb[0].mxu0
      %v910 = vpop.f32.mrb[0].mxu0
      %v911 = vadd.f32 0.0, %v910
      %v912 = vpop.f32.mrb[0].mxu0
      %913 = vmatprep.mubr.bf16.mxu0 0
      %914 = vmatmul.mubr.bf16.gmra.mrb[0].mxu0 %v820
      %v915 = vpop.f32.mrb[0].mxu0
      %v916 = vadd.f32 0.0, %v915
      %v917 = vpop.f32.mrb[0].mxu0
      %v918 = vpop.f32.mrb[0].mxu0
      %v919 = vadd.f32 0.0, %v918
      %v920 = vpop.f32.mrb[0].mxu0
      %921 = vmatprep.mubr.bf16.mxu0 0
      %922 = vmatmul.mubr.bf16.gmra.mrb[0].mxu0 %v823
      %v923 = vpop.f32.mrb[0].mxu0
      %v924 = vadd.f32 0.0, %v923
      %v925 = vpop.f32.mrb[0].mxu0
      %v926 = vpop.f32.mrb[0].mxu0
      %v927 = vadd.f32 0.0, %v926
      %v928 = vpop.f32.mrb[0].mxu0
      %929 = vdwg.mxu0
      %v930 = vld [vmem:[%s313] sm:$0xf]
      %v931 = vld [vmem:[%s313 + $0x4] sm:$0xf]
      %v932 = vld [vmem:[%s313 + $0x8] sm:$0xf]
      %v933 = vld [vmem:[%s313 + $0xc] sm:$0xf]
      %v934 = vld [vmem:[%s313 + $0x10] sm:$0xf]
      %v935 = vld [vmem:[%s313 + $0x14] sm:$0xf]
      %v936 = vld [vmem:[%s313 + $0x18] sm:$0xf]
      %v937 = vld [vmem:[%s313 + $0x1c] sm:$0xf]
      %v938 = vld [vmem:[%s313 + $0x20] sm:$0xf]
      %v939 = vld [vmem:[%s313 + $0x24] sm:$0xf]
      %v940 = vld [vmem:[%s313 + $0x28] sm:$0xf]
      %v941 = vld [vmem:[%s313 + $0x2c] sm:$0xf]
      %v942 = vld [vmem:[%s313 + $0x30] sm:$0xf]
      %v943 = vld [vmem:[%s313 + $0x34] sm:$0xf]
      %v944 = vld [vmem:[%s313 + $0x38] sm:$0xf]
      %v945 = vld [vmem:[%s313 + $0x3c] sm:$0xf]
      %v946 = vld [vmem:[%s313 + $0x40] sm:$0xf]
      %v947 = vld [vmem:[%s313 + $0x44] sm:$0xf]
      %v966 = vunpack.c.l.b16 %v930
      %v967 = vunpack.c.l.b16 %v931
      %v968 = vunpack.c.l.b16 %v932
      %v969 = vunpack.c.l.b16 %v933
      %v970 = vunpack.c.l.b16 %v934
      %v971 = vunpack.c.l.b16 %v935
      %v972 = vunpack.c.l.b16 %v936
      %v973 = vunpack.c.l.b16 %v937
      %v974 = vunpack.c.l.b16 %v938
      %v975 = vunpack.c.l.b16 %v939
      %v976 = vunpack.c.l.b16 %v940
      %v977 = vunpack.c.l.b16 %v941
      %v978 = vunpack.c.l.b16 %v942
      %v979 = vunpack.c.l.b16 %v943
      %v980 = vunpack.c.l.b16 %v944
      %v981 = vunpack.c.l.b16 %v945
      %v982 = vunpack.c.l.b16 %v946
      %v983 = vunpack.c.l.b16 %v947
      %v984 = vpack.c.b16 %v967, %v966
      %v985 = vpack.c.b16 %v969, %v968
      %v986 = vpack.c.b16 %v971, %v970
      %v987 = vpack.c.b16 %v973, %v972
      %v988 = vpack.c.b16 %v975, %v974
      %v989 = vpack.c.b16 %v977, %v976
      %v990 = vpack.c.b16 %v979, %v978
      %v991 = vpack.c.b16 %v981, %v980
      %v992 = vpack.c.b16 %v983, %v982
      %v994 = vsel %vm400, %v984, 0
      %v997 = vsel %vm400, %v985, 0
      %v1000 = vsel %vm400, %v986, 0
      %v1003 = vsel %vm400, %v987, 0
      %v1006 = vsel %vm400, %v988, 0
      %v1009 = vsel %vm400, %v989, 0
      %v1012 = vsel %vm400, %v990, 0
      %v1015 = vsel %vm400, %v991, 0
      %v1018 = vsel %vm400, %v992, 0
      %1020 = vmatprep.subr.bf16.mxu0 0
      %1021 = vmatpush1.bf16.msra.mxu0 %v397
      %1022 = vmatprep.subr.bf16.mxu0 0
      %1023 = vmatpush1.bf16.msra.mxu0 %v433
      %1024 = vmatprep.subr.bf16.mxu0 0
      %1025 = vmatpush1.bf16.msra.mxu0 0
      %1026 = vmatprep.subr.bf16.mxu0 0
      %1027 = vmatpush1.bf16.msra.mxu0 0
      %1028 = vmatprep.subr.bf16.mxu0 0
      %1029 = vmatpush1.bf16.msra.mxu0 0
      %1030 = vmatprep.subr.bf16.mxu0 0
      %1031 = vmatpush1.bf16.msra.mxu0 0
      %1032 = vmatprep.subr.bf16.mxu0 0
      %1033 = vmatpush1.bf16.msra.mxu0 0
      %1034 = vmatprep.subr.bf16.mxu0 0
      %1035 = vmatpush1.bf16.msra.mxu0 0
      %1036 = vmatprep.subr.bf16.mxu0 0
      %1037 = vmatpush1.bf16.msra.mxu0 0
      %1038 = vmatprep.subr.bf16.mxu0 0
      %1039 = vmatpush1.bf16.msra.mxu0 0
      %1040 = vmatprep.subr.bf16.mxu0 0
      %1041 = vmatpush1.bf16.msra.mxu0 0
      %1042 = vmatprep.subr.bf16.mxu0 0
      %1043 = vmatpush1.bf16.msra.mxu0 0
      %1044 = vmatprep.subr.bf16.mxu0 0
      %1045 = vmatpush1.bf16.msra.mxu0 0
      %1046 = vmatprep.subr.bf16.mxu0 0
      %1047 = vmatpush1.bf16.msra.mxu0 0
      %1048 = vmatprep.subr.bf16.mxu0 0
      %1049 = vmatpush1.bf16.msra.mxu0 0
      %1050 = vmatprep.subr.bf16.mxu0 0
      %1051 = vmatpush1.bf16.msra.mxu0 0
      %1052 = vmatprep.mubr.bf16.mxu0 0
      %1053 = vmatmul.mubr.bf16.gmra.mrb[0].mxu0 %v994
      %v1054 = vpop.f32.mrb[0].mxu0
      %v1055 = vadd.f32 0.0, %v1054
      %v1056 = vpop.f32.mrb[0].mxu0
      %v1057 = vpop.f32.mrb[0].mxu0
      %v1058 = vadd.f32 0.0, %v1057
      %v1059 = vpop.f32.mrb[0].mxu0
      %1060 = vmatprep.mubr.bf16.mxu0 0
      %1061 = vmatmul.mubr.bf16.gmra.mrb[0].mxu0 %v997
      %v1062 = vpop.f32.mrb[0].mxu0
      %v1063 = vadd.f32 0.0, %v1062
      %v1064 = vpop.f32.mrb[0].mxu0
      %v1065 = vpop.f32.mrb[0].mxu0
      %v1066 = vadd.f32 0.0, %v1065
      %v1067 = vpop.f32.mrb[0].mxu0
      %1068 = vmatprep.mubr.bf16.mxu0 0
      %1069 = vmatmul.mubr.bf16.gmra.mrb[0].mxu0 %v1000
      %v1070 = vpop.f32.mrb[0].mxu0
      %v1071 = vadd.f32 0.0, %v1070
      %v1072 = vpop.f32.mrb[0].mxu0
      %v1073 = vpop.f32.mrb[0].mxu0
      %v1074 = vadd.f32 0.0, %v1073
      %v1075 = vpop.f32.mrb[0].mxu0
      %1076 = vmatprep.mubr.bf16.mxu0 0
      %1077 = vmatmul.mubr.bf16.gmra.mrb[0].mxu0 %v1003
      %v1078 = vpop.f32.mrb[0].mxu0
      %v1079 = vadd.f32 0.0, %v1078
      %v1080 = vpop.f32.mrb[0].mxu0
      %v1081 = vpop.f32.mrb[0].mxu0
      %v1082 = vadd.f32 0.0, %v1081
      %v1083 = vpop.f32.mrb[0].mxu0
      %1084 = vmatprep.mubr.bf16.mxu0 0
      %1085 = vmatmul.mubr.bf16.gmra.mrb[0].mxu0 %v1006
      %v1086 = vpop.f32.mrb[0].mxu0
      %v1087 = vadd.f32 0.0, %v1086
      %v1088 = vpop.f32.mrb[0].mxu0
      %v1089 = vpop.f32.mrb[0].mxu0
      %v1090 = vadd.f32 0.0, %v1089
      %v1091 = vpop.f32.mrb[0].mxu0
      %1092 = vmatprep.mubr.bf16.mxu0 0
      %1093 = vmatmul.mubr.bf16.gmra.mrb[0].mxu0 %v1009
      %v1094 = vpop.f32.mrb[0].mxu0
      %v1095 = vadd.f32 0.0, %v1094
      %v1096 = vpop.f32.mrb[0].mxu0
      %v1097 = vpop.f32.mrb[0].mxu0
      %v1098 = vadd.f32 0.0, %v1097
      %v1099 = vpop.f32.mrb[0].mxu0
      %1100 = vmatprep.mubr.bf16.mxu0 0
      %1101 = vmatmul.mubr.bf16.gmra.mrb[0].mxu0 %v1012
      %v1102 = vpop.f32.mrb[0].mxu0
      %v1103 = vadd.f32 0.0, %v1102
      %v1104 = vpop.f32.mrb[0].mxu0
      %v1105 = vpop.f32.mrb[0].mxu0
      %v1106 = vadd.f32 0.0, %v1105
      %v1107 = vpop.f32.mrb[0].mxu0
      %1108 = vmatprep.mubr.bf16.mxu0 0
      %1109 = vmatmul.mubr.bf16.gmra.mrb[0].mxu0 %v1015
      %v1110 = vpop.f32.mrb[0].mxu0
      %v1111 = vadd.f32 0.0, %v1110
      %v1112 = vpop.f32.mrb[0].mxu0
      %v1113 = vpop.f32.mrb[0].mxu0
      %v1114 = vadd.f32 0.0, %v1113
      %v1115 = vpop.f32.mrb[0].mxu0
      %1116 = vmatprep.mubr.bf16.mxu0 0
      %1117 = vmatmul.mubr.bf16.gmra.mrb[0].mxu0 %v1018
      %v1118 = vpop.f32.mrb[0].mxu0
      %v1119 = vadd.f32 0.0, %v1118
      %v1120 = vpop.f32.mrb[0].mxu0
      %v1121 = vpop.f32.mrb[0].mxu0
      %v1122 = vadd.f32 0.0, %v1121
      %v1123 = vpop.f32.mrb[0].mxu0
      %1124 = vdwg.mxu0
      %v1125 = vmax.f32 %v470, %v665
      %v1126 = vmax.f32 %v473, %v668
      %v1127 = vmax.f32 %v478, %v673
      %v1128 = vmax.f32 %v481, %v676
      %v1129 = vmax.f32 %v486, %v681
      %v1130 = vmax.f32 %v489, %v684
      %v1131 = vmax.f32 %v494, %v689
      %v1132 = vmax.f32 %v497, %v692
      %v1133 = vmax.f32 %v502, %v697
      %v1134 = vmax.f32 %v505, %v700
      %v1135 = vmax.f32 %v510, %v705
      %v1136 = vmax.f32 %v513, %v708
      %v1137 = vmax.f32 %v518, %v713
      %v1138 = vmax.f32 %v521, %v716
      %v1139 = vmax.f32 %v526, %v721
      %v1140 = vmax.f32 %v529, %v724
      %v1141 = vmax.f32 %v534, %v729
      %v1142 = vmax.f32 %v537, %v732
      %v1143 = vmax.f32 %v860, %v1055
      %v1144 = vmax.f32 %v863, %v1058
      %v1145 = vmax.f32 %v868, %v1063
      %v1146 = vmax.f32 %v871, %v1066
      %v1147 = vmax.f32 %v876, %v1071
      %v1148 = vmax.f32 %v879, %v1074
      %v1149 = vmax.f32 %v884, %v1079
      %v1150 = vmax.f32 %v887, %v1082
      %v1151 = vmax.f32 %v892, %v1087
      %v1152 = vmax.f32 %v895, %v1090
      %v1153 = vmax.f32 %v900, %v1095
      %v1154 = vmax.f32 %v903, %v1098
      %v1155 = vmax.f32 %v908, %v1103
      %v1156 = vmax.f32 %v911, %v1106
      %v1157 = vmax.f32 %v916, %v1111
      %v1158 = vmax.f32 %v919, %v1114
      %v1159 = vmax.f32 %v924, %v1119
      %v1160 = vmax.f32 %v927, %v1122
      %v1161 = vmax.f32 %v1125, %v1143
      %v1162 = vmax.f32 %v1126, %v1144
      %v1163 = vmax.f32 %v1127, %v1145
      %v1164 = vmax.f32 %v1128, %v1146
      %v1165 = vmax.f32 %v1129, %v1147
      %v1166 = vmax.f32 %v1130, %v1148
      %v1167 = vmax.f32 %v1131, %v1149
      %v1168 = vmax.f32 %v1132, %v1150
      %v1169 = vmax.f32 %v1133, %v1151
      %v1170 = vmax.f32 %v1134, %v1152
      %v1171 = vmax.f32 %v1135, %v1153
      %v1172 = vmax.f32 %v1136, %v1154
      %v1173 = vmax.f32 %v1137, %v1155
      %v1174 = vmax.f32 %v1138, %v1156
      %v1175 = vmax.f32 %v1139, %v1157
      %v1176 = vmax.f32 %v1140, %v1158
      %v1177 = vmax.f32 %v1141, %v1159
      %v1178 = vmax.f32 %v1142, %v1160
      %v1179 = vld [vmem:[%s5] sm:$0x1]
      %v1181 = vlaneseq
      %v1182 = vshrl.u32 %v1181, 7
      %v1183 = vsub.s32 0, %v1182
      %v1184 = vrot.slane %v1179, %v1183
      %v1186 = vadd.f32 %v1161, %v1184
      %v1187 = vadd.f32 %v1162, %v1184
      %v1188 = vadd.f32 %v1163, %v1184
      %v1189 = vadd.f32 %v1164, %v1184
      %v1190 = vadd.f32 %v1165, %v1184
      %v1191 = vadd.f32 %v1166, %v1184
      %v1192 = vadd.f32 %v1167, %v1184
      %v1193 = vadd.f32 %v1168, %v1184
      %v1194 = vadd.f32 %v1169, %v1184
      %v1195 = vadd.f32 %v1170, %v1184
      %v1196 = vadd.f32 %v1171, %v1184
      %v1197 = vadd.f32 %v1172, %v1184
      %v1198 = vadd.f32 %v1173, %v1184
      %v1199 = vadd.f32 %v1174, %v1184
      %v1200 = vadd.f32 %v1175, %v1184
      %v1201 = vadd.f32 %v1176, %v1184
      %v1202 = vadd.f32 %v1177, %v1184
      %v1203 = vadd.f32 %v1178, %v1184
      %v1204 = vmax.f32 %v1186, 0.0
      %v1205 = vmax.f32 %v1187, 0.0
      %v1206 = vmax.f32 %v1188, 0.0
      %v1207 = vmax.f32 %v1189, 0.0
      %v1208 = vmax.f32 %v1190, 0.0
      %v1209 = vmax.f32 %v1191, 0.0
      %v1210 = vmax.f32 %v1192, 0.0
      %v1211 = vmax.f32 %v1193, 0.0
      %v1212 = vmax.f32 %v1194, 0.0
      %v1213 = vmax.f32 %v1195, 0.0
      %v1214 = vmax.f32 %v1196, 0.0
      %v1215 = vmax.f32 %v1197, 0.0
      %v1216 = vmax.f32 %v1198, 0.0
      %v1217 = vmax.f32 %v1199, 0.0
      %v1218 = vmax.f32 %v1200, 0.0
      %v1219 = vmax.f32 %v1201, 0.0
      %v1220 = vmax.f32 %v1202, 0.0
      %v1221 = vmax.f32 %v1203, 0.0
      %v1222 = vpack.c.bf16 %v1205, %v1204
      %v1223 = vpack.c.bf16 %v1207, %v1206
      %v1224 = vpack.c.bf16 %v1209, %v1208
      %v1225 = vpack.c.bf16 %v1211, %v1210
      %v1226 = vpack.c.bf16 %v1213, %v1212
      %v1227 = vpack.c.bf16 %v1215, %v1214
      %v1228 = vpack.c.bf16 %v1217, %v1216
      %v1229 = vpack.c.bf16 %v1219, %v1218
      %v1230 = vpack.c.bf16 %v1221, %v1220
      %v1240 = vunpack.c.l.b16 %v1222
      %v1241 = vunpack.c.h.b16 %v1222
      %v1242 = vunpack.c.l.b16 %v1223
      %v1243 = vunpack.c.h.b16 %v1223
      %v1244 = vunpack.c.l.b16 %v1224
      %v1245 = vunpack.c.h.b16 %v1224
      %v1246 = vunpack.c.l.b16 %v1225
      %v1247 = vunpack.c.h.b16 %v1225
      %v1248 = vunpack.c.l.b16 %v1226
      %v1249 = vunpack.c.h.b16 %v1226
      %v1250 = vunpack.c.l.b16 %v1227
      %v1251 = vunpack.c.h.b16 %v1227
      %v1252 = vunpack.c.l.b16 %v1228
      %v1253 = vunpack.c.h.b16 %v1228
      %v1254 = vunpack.c.l.b16 %v1229
      %v1255 = vunpack.c.h.b16 %v1229
      %v1256 = vunpack.c.l.b16 %v1230
      %v1257 = vunpack.c.h.b16 %v1230
      %v1258 = vpack.c.b16 %v1240, %v1240
      %v1259 = vpack.c.b16 %v1241, %v1241
      %v1260 = vpack.c.b16 %v1242, %v1242
      %v1261 = vpack.c.b16 %v1243, %v1243
      %v1262 = vpack.c.b16 %v1244, %v1244
      %v1263 = vpack.c.b16 %v1245, %v1245
      %v1264 = vpack.c.b16 %v1246, %v1246
      %v1265 = vpack.c.b16 %v1247, %v1247
      %v1266 = vpack.c.b16 %v1248, %v1248
      %v1267 = vpack.c.b16 %v1249, %v1249
      %v1268 = vpack.c.b16 %v1250, %v1250
      %v1269 = vpack.c.b16 %v1251, %v1251
      %v1270 = vpack.c.b16 %v1252, %v1252
      %v1271 = vpack.c.b16 %v1253, %v1253
      %v1272 = vpack.c.b16 %v1254, %v1254
      %v1273 = vpack.c.b16 %v1255, %v1255
      %v1274 = vpack.c.b16 %v1256, %v1256
      %v1275 = vpack.c.b16 %v1257, %v1257
      %vm1294 = vcmask 158720
      %1295 = vst.msk [vmem:[%s319] sm:$0xf] %vm1294, %v1258
      %1296 = vst.msk [vmem:[%s319 + $0x4] sm:$0xf] %vm1294, %v1259
      %1297 = vst.msk [vmem:[%s319 + $0x8] sm:$0xf] %vm1294, %v1260
      %1298 = vst.msk [vmem:[%s319 + $0xc] sm:$0xf] %vm1294, %v1261
      %1299 = vst.msk [vmem:[%s319 + $0x10] sm:$0xf] %vm1294, %v1262
      %1300 = vst.msk [vmem:[%s319 + $0x14] sm:$0xf] %vm1294, %v1263
      %1301 = vst.msk [vmem:[%s319 + $0x18] sm:$0xf] %vm1294, %v1264
      %1302 = vst.msk [vmem:[%s319 + $0x1c] sm:$0xf] %vm1294, %v1265
      %1303 = vst.msk [vmem:[%s319 + $0x20] sm:$0xf] %vm1294, %v1266
      %1304 = vst.msk [vmem:[%s319 + $0x24] sm:$0xf] %vm1294, %v1267
      %1305 = vst.msk [vmem:[%s319 + $0x28] sm:$0xf] %vm1294, %v1268
      %1306 = vst.msk [vmem:[%s319 + $0x2c] sm:$0xf] %vm1294, %v1269
      %1307 = vst.msk [vmem:[%s319 + $0x30] sm:$0xf] %vm1294, %v1270
      %1308 = vst.msk [vmem:[%s319 + $0x34] sm:$0xf] %vm1294, %v1271
      %1309 = vst.msk [vmem:[%s319 + $0x38] sm:$0xf] %vm1294, %v1272
      %1310 = vst.msk [vmem:[%s319 + $0x3c] sm:$0xf] %vm1294, %v1273
      %1311 = vst.msk [vmem:[%s319 + $0x40] sm:$0xf] %vm1294, %v1274
      %1312 = vst.msk [vmem:[%s319 + $0x44] sm:$0xf] %vm1294, %v1275
      %s1313 = smul.u32 18, %s17
      %p1314 = scmp.lt.s32.totalorder %s1313, 35
      %s1315 = scalar_select %p1314, %s1313, 35
      %s1316 = smul.addr %s1315, 4
      %s1317 = scalar_lea.vmem %s6, %s1316
      // Predicated region
      $region45: #{net_forward.3} parent=43 // pred_check
        %p1318 = pneg %p181
      $region46: #{net_forward.3} parent=43 // pred_check_branch
        %1320 = sbr.rel (%p1318) target = $region48
      $region47: #{net_forward.3} parent=43 // pred_region
        %s1321 = smul.u32 18, %s17
      $region48: #{net_forward.3} parent=43 // pred_fallthru
        _
    $region44: #{net_forward.3} parent=5 // pred_fallthru
      _
    %p1322 = scmp.le.s32.totalorder 2, %s12
    // Predicated region
    $region49: #{net_forward.3} parent=5 // pred_check
      %p1323 = pneg %p1322
    $region50: #{net_forward.3} parent=5 // pred_check_branch
      %1325 = sbr.rel (%p1323) target = $region52
    $region51: #{net_forward.3} parent=5 // pred_region
      %s1326 = ssub.s32 %s12, 2
      // Predicated region
      $region53: #{net_forward.3} parent=51 // pred_check
        %p1327 = pneg %p187
      $region54: #{net_forward.3} parent=51 // pred_check_branch
        %1329 = sbr.rel (%p1327) target = $region56
      $region55: #{net_forward.3} parent=51 // pred_region
        %s1330 = smul.u32 18, %s18
        %p1331 = scmp.lt.s32.totalorder %s1330, 35
        %s1332 = scalar_select %p1331, %s1330, 35
        %s1333 = smul.addr %s1332, 4
        %s1334 = scalar_lea.vmem %s6, %s1333
      $region56: #{net_forward.3} parent=51 // pred_fallthru
        _
    $region52: #{net_forward.3} parent=5 // pred_fallthru
      _
  $region6: #{net_forward.3} parent=0 // loop_footer
    %s16 = sadd.s32 1, %s12
  $region7: #{net_forward.3} parent=0 // loop_footer_branch
    %11 = sbr.rel target = $region3
  $region8: #{net_forward.3} parent=0 // loop_exit
    _

// kernel: net_forward.4
$region0: #{net_forward.4}
  #allocation0 [shape = 'u32[]', space=smem, size = 0x4, offset = 0x4, fixed_abs, tag = 'smem constant byte address 0x4 - core index']
  #allocation1 [shape = 'u32[144,128]{1,0:T(1,128)}', space=vmem, size = 0x12000, scoped, tag = 'internal scratch']
  %s0 = inlined_call_operand.vmem [shape: bf16[32,500], index: 0, kind: input, shape index: {}]
  %s1 = inlined_call_operand.vmem [shape: bf16[32,500], index: 1, kind: input, shape index: {}]
  %s2 = inlined_call_operand.vmem [shape: bf16[32,500], index: 2, kind: input, shape index: {}]
  %s3 = inlined_call_operand.vmem [shape: bf16[32,500], index: 3, kind: input, shape index: {}]
  %s4 = inlined_call_operand.vmem [shape: bf16[500,50], index: 4, kind: input, shape index: {}]
  %s5 = inlined_call_operand.vmem [shape: f32[1,50], index: 5, kind: input, shape index: {}]
  %s6 = inlined_call_operand.vmem [shape: bf16[32,50], index: 6, kind: output, shape index: {}]
  %s7 = sld [smem:[#allocation0]]
  $region57: #{net_forward.4} parent=0
    _
  %s9 = ssub.s32 1, %s7
  %s10 = scalar_select 0, %s9, %s7
  loop: start=0, step=1, limit=4
  $region2: #{net_forward.4} parent=0 // loop_pre_header
    _
  $region3: #{net_forward.4} parent=0 // loop_header
    %s12 = sphi 0, %s16
    %p13 = scmp.ge.s32.totalorder %s12, 4
    %s22 = sphi 0, %s24
    %s25 = sphi 0, %s22
    %s26 = sphi 0, %s25
    %s42 = sphi 0, %s26
    %s48 = sphi 0, %s50
    %s51 = sphi 0, %s48
    %s52 = sphi 0, %s51
    %s68 = sphi 0, %s52
    %s74 = sphi 0, %s76
    %s77 = sphi 0, %s74
    %s78 = sphi 0, %s77
    %s94 = sphi 0, %s78
    %s100 = sphi 0, %s102
    %s103 = sphi 0, %s100
    %s104 = sphi 0, %s103
    %s120 = sphi 0, %s104
    %s124 = sphi 0, %s124
    %s126 = sphi 0, %s124
    %s127 = sphi 0, %s126
    %s141 = sphi 0, %s127
    %s145 = sphi 0, %s145
    %s147 = sphi 0, %s145
    %s148 = sphi 0, %s147
    %s162 = sphi 0, %s148
    %s168 = sphi 0, %s170
    %s171 = sphi 0, %s168
    %s172 = sphi 0, %s171
    %s188 = sphi 0, %s172
  $region4: #{net_forward.4} parent=0 // loop_header_branch
    %15 = sbr.rel (%p13) target = $region8
  $region5: #{net_forward.4} parent=0 // loop_body
    %s17 = ssub.s32 %s12, 1
    %s18 = ssub.s32 %s12, 2
    %s19 = sadd.s32 %s12, 1
    %s20 = ssub.s32 %s12, %s19
    %p21 = scmp.eq.s32.totalorder %s20, 0
    %s23 = sadd.s32 %s22, 1
    %s24 = scalar_select %p21, %s22, %s23
    %p27 = pneg %p21
    %p28 = scmp.eq.s32.totalorder %s12, 1
    %p29 = por %p27, %p28
    %p30 = scmp.ne.s32.totalorder %s22, %s25
    %p31 = scmp.eq.s32.totalorder %s12, 0
    %p32 = por %p30, %p31
    %p33 = scmp.ne.s32.totalorder %s22, %s25
    %p34 = scmp.eq.s32.totalorder %s17, 1
    %p35 = por %p33, %p34
    %p36 = scmp.ne.s32.totalorder %s25, %s26
    %p37 = scmp.eq.s32.totalorder %s17, 0
    %p38 = por %p36, %p37
    %p39 = scmp.ne.s32.totalorder %s25, %s26
    %p40 = scmp.eq.s32.totalorder %s18, 1
    %p41 = por %p39, %p40
    %p43 = scmp.ne.s32.totalorder %s26, %s42
    %p44 = scmp.eq.s32.totalorder %s18, 0
    %p45 = por %p43, %p44
    %s46 = ssub.s32 %s12, %s19
    %p47 = scmp.eq.s32.totalorder %s46, 0
    %s49 = sadd.s32 %s48, 1
    %s50 = scalar_select %p47, %s48, %s49
    %p53 = pneg %p47
    %p54 = scmp.eq.s32.totalorder %s12, 1
    %p55 = por %p53, %p54
    %p56 = scmp.ne.s32.totalorder %s48, %s51
    %p57 = scmp.eq.s32.totalorder %s12, 0
    %p58 = por %p56, %p57
    %p59 = scmp.ne.s32.totalorder %s48, %s51
    %p60 = scmp.eq.s32.totalorder %s17, 1
    %p61 = por %p59, %p60
    %p62 = scmp.ne.s32.totalorder %s51, %s52
    %p63 = scmp.eq.s32.totalorder %s17, 0
    %p64 = por %p62, %p63
    %p65 = scmp.ne.s32.totalorder %s51, %s52
    %p66 = scmp.eq.s32.totalorder %s18, 1
    %p67 = por %p65, %p66
    %p69 = scmp.ne.s32.totalorder %s52, %s68
    %p70 = scmp.eq.s32.totalorder %s18, 0
    %p71 = por %p69, %p70
    %s72 = ssub.s32 %s12, %s19
    %p73 = scmp.eq.s32.totalorder %s72, 0
    %s75 = sadd.s32 %s74, 1
    %s76 = scalar_select %p73, %s74, %s75
    %p79 = pneg %p73
    %p80 = scmp.eq.s32.totalorder %s12, 1
    %p81 = por %p79, %p80
    %p82 = scmp.ne.s32.totalorder %s74, %s77
    %p83 = scmp.eq.s32.totalorder %s12, 0
    %p84 = por %p82, %p83
    %p85 = scmp.ne.s32.totalorder %s74, %s77
    %p86 = scmp.eq.s32.totalorder %s17, 1
    %p87 = por %p85, %p86
    %p88 = scmp.ne.s32.totalorder %s77, %s78
    %p89 = scmp.eq.s32.totalorder %s17, 0
    %p90 = por %p88, %p89
    %p91 = scmp.ne.s32.totalorder %s77, %s78
    %p92 = scmp.eq.s32.totalorder %s18, 1
    %p93 = por %p91, %p92
    %p95 = scmp.ne.s32.totalorder %s78, %s94
    %p96 = scmp.eq.s32.totalorder %s18, 0
    %p97 = por %p95, %p96
    %s98 = ssub.s32 %s12, %s19
    %p99 = scmp.eq.s32.totalorder %s98, 0
    %s101 = sadd.s32 %s100, 1
    %s102 = scalar_select %p99, %s100, %s101
    %p105 = pneg %p99
    %p106 = scmp.eq.s32.totalorder %s12, 1
    %p107 = por %p105, %p106
    %p108 = scmp.ne.s32.totalorder %s100, %s103
    %p109 = scmp.eq.s32.totalorder %s12, 0
    %p110 = por %p108, %p109
    %p111 = scmp.ne.s32.totalorder %s100, %s103
    %p112 = scmp.eq.s32.totalorder %s17, 1
    %p113 = por %p111, %p112
    %p114 = scmp.ne.s32.totalorder %s103, %s104
    %p115 = scmp.eq.s32.totalorder %s17, 0
    %p116 = por %p114, %p115
    %p117 = scmp.ne.s32.totalorder %s103, %s104
    %p118 = scmp.eq.s32.totalorder %s18, 1
    %p119 = por %p117, %p118
    %p121 = scmp.ne.s32.totalorder %s104, %s120
    %p122 = scmp.eq.s32.totalorder %s18, 0
    %p123 = por %p121, %p122
    %s125 = sadd.s32 %s124, 1
    %p128 = scmp.eq.s32.totalorder %s12, 1
    %p129 = scmp.ne.s32.totalorder %s124, %s126
    %p130 = scmp.eq.s32.totalorder %s12, 0
    %p131 = por %p129, %p130
    %p132 = scmp.ne.s32.totalorder %s124, %s126
    %p133 = scmp.eq.s32.totalorder %s17, 1
    %p134 = por %p132, %p133
    %p135 = scmp.ne.s32.totalorder %s126, %s127
    %p136 = scmp.eq.s32.totalorder %s17, 0
    %p137 = por %p135, %p136
    %p138 = scmp.ne.s32.totalorder %s126, %s127
    %p139 = scmp.eq.s32.totalorder %s18, 1
    %p140 = por %p138, %p139
    %p142 = scmp.ne.s32.totalorder %s127, %s141
    %p143 = scmp.eq.s32.totalorder %s18, 0
    %p144 = por %p142, %p143
    %s146 = sadd.s32 %s145, 1
    %p149 = scmp.eq.s32.totalorder %s12, 1
    %p150 = scmp.ne.s32.totalorder %s145, %s147
    %p151 = scmp.eq.s32.totalorder %s12, 0
    %p152 = por %p150, %p151
    %p153 = scmp.ne.s32.totalorder %s145, %s147
    %p154 = scmp.eq.s32.totalorder %s17, 1
    %p155 = por %p153, %p154
    %p156 = scmp.ne.s32.totalorder %s147, %s148
    %p157 = scmp.eq.s32.totalorder %s17, 0
    %p158 = por %p156, %p157
    %p159 = scmp.ne.s32.totalorder %s147, %s148
    %p160 = scmp.eq.s32.totalorder %s18, 1
    %p161 = por %p159, %p160
    %p163 = scmp.ne.s32.totalorder %s148, %s162
    %p164 = scmp.eq.s32.totalorder %s18, 0
    %p165 = por %p163, %p164
    %s166 = ssub.s32 %s12, %s19
    %p167 = scmp.eq.s32.totalorder %s166, 0
    %s169 = sadd.s32 %s168, 1
    %s170 = scalar_select %p167, %s168, %s169
    %p173 = pneg %p167
    %p174 = scmp.eq.s32.totalorder %s12, 1
    %p175 = por %p173, %p174
    %p176 = scmp.ne.s32.totalorder %s168, %s171
    %p177 = scmp.eq.s32.totalorder %s12, 0
    %p178 = por %p176, %p177
    %p179 = scmp.ne.s32.totalorder %s168, %s171
    %p180 = scmp.eq.s32.totalorder %s17, 1
    %p181 = por %p179, %p180
    %p182 = scmp.ne.s32.totalorder %s171, %s172
    %p183 = scmp.eq.s32.totalorder %s17, 0
    %p184 = por %p182, %p183
    %p185 = scmp.ne.s32.totalorder %s171, %s172
    %p186 = scmp.eq.s32.totalorder %s18, 1
    %p187 = por %p185, %p186
    %p189 = scmp.ne.s32.totalorder %s172, %s188
    %p190 = scmp.eq.s32.totalorder %s18, 0
    %p191 = por %p189, %p190
    %p192 = scmp.le.s32.totalorder 1, %s12
    %p193 = scmp.lt.s32.totalorder %s12, 3
    %p194 = pnand %p192, %p193
    %p195 = pneg %p194
    // Predicated region
    $region9: #{net_forward.4} parent=5 // pred_check
      _
    $region10: #{net_forward.4} parent=5 // pred_check_branch
      %197 = sbr.rel (%p194) target = $region12
    $region11: #{net_forward.4} parent=5 // pred_region
      %s198 = ssub.s32 %s12, 1
      // Predicated region
      $region13: #{net_forward.4} parent=11 // pred_check
        %p199 = pneg %p137
      $region14: #{net_forward.4} parent=11 // pred_check_branch
        %201 = sbr.rel (%p199) target = $region16
      $region15: #{net_forward.4} parent=11 // pred_region
        _
      $region16: #{net_forward.4} parent=11 // pred_fallthru
        _
      // Predicated region
      $region17: #{net_forward.4} parent=11 // pred_check
        %p202 = pneg %p158
      $region18: #{net_forward.4} parent=11 // pred_check_branch
        %204 = sbr.rel (%p202) target = $region20
      $region19: #{net_forward.4} parent=11 // pred_region
        _
      $region20: #{net_forward.4} parent=11 // pred_fallthru
        _
    $region12: #{net_forward.4} parent=5 // pred_fallthru
      _
    %p205 = scmp.lt.s32.totalorder %s12, 2
    // Predicated region
    $region21: #{net_forward.4} parent=5 // pred_check
      %p206 = pneg %p205
    $region22: #{net_forward.4} parent=5 // pred_check_branch
      %208 = sbr.rel (%p206) target = $region24
    $region23: #{net_forward.4} parent=5 // pred_region
      // Predicated region
      $region25: #{net_forward.4} parent=23 // pred_check
        %p209 = pneg %p32
      $region26: #{net_forward.4} parent=23 // pred_check_branch
        %211 = sbr.rel (%p209) target = $region28
      $region27: #{net_forward.4} parent=23 // pred_region
        %s212 = smul.u32 2, %s12
        %p213 = scmp.lt.s32.totalorder %s212, 3
        %s214 = scalar_select %p213, %s212, 3
        %s215 = smul.addr %s214, 4
        %s216 = smul.addr %s215, 4
        %s217 = scalar_lea.vmem %s0, %s216
        %s218 = smul.u32 2, %s12
      $region28: #{net_forward.4} parent=23 // pred_fallthru
        _
      // Predicated region
      $region29: #{net_forward.4} parent=23 // pred_check
        %p219 = pneg %p58
      $region30: #{net_forward.4} parent=23 // pred_check_branch
        %221 = sbr.rel (%p219) target = $region32
      $region31: #{net_forward.4} parent=23 // pred_region
        %s222 = smul.u32 2, %s12
        %p223 = scmp.lt.s32.totalorder %s222, 3
        %s224 = scalar_select %p223, %s222, 3
        %s225 = smul.addr %s224, 4
        %s226 = smul.addr %s225, 4
        %s227 = scalar_lea.vmem %s1, %s226
        %s228 = smul.u32 2, %s12
      $region32: #{net_forward.4} parent=23 // pred_fallthru
        _
      // Predicated region
      $region33: #{net_forward.4} parent=23 // pred_check
        %p229 = pneg %p84
      $region34: #{net_forward.4} parent=23 // pred_check_branch
        %231 = sbr.rel (%p229) target = $region36
      $region35: #{net_forward.4} parent=23 // pred_region
        %s232 = smul.u32 2, %s12
        %p233 = scmp.lt.s32.totalorder %s232, 3
        %s234 = scalar_select %p233, %s232, 3
        %s235 = smul.addr %s234, 4
        %s236 = smul.addr %s235, 4
        %s237 = scalar_lea.vmem %s2, %s236
        %s238 = smul.u32 2, %s12
      $region36: #{net_forward.4} parent=23 // pred_fallthru
        _
      // Predicated region
      $region37: #{net_forward.4} parent=23 // pred_check
        %p239 = pneg %p110
      $region38: #{net_forward.4} parent=23 // pred_check_branch
        %241 = sbr.rel (%p239) target = $region40
      $region39: #{net_forward.4} parent=23 // pred_region
        %s242 = smul.u32 2, %s12
        %p243 = scmp.lt.s32.totalorder %s242, 3
        %s244 = scalar_select %p243, %s242, 3
        %s245 = smul.addr %s244, 4
        %s246 = smul.addr %s245, 4
        %s247 = scalar_lea.vmem %s3, %s246
        %s248 = smul.u32 2, %s12
      $region40: #{net_forward.4} parent=23 // pred_fallthru
        _
    $region24: #{net_forward.4} parent=5 // pred_fallthru
      _
    %p249 = scmp.le.s32.totalorder 1, %s12
    %p250 = scmp.lt.s32.totalorder %s12, 3
    %p251 = pnand %p249, %p250
    %p252 = pneg %p251
    // Predicated region
    $region41: #{net_forward.4} parent=5 // pred_check
      _
    $region42: #{net_forward.4} parent=5 // pred_check_branch
      %254 = sbr.rel (%p251) target = $region44
    $region43: #{net_forward.4} parent=5 // pred_region
      %s255 = ssub.s32 %s12, 1
      %s256 = smul.u32 2, %s17
      %p257 = scmp.lt.s32.totalorder %s256, 3
      %s258 = scalar_select %p257, %s256, 3
      %s259 = smul.addr %s258, 4
      %s260 = smul.addr %s259, 4
      %s261 = scalar_lea.vmem %s0, %s260
      %p262 = pneg %p38
      %p263 = pneg %p35
      %s264 = smul.u32 2, %s17
      %p265 = scmp.lt.s32.totalorder %s264, 3
      %s266 = scalar_select %p265, %s264, 3
      %s267 = smul.addr %s266, 4
      %s268 = smul.addr %s267, 4
      %s269 = scalar_lea.vmem %s1, %s268
      %p270 = pneg %p64
      %p271 = pneg %p61
      %s272 = smul.u32 2, %s17
      %p273 = scmp.lt.s32.totalorder %s272, 3
      %s274 = scalar_select %p273, %s272, 3
      %s275 = smul.addr %s274, 4
      %s276 = smul.addr %s275, 4
      %s277 = scalar_lea.vmem %s2, %s276
      %p278 = pneg %p90
      %p279 = pneg %p87
      %s280 = smul.u32 2, %s17
      %p281 = scmp.lt.s32.totalorder %s280, 3
      %s282 = scalar_select %p281, %s280, 3
      %s283 = smul.addr %s282, 4
      %s284 = smul.addr %s283, 4
      %s285 = scalar_lea.vmem %s3, %s284
      %p286 = pneg %p116
      %p287 = pneg %p113
      %p288 = pneg %p137
      %p289 = pneg %p134
      %p290 = pneg %p158
      %p291 = pneg %p155
      %p292 = pneg %p184
      %p293 = pneg %p181
      %s294 = smul.u32 2, %s17
      %p295 = scmp.lt.s32.totalorder %s294, 3
      %s296 = scalar_select %p295, %s294, 3
      %s297 = smul.addr %s296, 4
      %s298 = scalar_lea.vmem %s6, %s297
      %s299 = smul.u32 2, %s17
      %p300 = scmp.lt.s32.totalorder %s299, 3
      %s301 = scalar_select %p300, %s299, 3
      %s302 = smul.addr %s301, 4
      %s303 = smul.addr %s302, 4
      %s304 = scalar_lea.vmem %s0, %s303
      %s305 = smul.u32 2, %s17
      %s306 = smul.u32 2, %s17
      %p307 = scmp.lt.s32.totalorder %s306, 3
      %s308 = scalar_select %p307, %s306, 3
      %s309 = smul.addr %s308, 4
      %s310 = smul.addr %s309, 4
      %s311 = scalar_lea.vmem %s1, %s310
      %s312 = smul.u32 2, %s17
      %s313 = smul.u32 2, %s17
      %p314 = scmp.lt.s32.totalorder %s313, 3
      %s315 = scalar_select %p314, %s313, 3
      %s316 = smul.addr %s315, 4
      %s317 = smul.addr %s316, 4
      %s318 = scalar_lea.vmem %s2, %s317
      %s319 = smul.u32 2, %s17
      %s320 = smul.u32 2, %s17
      %p321 = scmp.lt.s32.totalorder %s320, 3
      %s322 = scalar_select %p321, %s320, 3
      %s323 = smul.addr %s322, 4
      %s324 = smul.addr %s323, 4
      %s325 = scalar_lea.vmem %s3, %s324
      %s326 = smul.u32 2, %s17
      %s327 = smul.u32 2, %s17
      %p328 = scmp.lt.s32.totalorder %s327, 3
      %s329 = scalar_select %p328, %s327, 3
      %s330 = smul.addr %s329, 4
      %s331 = scalar_lea.vmem %s6, %s330
      %s332 = smul.u32 2, %s17
      %v334 = vld [vmem:[%s4] sm:$0xf]
      %v335 = vld [vmem:[%s4 + $0x4] sm:$0xf]
      %v336 = vld [vmem:[%s4 + $0x8] sm:$0xf]
      %v337 = vld [vmem:[%s4 + $0xc] sm:$0xf]
      %v338 = vld [vmem:[%s4 + $0x10] sm:$0xf]
      %v339 = vld [vmem:[%s4 + $0x14] sm:$0xf]
      %v340 = vld [vmem:[%s4 + $0x18] sm:$0xf]
      %v341 = vld [vmem:[%s4 + $0x1c] sm:$0xf]
      %v342 = vld [vmem:[%s4 + $0x20] sm:$0xf]
      %v343 = vld [vmem:[%s4 + $0x24] sm:$0xf]
      %v344 = vld [vmem:[%s4 + $0x28] sm:$0xf]
      %v345 = vld [vmem:[%s4 + $0x2c] sm:$0xf]
      %v346 = vld [vmem:[%s4 + $0x30] sm:$0xf]
      %v347 = vld [vmem:[%s4 + $0x34] sm:$0xf]
      %v348 = vld [vmem:[%s4 + $0x38] sm:$0xf]
      %v349 = vld [vmem:[%s4 + $0x3c] sm:$0xf]
      %v350 = vld [vmem:[%s4 + $0x40] sm:$0xf]
      %v351 = vld [vmem:[%s4 + $0x44] sm:$0xf]
      %v352 = vld [vmem:[%s4 + $0x48] sm:$0xf]
      %v353 = vld [vmem:[%s4 + $0x4c] sm:$0xf]
      %v354 = vld [vmem:[%s4 + $0x50] sm:$0xf]
      %v355 = vld [vmem:[%s4 + $0x54] sm:$0xf]
      %v356 = vld [vmem:[%s4 + $0x58] sm:$0xf]
      %v357 = vld [vmem:[%s4 + $0x5c] sm:$0xf]
      %v358 = vld [vmem:[%s4 + $0x60] sm:$0xf]
      %v359 = vld [vmem:[%s4 + $0x64] sm:$0xf]
      %v360 = vld [vmem:[%s4 + $0x68] sm:$0xf]
      %v361 = vld [vmem:[%s4 + $0x6c] sm:$0xf]
      %v362 = vld [vmem:[%s4 + $0x70] sm:$0xf]
      %v363 = vld [vmem:[%s4 + $0x74] sm:$0xf]
      %v364 = vld [vmem:[%s4 + $0x78] sm:$0xf]
      %v365 = vld [vmem:[%s4 + $0x7c] sm:$0xf]
      %v366 = vld [vmem:[%s4 + $0x80] sm:$0xf]
      %v367 = vld [vmem:[%s4 + $0x84] sm:$0xf]
      %v368 = vld [vmem:[%s4 + $0x88] sm:$0xf]
      %v369 = vld [vmem:[%s4 + $0x8c] sm:$0xf]
      %v370 = vld [vmem:[%s4 + $0x90] sm:$0xf]
      %v371 = vld [vmem:[%s4 + $0x94] sm:$0xf]
      %v372 = vld [vmem:[%s4 + $0x98] sm:$0xf]
      %v373 = vld [vmem:[%s4 + $0x9c] sm:$0xf]
      %v374 = vld [vmem:[%s4 + $0xa0] sm:$0xf]
      %v375 = vld [vmem:[%s4 + $0xa4] sm:$0xf]
      %v376 = vld [vmem:[%s4 + $0xa8] sm:$0xf]
      %v377 = vld [vmem:[%s4 + $0xac] sm:$0xf]
      %v378 = vld [vmem:[%s4 + $0xb0] sm:$0xf]
      %v379 = vld [vmem:[%s4 + $0xb4] sm:$0xf]
      %v380 = vld [vmem:[%s4 + $0xb8] sm:$0xf]
      %v381 = vld [vmem:[%s4 + $0xbc] sm:$0xf]
      %v382 = vld [vmem:[%s4 + $0xc0] sm:$0xf]
      %v383 = vld [vmem:[%s4 + $0xc4] sm:$0xf]
      %v384 = vld [vmem:[%s4 + $0xc8] sm:$0xf]
      %v385 = vld [vmem:[%s4 + $0xcc] sm:$0xf]
      %v386 = vld [vmem:[%s4 + $0xd0] sm:$0xf]
      %v387 = vld [vmem:[%s4 + $0xd4] sm:$0xf]
      %v388 = vld [vmem:[%s4 + $0xd8] sm:$0xf]
      %v389 = vld [vmem:[%s4 + $0xdc] sm:$0xf]
      %v390 = vld [vmem:[%s4 + $0xe0] sm:$0xf]
      %v391 = vld [vmem:[%s4 + $0xe4] sm:$0xf]
      %v392 = vld [vmem:[%s4 + $0xe8] sm:$0xf]
      %v393 = vld [vmem:[%s4 + $0xec] sm:$0xf]
      %v394 = vld [vmem:[%s4 + $0xf0] sm:$0xf]
      %v395 = vld [vmem:[%s4 + $0xf4] sm:$0xf]
      %v396 = vld [vmem:[%s4 + $0xf8] sm:$0x3]
      %v397 = vld [vmem:[%s304] sm:$0xff]
      %v398 = vld [vmem:[%s304 + $0x8] sm:$0xff]
      %v399 = vld [vmem:[%s304 + $0x10] sm:$0xff]
      %v400 = vld [vmem:[%s304 + $0x18] sm:$0xff]
      %v405 = vunpack.c.l.b16 %v397
      %v406 = vunpack.c.h.b16 %v397
      %v407 = vunpack.c.l.b16 %v398
      %v408 = vunpack.c.h.b16 %v398
      %v409 = vunpack.c.l.b16 %v399
      %v410 = vunpack.c.h.b16 %v399
      %v411 = vunpack.c.l.b16 %v400
      %v412 = vunpack.c.h.b16 %v400
      %v413 = vpack.c.b16 %v409, %v405
      %v414 = vpack.c.b16 %v410, %v406
      %v415 = vpack.c.b16 %v411, %v407
      %v416 = vpack.c.b16 %v412, %v408
      %v483 = vunpack.c.l.b16 %v334
      %v484 = vunpack.c.l.b16 %v335
      %v485 = vunpack.c.l.b16 %v336
      %v486 = vunpack.c.l.b16 %v337
      %v487 = vunpack.c.l.b16 %v338
      %v488 = vunpack.c.l.b16 %v339
      %v489 = vunpack.c.l.b16 %v340
      %v490 = vunpack.c.l.b16 %v341
      %v491 = vunpack.c.l.b16 %v342
      %v492 = vunpack.c.l.b16 %v343
      %v493 = vunpack.c.l.b16 %v344
      %v494 = vunpack.c.l.b16 %v345
      %v495 = vunpack.c.l.b16 %v346
      %v496 = vunpack.c.l.b16 %v347
      %v497 = vunpack.c.l.b16 %v348
      %v498 = vunpack.c.l.b16 %v349
      %v499 = vunpack.c.l.b16 %v350
      %v500 = vunpack.c.l.b16 %v351
      %v501 = vunpack.c.l.b16 %v352
      %v502 = vunpack.c.l.b16 %v353
      %v503 = vunpack.c.l.b16 %v354
      %v504 = vunpack.c.l.b16 %v355
      %v505 = vunpack.c.l.b16 %v356
      %v506 = vunpack.c.l.b16 %v357
      %v507 = vunpack.c.l.b16 %v358
      %v508 = vunpack.c.l.b16 %v359
      %v509 = vunpack.c.l.b16 %v360
      %v510 = vunpack.c.l.b16 %v361
      %v511 = vunpack.c.l.b16 %v362
      %v512 = vunpack.c.l.b16 %v363
      %v513 = vunpack.c.l.b16 %v364
      %v514 = vunpack.c.l.b16 %v365
      %v515 = vunpack.c.l.b16 %v366
      %v516 = vunpack.c.l.b16 %v367
      %v517 = vunpack.c.l.b16 %v368
      %v518 = vunpack.c.l.b16 %v369
      %v519 = vunpack.c.l.b16 %v370
      %v520 = vunpack.c.l.b16 %v371
      %v521 = vunpack.c.l.b16 %v372
      %v522 = vunpack.c.l.b16 %v373
      %v523 = vunpack.c.l.b16 %v374
      %v524 = vunpack.c.l.b16 %v375
      %v525 = vunpack.c.l.b16 %v376
      %v526 = vunpack.c.l.b16 %v377
      %v527 = vunpack.c.l.b16 %v378
      %v528 = vunpack.c.l.b16 %v379
      %v529 = vunpack.c.l.b16 %v380
      %v530 = vunpack.c.l.b16 %v381
      %v531 = vunpack.c.l.b16 %v382
      %v532 = vunpack.c.l.b16 %v383
      %v533 = vunpack.c.l.b16 %v384
      %v534 = vunpack.c.l.b16 %v385
      %v535 = vunpack.c.l.b16 %v386
      %v536 = vunpack.c.l.b16 %v387
      %v537 = vunpack.c.l.b16 %v388
      %v538 = vunpack.c.l.b16 %v389
      %v539 = vunpack.c.l.b16 %v390
      %v540 = vunpack.c.l.b16 %v391
      %v541 = vunpack.c.l.b16 %v392
      %v542 = vunpack.c.l.b16 %v393
      %v543 = vunpack.c.l.b16 %v394
      %v544 = vunpack.c.l.b16 %v395
      %v545 = vunpack.c.l.b16 %v396
      %v546 = vpack.c.b16 %v484, %v483
      %v547 = vpack.c.b16 %v486, %v485
      %v548 = vpack.c.b16 %v488, %v487
      %v549 = vpack.c.b16 %v490, %v489
      %v550 = vpack.c.b16 %v492, %v491
      %v551 = vpack.c.b16 %v494, %v493
      %v552 = vpack.c.b16 %v496, %v495
      %v553 = vpack.c.b16 %v498, %v497
      %v554 = vpack.c.b16 %v500, %v499
      %v555 = vpack.c.b16 %v502, %v501
      %v556 = vpack.c.b16 %v504, %v503
      %v557 = vpack.c.b16 %v506, %v505
      %v558 = vpack.c.b16 %v508, %v507
      %v559 = vpack.c.b16 %v510, %v509
      %v560 = vpack.c.b16 %v512, %v511
      %v561 = vpack.c.b16 %v514, %v513
      %v562 = vpack.c.b16 %v516, %v515
      %v563 = vpack.c.b16 %v518, %v517
      %v564 = vpack.c.b16 %v520, %v519
      %v565 = vpack.c.b16 %v522, %v521
      %v566 = vpack.c.b16 %v524, %v523
      %v567 = vpack.c.b16 %v526, %v525
      %v568 = vpack.c.b16 %v528, %v527
      %v569 = vpack.c.b16 %v530, %v529
      %v570 = vpack.c.b16 %v532, %v531
      %v571 = vpack.c.b16 %v534, %v533
      %v572 = vpack.c.b16 %v536, %v535
      %v573 = vpack.c.b16 %v538, %v537
      %v574 = vpack.c.b16 %v540, %v539
      %v575 = vpack.c.b16 %v542, %v541
      %v576 = vpack.c.b16 %v544, %v543
      %v577 = vpack.c.b16 %v545, %v545
      %vm609 = vcmask 949248
      %v611 = vsel %vm609, %v416, 0
      %vm613 = vcmask 1041408
      %v615 = vsel %vm613, %v577, 0
      %617 = vmatprep.subr.bf16.mxu0 0
      %618 = vmatpush1.bf16.msra.mxu0 %v546
      %619 = vmatprep.subr.bf16.mxu0 0
      %620 = vmatpush1.bf16.msra.mxu0 %v547
      %621 = vmatprep.subr.bf16.mxu0 0
      %622 = vmatpush1.bf16.msra.mxu0 %v548
      %623 = vmatprep.subr.bf16.mxu0 0
      %624 = vmatpush1.bf16.msra.mxu0 %v549
      %625 = vmatprep.subr.bf16.mxu0 0
      %626 = vmatpush1.bf16.msra.mxu0 %v550
      %627 = vmatprep.subr.bf16.mxu0 0
      %628 = vmatpush1.bf16.msra.mxu0 %v551
      %629 = vmatprep.subr.bf16.mxu0 0
      %630 = vmatpush1.bf16.msra.mxu0 %v552
      %631 = vmatprep.subr.bf16.mxu0 0
      %632 = vmatpush1.bf16.msra.mxu0 %v553
      %633 = vmatprep.subr.bf16.mxu0 0
      %634 = vmatpush1.bf16.msra.mxu0 %v554
      %635 = vmatprep.subr.bf16.mxu0 0
      %636 = vmatpush1.bf16.msra.mxu0 %v555
      %637 = vmatprep.subr.bf16.mxu0 0
      %638 = vmatpush1.bf16.msra.mxu0 %v556
      %639 = vmatprep.subr.bf16.mxu0 0
      %640 = vmatpush1.bf16.msra.mxu0 %v557
      %641 = vmatprep.subr.bf16.mxu0 0
      %642 = vmatpush1.bf16.msra.mxu0 %v558
      %643 = vmatprep.subr.bf16.mxu0 0
      %644 = vmatpush1.bf16.msra.mxu0 %v559
      %645 = vmatprep.subr.bf16.mxu0 0
      %646 = vmatpush1.bf16.msra.mxu0 %v560
      %647 = vmatprep.subr.bf16.mxu0 0
      %648 = vmatpush1.bf16.msra.mxu0 %v561
      %649 = vmatprep.mubr.bf16.mxu0 %v414
      %650 = vmatmul.mubr.bf16.gmra.mrb[0].mxu0 %v413
      %v651 = vpop.f32.mrb[0].mxu0
      %v652 = vadd.f32 0.0, %v651
      %v653 = vpop.f32.mrb[0].mxu0
      %v654 = vpop.f32.mrb[0].mxu0
      %v655 = vadd.f32 0.0, %v654
      %v656 = vpop.f32.mrb[0].mxu0
      %657 = vdwg.mxu0
      %658 = vmatprep.subr.bf16.mxu0 0
      %659 = vmatpush1.bf16.msra.mxu0 %v562
      %660 = vmatprep.subr.bf16.mxu0 0
      %661 = vmatpush1.bf16.msra.mxu0 %v563
      %662 = vmatprep.subr.bf16.mxu0 0
      %663 = vmatpush1.bf16.msra.mxu0 %v564
      %664 = vmatprep.subr.bf16.mxu0 0
      %665 = vmatpush1.bf16.msra.mxu0 %v565
      %666 = vmatprep.subr.bf16.mxu0 0
      %667 = vmatpush1.bf16.msra.mxu0 %v566
      %668 = vmatprep.subr.bf16.mxu0 0
      %669 = vmatpush1.bf16.msra.mxu0 %v567
      %670 = vmatprep.subr.bf16.mxu0 0
      %671 = vmatpush1.bf16.msra.mxu0 %v568
      %672 = vmatprep.subr.bf16.mxu0 0
      %673 = vmatpush1.bf16.msra.mxu0 %v569
      %674 = vmatprep.subr.bf16.mxu0 0
      %675 = vmatpush1.bf16.msra.mxu0 %v570
      %676 = vmatprep.subr.bf16.mxu0 0
      %677 = vmatpush1.bf16.msra.mxu0 %v571
      %678 = vmatprep.subr.bf16.mxu0 0
      %679 = vmatpush1.bf16.msra.mxu0 %v572
      %680 = vmatprep.subr.bf16.mxu0 0
      %681 = vmatpush1.bf16.msra.mxu0 %v573
      %682 = vmatprep.subr.bf16.mxu0 0
      %683 = vmatpush1.bf16.msra.mxu0 %v574
      %684 = vmatprep.subr.bf16.mxu0 0
      %685 = vmatpush1.bf16.msra.mxu0 %v575
      %686 = vmatprep.subr.bf16.mxu0 0
      %687 = vmatpush1.bf16.msra.mxu0 %v576
      %688 = vmatprep.subr.bf16.mxu0 0
      %689 = vmatpush1.bf16.msra.mxu0 %v615
      %690 = vmatprep.mubr.bf16.mxu0 %v611
      %691 = vmatmul.mubr.bf16.gmra.mrb[0].mxu0 %v415
      %v692 = vpop.f32.mrb[0].mxu0
      %v693 = vadd.f32 %v652, %v692
      %v694 = vpop.f32.mrb[0].mxu0
      %v695 = vpop.f32.mrb[0].mxu0
      %v696 = vadd.f32 %v655, %v695
      %v697 = vpop.f32.mrb[0].mxu0
      %698 = vdwg.mxu0
      %v699 = vld [vmem:[%s311] sm:$0xff]
      %v700 = vld [vmem:[%s311 + $0x8] sm:$0xff]
      %v701 = vld [vmem:[%s311 + $0x10] sm:$0xff]
      %v702 = vld [vmem:[%s311 + $0x18] sm:$0xff]
      %v707 = vunpack.c.l.b16 %v699
      %v708 = vunpack.c.h.b16 %v699
      %v709 = vunpack.c.l.b16 %v700
      %v710 = vunpack.c.h.b16 %v700
      %v711 = vunpack.c.l.b16 %v701
      %v712 = vunpack.c.h.b16 %v701
      %v713 = vunpack.c.l.b16 %v702
      %v714 = vunpack.c.h.b16 %v702
      %v715 = vpack.c.b16 %v711, %v707
      %v716 = vpack.c.b16 %v712, %v708
      %v717 = vpack.c.b16 %v713, %v709
      %v718 = vpack.c.b16 %v714, %v710
      %v723 = vsel %vm609, %v718, 0
      %725 = vmatprep.subr.bf16.mxu0 0
      %726 = vmatpush1.bf16.msra.mxu0 %v546
      %727 = vmatprep.subr.bf16.mxu0 0
      %728 = vmatpush1.bf16.msra.mxu0 %v547
      %729 = vmatprep.subr.bf16.mxu0 0
      %730 = vmatpush1.bf16.msra.mxu0 %v548
      %731 = vmatprep.subr.bf16.mxu0 0
      %732 = vmatpush1.bf16.msra.mxu0 %v549
      %733 = vmatprep.subr.bf16.mxu0 0
      %734 = vmatpush1.bf16.msra.mxu0 %v550
      %735 = vmatprep.subr.bf16.mxu0 0
      %736 = vmatpush1.bf16.msra.mxu0 %v551
      %737 = vmatprep.subr.bf16.mxu0 0
      %738 = vmatpush1.bf16.msra.mxu0 %v552
      %739 = vmatprep.subr.bf16.mxu0 0
      %740 = vmatpush1.bf16.msra.mxu0 %v553
      %741 = vmatprep.subr.bf16.mxu0 0
      %742 = vmatpush1.bf16.msra.mxu0 %v554
      %743 = vmatprep.subr.bf16.mxu0 0
      %744 = vmatpush1.bf16.msra.mxu0 %v555
      %745 = vmatprep.subr.bf16.mxu0 0
      %746 = vmatpush1.bf16.msra.mxu0 %v556
      %747 = vmatprep.subr.bf16.mxu0 0
      %748 = vmatpush1.bf16.msra.mxu0 %v557
      %749 = vmatprep.subr.bf16.mxu0 0
      %750 = vmatpush1.bf16.msra.mxu0 %v558
      %751 = vmatprep.subr.bf16.mxu0 0
      %752 = vmatpush1.bf16.msra.mxu0 %v559
      %753 = vmatprep.subr.bf16.mxu0 0
      %754 = vmatpush1.bf16.msra.mxu0 %v560
      %755 = vmatprep.subr.bf16.mxu0 0
      %756 = vmatpush1.bf16.msra.mxu0 %v561
      %757 = vmatprep.mubr.bf16.mxu0 %v716
      %758 = vmatmul.mubr.bf16.gmra.mrb[0].mxu0 %v715
      %v759 = vpop.f32.mrb[0].mxu0
      %v760 = vadd.f32 0.0, %v759
      %v761 = vpop.f32.mrb[0].mxu0
      %v762 = vpop.f32.mrb[0].mxu0
      %v763 = vadd.f32 0.0, %v762
      %v764 = vpop.f32.mrb[0].mxu0
      %765 = vdwg.mxu0
      %766 = vmatprep.subr.bf16.mxu0 0
      %767 = vmatpush1.bf16.msra.mxu0 %v562
      %768 = vmatprep.subr.bf16.mxu0 0
      %769 = vmatpush1.bf16.msra.mxu0 %v563
      %770 = vmatprep.subr.bf16.mxu0 0
      %771 = vmatpush1.bf16.msra.mxu0 %v564
      %772 = vmatprep.subr.bf16.mxu0 0
      %773 = vmatpush1.bf16.msra.mxu0 %v565
      %774 = vmatprep.subr.bf16.mxu0 0
      %775 = vmatpush1.bf16.msra.mxu0 %v566
      %776 = vmatprep.subr.bf16.mxu0 0
      %777 = vmatpush1.bf16.msra.mxu0 %v567
      %778 = vmatprep.subr.bf16.mxu0 0
      %779 = vmatpush1.bf16.msra.mxu0 %v568
      %780 = vmatprep.subr.bf16.mxu0 0
      %781 = vmatpush1.bf16.msra.mxu0 %v569
      %782 = vmatprep.subr.bf16.mxu0 0
      %783 = vmatpush1.bf16.msra.mxu0 %v570
      %784 = vmatprep.subr.bf16.mxu0 0
      %785 = vmatpush1.bf16.msra.mxu0 %v571
      %786 = vmatprep.subr.bf16.mxu0 0
      %787 = vmatpush1.bf16.msra.mxu0 %v572
      %788 = vmatprep.subr.bf16.mxu0 0
      %789 = vmatpush1.bf16.msra.mxu0 %v573
      %790 = vmatprep.subr.bf16.mxu0 0
      %791 = vmatpush1.bf16.msra.mxu0 %v574
      %792 = vmatprep.subr.bf16.mxu0 0
      %793 = vmatpush1.bf16.msra.mxu0 %v575
      %794 = vmatprep.subr.bf16.mxu0 0
      %795 = vmatpush1.bf16.msra.mxu0 %v576
      %796 = vmatprep.subr.bf16.mxu0 0
      %797 = vmatpush1.bf16.msra.mxu0 %v615
      %798 = vmatprep.mubr.bf16.mxu0 %v723
      %799 = vmatmul.mubr.bf16.gmra.mrb[0].mxu0 %v717
      %v800 = vpop.f32.mrb[0].mxu0
      %v801 = vadd.f32 %v760, %v800
      %v802 = vpop.f32.mrb[0].mxu0
      %v803 = vpop.f32.mrb[0].mxu0
      %v804 = vadd.f32 %v763, %v803
      %v805 = vpop.f32.mrb[0].mxu0
      %806 = vdwg.mxu0
      %v807 = vld [vmem:[%s318] sm:$0xff]
      %v808 = vld [vmem:[%s318 + $0x8] sm:$0xff]
      %v809 = vld [vmem:[%s318 + $0x10] sm:$0xff]
      %v810 = vld [vmem:[%s318 + $0x18] sm:$0xff]
      %v815 = vunpack.c.l.b16 %v807
      %v816 = vunpack.c.h.b16 %v807
      %v817 = vunpack.c.l.b16 %v808
      %v818 = vunpack.c.h.b16 %v808
      %v819 = vunpack.c.l.b16 %v809
      %v820 = vunpack.c.h.b16 %v809
      %v821 = vunpack.c.l.b16 %v810
      %v822 = vunpack.c.h.b16 %v810
      %v823 = vpack.c.b16 %v819, %v815
      %v824 = vpack.c.b16 %v820, %v816
      %v825 = vpack.c.b16 %v821, %v817
      %v826 = vpack.c.b16 %v822, %v818
      %v831 = vsel %vm609, %v826, 0
      %833 = vmatprep.subr.bf16.mxu0 0
      %834 = vmatpush1.bf16.msra.mxu0 %v546
      %835 = vmatprep.subr.bf16.mxu0 0
      %836 = vmatpush1.bf16.msra.mxu0 %v547
      %837 = vmatprep.subr.bf16.mxu0 0
      %838 = vmatpush1.bf16.msra.mxu0 %v548
      %839 = vmatprep.subr.bf16.mxu0 0
      %840 = vmatpush1.bf16.msra.mxu0 %v549
      %841 = vmatprep.subr.bf16.mxu0 0
      %842 = vmatpush1.bf16.msra.mxu0 %v550
      %843 = vmatprep.subr.bf16.mxu0 0
      %844 = vmatpush1.bf16.msra.mxu0 %v551
      %845 = vmatprep.subr.bf16.mxu0 0
      %846 = vmatpush1.bf16.msra.mxu0 %v552
      %847 = vmatprep.subr.bf16.mxu0 0
      %848 = vmatpush1.bf16.msra.mxu0 %v553
      %849 = vmatprep.subr.bf16.mxu0 0
      %850 = vmatpush1.bf16.msra.mxu0 %v554
      %851 = vmatprep.subr.bf16.mxu0 0
      %852 = vmatpush1.bf16.msra.mxu0 %v555
      %853 = vmatprep.subr.bf16.mxu0 0
      %854 = vmatpush1.bf16.msra.mxu0 %v556
      %855 = vmatprep.subr.bf16.mxu0 0
      %856 = vmatpush1.bf16.msra.mxu0 %v557
      %857 = vmatprep.subr.bf16.mxu0 0
      %858 = vmatpush1.bf16.msra.mxu0 %v558
      %859 = vmatprep.subr.bf16.mxu0 0
      %860 = vmatpush1.bf16.msra.mxu0 %v559
      %861 = vmatprep.subr.bf16.mxu0 0
      %862 = vmatpush1.bf16.msra.mxu0 %v560
      %863 = vmatprep.subr.bf16.mxu0 0
      %864 = vmatpush1.bf16.msra.mxu0 %v561
      %865 = vmatprep.mubr.bf16.mxu0 %v824
      %866 = vmatmul.mubr.bf16.gmra.mrb[0].mxu0 %v823
      %v867 = vpop.f32.mrb[0].mxu0
      %v868 = vadd.f32 0.0, %v867
      %v869 = vpop.f32.mrb[0].mxu0
      %v870 = vpop.f32.mrb[0].mxu0
      %v871 = vadd.f32 0.0, %v870
      %v872 = vpop.f32.mrb[0].mxu0
      %873 = vdwg.mxu0
      %874 = vmatprep.subr.bf16.mxu0 0
      %875 = vmatpush1.bf16.msra.mxu0 %v562
      %876 = vmatprep.subr.bf16.mxu0 0
      %877 = vmatpush1.bf16.msra.mxu0 %v563
      %878 = vmatprep.subr.bf16.mxu0 0
      %879 = vmatpush1.bf16.msra.mxu0 %v564
      %880 = vmatprep.subr.bf16.mxu0 0
      %881 = vmatpush1.bf16.msra.mxu0 %v565
      %882 = vmatprep.subr.bf16.mxu0 0
      %883 = vmatpush1.bf16.msra.mxu0 %v566
      %884 = vmatprep.subr.bf16.mxu0 0
      %885 = vmatpush1.bf16.msra.mxu0 %v567
      %886 = vmatprep.subr.bf16.mxu0 0
      %887 = vmatpush1.bf16.msra.mxu0 %v568
      %888 = vmatprep.subr.bf16.mxu0 0
      %889 = vmatpush1.bf16.msra.mxu0 %v569
      %890 = vmatprep.subr.bf16.mxu0 0
      %891 = vmatpush1.bf16.msra.mxu0 %v570
      %892 = vmatprep.subr.bf16.mxu0 0
      %893 = vmatpush1.bf16.msra.mxu0 %v571
      %894 = vmatprep.subr.bf16.mxu0 0
      %895 = vmatpush1.bf16.msra.mxu0 %v572
      %896 = vmatprep.subr.bf16.mxu0 0
      %897 = vmatpush1.bf16.msra.mxu0 %v573
      %898 = vmatprep.subr.bf16.mxu0 0
      %899 = vmatpush1.bf16.msra.mxu0 %v574
      %900 = vmatprep.subr.bf16.mxu0 0
      %901 = vmatpush1.bf16.msra.mxu0 %v575
      %902 = vmatprep.subr.bf16.mxu0 0
      %903 = vmatpush1.bf16.msra.mxu0 %v576
      %904 = vmatprep.subr.bf16.mxu0 0
      %905 = vmatpush1.bf16.msra.mxu0 %v615
      %906 = vmatprep.mubr.bf16.mxu0 %v831
      %907 = vmatmul.mubr.bf16.gmra.mrb[0].mxu0 %v825
      %v908 = vpop.f32.mrb[0].mxu0
      %v909 = vadd.f32 %v868, %v908
      %v910 = vpop.f32.mrb[0].mxu0
      %v911 = vpop.f32.mrb[0].mxu0
      %v912 = vadd.f32 %v871, %v911
      %v913 = vpop.f32.mrb[0].mxu0
      %914 = vdwg.mxu0
      %v915 = vld [vmem:[%s325] sm:$0xff]
      %v916 = vld [vmem:[%s325 + $0x8] sm:$0xff]
      %v917 = vld [vmem:[%s325 + $0x10] sm:$0xff]
      %v918 = vld [vmem:[%s325 + $0x18] sm:$0xff]
      %v923 = vunpack.c.l.b16 %v915
      %v924 = vunpack.c.h.b16 %v915
      %v925 = vunpack.c.l.b16 %v916
      %v926 = vunpack.c.h.b16 %v916
      %v927 = vunpack.c.l.b16 %v917
      %v928 = vunpack.c.h.b16 %v917
      %v929 = vunpack.c.l.b16 %v918
      %v930 = vunpack.c.h.b16 %v918
      %v931 = vpack.c.b16 %v927, %v923
      %v932 = vpack.c.b16 %v928, %v924
      %v933 = vpack.c.b16 %v929, %v925
      %v934 = vpack.c.b16 %v930, %v926
      %v939 = vsel %vm609, %v934, 0
      %941 = vmatprep.subr.bf16.mxu0 0
      %942 = vmatpush1.bf16.msra.mxu0 %v546
      %943 = vmatprep.subr.bf16.mxu0 0
      %944 = vmatpush1.bf16.msra.mxu0 %v547
      %945 = vmatprep.subr.bf16.mxu0 0
      %946 = vmatpush1.bf16.msra.mxu0 %v548
      %947 = vmatprep.subr.bf16.mxu0 0
      %948 = vmatpush1.bf16.msra.mxu0 %v549
      %949 = vmatprep.subr.bf16.mxu0 0
      %950 = vmatpush1.bf16.msra.mxu0 %v550
      %951 = vmatprep.subr.bf16.mxu0 0
      %952 = vmatpush1.bf16.msra.mxu0 %v551
      %953 = vmatprep.subr.bf16.mxu0 0
      %954 = vmatpush1.bf16.msra.mxu0 %v552
      %955 = vmatprep.subr.bf16.mxu0 0
      %956 = vmatpush1.bf16.msra.mxu0 %v553
      %957 = vmatprep.subr.bf16.mxu0 0
      %958 = vmatpush1.bf16.msra.mxu0 %v554
      %959 = vmatprep.subr.bf16.mxu0 0
      %960 = vmatpush1.bf16.msra.mxu0 %v555
      %961 = vmatprep.subr.bf16.mxu0 0
      %962 = vmatpush1.bf16.msra.mxu0 %v556
      %963 = vmatprep.subr.bf16.mxu0 0
      %964 = vmatpush1.bf16.msra.mxu0 %v557
      %965 = vmatprep.subr.bf16.mxu0 0
      %966 = vmatpush1.bf16.msra.mxu0 %v558
      %967 = vmatprep.subr.bf16.mxu0 0
      %968 = vmatpush1.bf16.msra.mxu0 %v559
      %969 = vmatprep.subr.bf16.mxu0 0
      %970 = vmatpush1.bf16.msra.mxu0 %v560
      %971 = vmatprep.subr.bf16.mxu0 0
      %972 = vmatpush1.bf16.msra.mxu0 %v561
      %973 = vmatprep.mubr.bf16.mxu0 %v932
      %974 = vmatmul.mubr.bf16.gmra.mrb[0].mxu0 %v931
      %v975 = vpop.f32.mrb[0].mxu0
      %v976 = vadd.f32 0.0, %v975
      %v977 = vpop.f32.mrb[0].mxu0
      %v978 = vpop.f32.mrb[0].mxu0
      %v979 = vadd.f32 0.0, %v978
      %v980 = vpop.f32.mrb[0].mxu0
      %981 = vdwg.mxu0
      %982 = vmatprep.subr.bf16.mxu0 0
      %983 = vmatpush1.bf16.msra.mxu0 %v562
      %984 = vmatprep.subr.bf16.mxu0 0
      %985 = vmatpush1.bf16.msra.mxu0 %v563
      %986 = vmatprep.subr.bf16.mxu0 0
      %987 = vmatpush1.bf16.msra.mxu0 %v564
      %988 = vmatprep.subr.bf16.mxu0 0
      %989 = vmatpush1.bf16.msra.mxu0 %v565
      %990 = vmatprep.subr.bf16.mxu0 0
      %991 = vmatpush1.bf16.msra.mxu0 %v566
      %992 = vmatprep.subr.bf16.mxu0 0
      %993 = vmatpush1.bf16.msra.mxu0 %v567
      %994 = vmatprep.subr.bf16.mxu0 0
      %995 = vmatpush1.bf16.msra.mxu0 %v568
      %996 = vmatprep.subr.bf16.mxu0 0
      %997 = vmatpush1.bf16.msra.mxu0 %v569
      %998 = vmatprep.subr.bf16.mxu0 0
      %999 = vmatpush1.bf16.msra.mxu0 %v570
      %1000 = vmatprep.subr.bf16.mxu0 0
      %1001 = vmatpush1.bf16.msra.mxu0 %v571
      %1002 = vmatprep.subr.bf16.mxu0 0
      %1003 = vmatpush1.bf16.msra.mxu0 %v572
      %1004 = vmatprep.subr.bf16.mxu0 0
      %1005 = vmatpush1.bf16.msra.mxu0 %v573
      %1006 = vmatprep.subr.bf16.mxu0 0
      %1007 = vmatpush1.bf16.msra.mxu0 %v574
      %1008 = vmatprep.subr.bf16.mxu0 0
      %1009 = vmatpush1.bf16.msra.mxu0 %v575
      %1010 = vmatprep.subr.bf16.mxu0 0
      %1011 = vmatpush1.bf16.msra.mxu0 %v576
      %1012 = vmatprep.subr.bf16.mxu0 0
      %1013 = vmatpush1.bf16.msra.mxu0 %v615
      %1014 = vmatprep.mubr.bf16.mxu0 %v939
      %1015 = vmatmul.mubr.bf16.gmra.mrb[0].mxu0 %v933
      %v1016 = vpop.f32.mrb[0].mxu0
      %v1017 = vadd.f32 %v976, %v1016
      %v1018 = vpop.f32.mrb[0].mxu0
      %v1019 = vpop.f32.mrb[0].mxu0
      %v1020 = vadd.f32 %v979, %v1019
      %v1021 = vpop.f32.mrb[0].mxu0
      %1022 = vdwg.mxu0
      %v1023 = vmax.f32 %v693, %v801
      %v1024 = vmax.f32 %v696, %v804
      %v1025 = vmax.f32 %v909, %v1017
      %v1026 = vmax.f32 %v912, %v1020
      %v1027 = vmax.f32 %v1023, %v1025
      %v1028 = vmax.f32 %v1024, %v1026
      %v1029 = vld [vmem:[%s5] sm:$0x1]
      %v1031 = vlaneseq
      %v1032 = vshrl.u32 %v1031, 7
      %v1033 = vsub.s32 0, %v1032
      %v1034 = vrot.slane %v1029, %v1033
      %v1036 = vadd.f32 %v1027, %v1034
      %v1037 = vadd.f32 %v1028, %v1034
      %v1038 = vmax.f32 %v1036, 0.0
      %v1039 = vmax.f32 %v1037, 0.0
      %v1040 = vpack.c.bf16 %v1039, %v1038
      %v1042 = vunpack.c.l.b16 %v1040
      %v1043 = vunpack.c.h.b16 %v1040
      %v1044 = vpack.c.b16 %v1042, %v1042
      %v1045 = vpack.c.b16 %v1043, %v1043
      %vm1048 = vcmask 404480
      %1049 = vst.msk [vmem:[%s331] sm:$0xf] %vm1048, %v1044
      %1050 = vst.msk [vmem:[%s331 + $0x4] sm:$0xf] %vm1048, %v1045
      %s1051 = smul.u32 2, %s17
      %p1052 = scmp.lt.s32.totalorder %s1051, 3
      %s1053 = scalar_select %p1052, %s1051, 3
      %s1054 = smul.addr %s1053, 4
      %s1055 = scalar_lea.vmem %s6, %s1054
      // Predicated region
      $region45: #{net_forward.4} parent=43 // pred_check
        %p1056 = pneg %p181
      $region46: #{net_forward.4} parent=43 // pred_check_branch
        %1058 = sbr.rel (%p1056) target = $region48
      $region47: #{net_forward.4} parent=43 // pred_region
        %s1059 = smul.u32 2, %s17
      $region48: #{net_forward.4} parent=43 // pred_fallthru
        _
    $region44: #{net_forward.4} parent=5 // pred_fallthru
      _
    %p1060 = scmp.le.s32.totalorder 2, %s12
    // Predicated region
    $region49: #{net_forward.4} parent=5 // pred_check
      %p1061 = pneg %p1060
    $region50: #{net_forward.4} parent=5 // pred_check_branch
      %1063 = sbr.rel (%p1061) target = $region52
    $region51: #{net_forward.4} parent=5 // pred_region
      %s1064 = ssub.s32 %s12, 2
      // Predicated region
      $region53: #{net_forward.4} parent=51 // pred_check
        %p1065 = pneg %p187
      $region54: #{net_forward.4} parent=51 // pred_check_branch
        %1067 = sbr.rel (%p1065) target = $region56
      $region55: #{net_forward.4} parent=51 // pred_region
        %s1068 = smul.u32 2, %s18
        %p1069 = scmp.lt.s32.totalorder %s1068, 3
        %s1070 = scalar_select %p1069, %s1068, 3
        %s1071 = smul.addr %s1070, 4
        %s1072 = scalar_lea.vmem %s6, %s1071
      $region56: #{net_forward.4} parent=51 // pred_fallthru
        _
    $region52: #{net_forward.4} parent=5 // pred_fallthru
      _
  $region6: #{net_forward.4} parent=0 // loop_footer
    %s16 = sadd.s32 1, %s12
  $region7: #{net_forward.4} parent=0 // loop_footer_branch
    %11 = sbr.rel target = $region3
  $region8: #{net_forward.4} parent=0 // loop_exit
    _

// kernel: net_forward.5
$region0: #{net_forward.5}
  #allocation0 [shape = 'u32[]', space=smem, size = 0x4, offset = 0x4, fixed_abs, tag = 'smem constant byte address 0x4 - core index']
  #allocation1 [shape = 'u32[144,128]{1,0:T(1,128)}', space=vmem, size = 0x12000, scoped, tag = 'internal scratch']
  %s0 = inlined_call_operand.vmem [shape: bf16[16,800], index: 0, kind: input, shape index: {}]
  %s1 = inlined_call_operand.vmem [shape: bf16[800,500], index: 1, kind: input, shape index: {}]
  %s2 = inlined_call_operand.vmem [shape: f32[1,500], index: 2, kind: input, shape index: {}]
  %s3 = inlined_call_operand.vmem [shape: bf16[500,10], index: 3, kind: input, shape index: {}]
  %s4 = inlined_call_operand.vmem [shape: f32[1,10], index: 4, kind: input, shape index: {}]
  %s5 = inlined_call_operand.vmem [shape: f32[16,10], index: 5, kind: output, shape index: {}]
  %s6 = sld [smem:[#allocation0]]
  $region30: #{net_forward.5} parent=0
    _
  %s8 = ssub.s32 1, %s6
  %s9 = scalar_select 0, %s8, %s6
  // Predicated region
  $region2: #{net_forward.5} parent=0 // pred_check
    _
  $region3: #{net_forward.5} parent=0 // pred_check_branch
    %11 = sbr.rel (0) target = $region5
  $region4: #{net_forward.5} parent=0 // pred_region
    _
  $region5: #{net_forward.5} parent=0 // pred_fallthru
    _
  // Predicated region
  $region6: #{net_forward.5} parent=0 // pred_check
    _
  $region7: #{net_forward.5} parent=0 // pred_check_branch
    %13 = sbr.rel (0) target = $region9
  $region8: #{net_forward.5} parent=0 // pred_region
    _
  $region9: #{net_forward.5} parent=0 // pred_fallthru
    _
  // Predicated region
  $region10: #{net_forward.5} parent=0 // pred_check
    _
  $region11: #{net_forward.5} parent=0 // pred_check_branch
    %15 = sbr.rel (0) target = $region13
  $region12: #{net_forward.5} parent=0 // pred_region
    _
  $region13: #{net_forward.5} parent=0 // pred_fallthru
    _
  // Predicated region
  $region14: #{net_forward.5} parent=0 // pred_check
    _
  $region15: #{net_forward.5} parent=0 // pred_check_branch
    %17 = sbr.rel (0) target = $region17
  $region16: #{net_forward.5} parent=0 // pred_region
    _
  $region17: #{net_forward.5} parent=0 // pred_fallthru
    _
  // Predicated region
  $region18: #{net_forward.5} parent=0 // pred_check
    _
  $region19: #{net_forward.5} parent=0 // pred_check_branch
    %19 = sbr.rel (0) target = $region21
  $region20: #{net_forward.5} parent=0 // pred_region
    _
  $region21: #{net_forward.5} parent=0 // pred_fallthru
    _
  %v21 = vld [vmem:[%s0] sm:$0xff]
  %v22 = vld [vmem:[%s0 + $0x8] sm:$0xff]
  %v23 = vld [vmem:[%s0 + $0x10] sm:$0xff]
  %v24 = vld [vmem:[%s0 + $0x18] sm:$0xf]
  %v25 = vld [vmem:[%s0 + $0x1c] sm:$0xff]
  %v26 = vld [vmem:[%s0 + $0x24] sm:$0xff]
  %v27 = vld [vmem:[%s0 + $0x2c] sm:$0xff]
  %v28 = vld [vmem:[%s0 + $0x34] sm:$0xf]
  %v29 = vld [vmem:[%s1] sm:$0xff]
  %v30 = vld [vmem:[%s1 + $0x8] sm:$0xff]
  %v31 = vld [vmem:[%s1 + $0x10] sm:$0xff]
  %v32 = vld [vmem:[%s1 + $0x18] sm:$0xff]
  %v33 = vld [vmem:[%s1 + $0x20] sm:$0xff]
  %v34 = vld [vmem:[%s1 + $0x28] sm:$0xff]
  %v35 = vld [vmem:[%s1 + $0x30] sm:$0xff]
  %v36 = vld [vmem:[%s1 + $0x38] sm:$0xff]
  %v37 = vld [vmem:[%s1 + $0x40] sm:$0xff]
  %v38 = vld [vmem:[%s1 + $0x48] sm:$0xff]
  %v39 = vld [vmem:[%s1 + $0x50] sm:$0xff]
  %v40 = vld [vmem:[%s1 + $0x58] sm:$0xff]
  %v41 = vld [vmem:[%s1 + $0x60] sm:$0xff]
  %v42 = vld [vmem:[%s1 + $0x68] sm:$0xff]
  %v43 = vld [vmem:[%s1 + $0x70] sm:$0xff]
  %v44 = vld [vmem:[%s1 + $0x78] sm:$0xff]
  %v45 = vld [vmem:[%s1 + $0x80] sm:$0xff]
  %v46 = vld [vmem:[%s1 + $0x88] sm:$0xff]
  %v47 = vld [vmem:[%s1 + $0x90] sm:$0xff]
  %v48 = vld [vmem:[%s1 + $0x98] sm:$0xff]
  %v49 = vld [vmem:[%s1 + $0xa0] sm:$0xff]
  %v50 = vld [vmem:[%s1 + $0xa8] sm:$0xff]
  %v51 = vld [vmem:[%s1 + $0xb0] sm:$0xff]
  %v52 = vld [vmem:[%s1 + $0xb8] sm:$0xff]
  %v53 = vld [vmem:[%s1 + $0xc0] sm:$0xff]
  %v54 = vld [vmem:[%s1 + $0xc8] sm:$0xff]
  %v55 = vld [vmem:[%s1 + $0xd0] sm:$0xff]
  %v56 = vld [vmem:[%s1 + $0xd8] sm:$0xff]
  %v57 = vld [vmem:[%s1 + $0xe0] sm:$0xff]
  %v58 = vld [vmem:[%s1 + $0xe8] sm:$0xff]
  %v59 = vld [vmem:[%s1 + $0xf0] sm:$0xff]
  %v60 = vld [vmem:[%s1 + $0xf8] sm:$0xff]
  %v61 = vld [vmem:[%s1 + $0x100] sm:$0xff]
  %v62 = vld [vmem:[%s1 + $0x108] sm:$0xff]
  %v63 = vld [vmem:[%s1 + $0x110] sm:$0xff]
  %v64 = vld [vmem:[%s1 + $0x118] sm:$0xff]
  %v65 = vld [vmem:[%s1 + $0x120] sm:$0xff]
  %v66 = vld [vmem:[%s1 + $0x128] sm:$0xff]
  %v67 = vld [vmem:[%s1 + $0x130] sm:$0xff]
  %v68 = vld [vmem:[%s1 + $0x138] sm:$0xff]
  %v69 = vld [vmem:[%s1 + $0x140] sm:$0xff]
  %v70 = vld [vmem:[%s1 + $0x148] sm:$0xff]
  %v71 = vld [vmem:[%s1 + $0x150] sm:$0xff]
  %v72 = vld [vmem:[%s1 + $0x158] sm:$0xff]
  %v73 = vld [vmem:[%s1 + $0x160] sm:$0xff]
  %v74 = vld [vmem:[%s1 + $0x168] sm:$0xff]
  %v75 = vld [vmem:[%s1 + $0x170] sm:$0xff]
  %v76 = vld [vmem:[%s1 + $0x178] sm:$0xff]
  %v77 = vld [vmem:[%s1 + $0x180] sm:$0xff]
  %v78 = vld [vmem:[%s1 + $0x188] sm:$0xff]
  %v79 = vld [vmem:[%s1 + $0x190] sm:$0xff]
  %v80 = vld [vmem:[%s1 + $0x198] sm:$0xff]
  %v81 = vld [vmem:[%s1 + $0x1a0] sm:$0xff]
  %v82 = vld [vmem:[%s1 + $0x1a8] sm:$0xff]
  %v83 = vld [vmem:[%s1 + $0x1b0] sm:$0xff]
  %v84 = vld [vmem:[%s1 + $0x1b8] sm:$0xff]
  %v85 = vld [vmem:[%s1 + $0x1c0] sm:$0xff]
  %v86 = vld [vmem:[%s1 + $0x1c8] sm:$0xff]
  %v87 = vld [vmem:[%s1 + $0x1d0] sm:$0xff]
  %v88 = vld [vmem:[%s1 + $0x1d8] sm:$0xff]
  %v89 = vld [vmem:[%s1 + $0x1e0] sm:$0xff]
  %v90 = vld [vmem:[%s1 + $0x1e8] sm:$0xff]
  %v91 = vld [vmem:[%s1 + $0x1f0] sm:$0xff]
  %v92 = vld [vmem:[%s1 + $0x1f8] sm:$0xff]
  %v93 = vld [vmem:[%s1 + $0x200] sm:$0xff]
  %v94 = vld [vmem:[%s1 + $0x208] sm:$0xff]
  %v95 = vld [vmem:[%s1 + $0x210] sm:$0xff]
  %v96 = vld [vmem:[%s1 + $0x218] sm:$0xff]
  %v97 = vld [vmem:[%s1 + $0x220] sm:$0xff]
  %v98 = vld [vmem:[%s1 + $0x228] sm:$0xff]
  %v99 = vld [vmem:[%s1 + $0x230] sm:$0xff]
  %v100 = vld [vmem:[%s1 + $0x238] sm:$0xff]
  %v101 = vld [vmem:[%s1 + $0x240] sm:$0xff]
  %v102 = vld [vmem:[%s1 + $0x248] sm:$0xff]
  %v103 = vld [vmem:[%s1 + $0x250] sm:$0xff]
  %v104 = vld [vmem:[%s1 + $0x258] sm:$0xff]
  %v105 = vld [vmem:[%s1 + $0x260] sm:$0xff]
  %v106 = vld [vmem:[%s1 + $0x268] sm:$0xff]
  %v107 = vld [vmem:[%s1 + $0x270] sm:$0xff]
  %v108 = vld [vmem:[%s1 + $0x278] sm:$0xff]
  %v109 = vld [vmem:[%s1 + $0x280] sm:$0xff]
  %v110 = vld [vmem:[%s1 + $0x288] sm:$0xff]
  %v111 = vld [vmem:[%s1 + $0x290] sm:$0xff]
  %v112 = vld [vmem:[%s1 + $0x298] sm:$0xff]
  %v113 = vld [vmem:[%s1 + $0x2a0] sm:$0xff]
  %v114 = vld [vmem:[%s1 + $0x2a8] sm:$0xff]
  %v115 = vld [vmem:[%s1 + $0x2b0] sm:$0xff]
  %v116 = vld [vmem:[%s1 + $0x2b8] sm:$0xff]
  %v117 = vld [vmem:[%s1 + $0x2c0] sm:$0xff]
  %v118 = vld [vmem:[%s1 + $0x2c8] sm:$0xff]
  %v119 = vld [vmem:[%s1 + $0x2d0] sm:$0xff]
  %v120 = vld [vmem:[%s1 + $0x2d8] sm:$0xff]
  %v121 = vld [vmem:[%s1 + $0x2e0] sm:$0xff]
  %v122 = vld [vmem:[%s1 + $0x2e8] sm:$0xff]
  %v123 = vld [vmem:[%s1 + $0x2f0] sm:$0xff]
  %v124 = vld [vmem:[%s1 + $0x2f8] sm:$0xff]
  %v125 = vld [vmem:[%s1 + $0x300] sm:$0xff]
  %v126 = vld [vmem:[%s1 + $0x308] sm:$0xff]
  %v127 = vld [vmem:[%s1 + $0x310] sm:$0xff]
  %v128 = vld [vmem:[%s1 + $0x318] sm:$0xff]
  %v129 = vld [vmem:[%s1 + $0x320] sm:$0xff]
  %v130 = vld [vmem:[%s1 + $0x328] sm:$0xff]
  %v131 = vld [vmem:[%s1 + $0x330] sm:$0xff]
  %v132 = vld [vmem:[%s1 + $0x338] sm:$0xff]
  %v133 = vld [vmem:[%s1 + $0x340] sm:$0xff]
  %v134 = vld [vmem:[%s1 + $0x348] sm:$0xff]
  %v135 = vld [vmem:[%s1 + $0x350] sm:$0xff]
  %v136 = vld [vmem:[%s1 + $0x358] sm:$0xff]
  %v137 = vld [vmem:[%s1 + $0x360] sm:$0xff]
  %v138 = vld [vmem:[%s1 + $0x368] sm:$0xff]
  %v139 = vld [vmem:[%s1 + $0x370] sm:$0xff]
  %v140 = vld [vmem:[%s1 + $0x378] sm:$0xff]
  %v141 = vld [vmem:[%s1 + $0x380] sm:$0xff]
  %v142 = vld [vmem:[%s1 + $0x388] sm:$0xff]
  %v143 = vld [vmem:[%s1 + $0x390] sm:$0xff]
  %v144 = vld [vmem:[%s1 + $0x398] sm:$0xff]
  %v145 = vld [vmem:[%s1 + $0x3a0] sm:$0xff]
  %v146 = vld [vmem:[%s1 + $0x3a8] sm:$0xff]
  %v147 = vld [vmem:[%s1 + $0x3b0] sm:$0xff]
  %v148 = vld [vmem:[%s1 + $0x3b8] sm:$0xff]
  %v149 = vld [vmem:[%s1 + $0x3c0] sm:$0xff]
  %v150 = vld [vmem:[%s1 + $0x3c8] sm:$0xff]
  %v151 = vld [vmem:[%s1 + $0x3d0] sm:$0xff]
  %v152 = vld [vmem:[%s1 + $0x3d8] sm:$0xff]
  %v153 = vld [vmem:[%s1 + $0x3e0] sm:$0xff]
  %v154 = vld [vmem:[%s1 + $0x3e8] sm:$0xff]
  %v155 = vld [vmem:[%s1 + $0x3f0] sm:$0xff]
  %v156 = vld [vmem:[%s1 + $0x3f8] sm:$0xff]
  %v157 = vld [vmem:[%s1 + $0x400] sm:$0xff]
  %v158 = vld [vmem:[%s1 + $0x408] sm:$0xff]
  %v159 = vld [vmem:[%s1 + $0x410] sm:$0xff]
  %v160 = vld [vmem:[%s1 + $0x418] sm:$0xff]
  %v161 = vld [vmem:[%s1 + $0x420] sm:$0xff]
  %v162 = vld [vmem:[%s1 + $0x428] sm:$0xff]
  %v163 = vld [vmem:[%s1 + $0x430] sm:$0xff]
  %v164 = vld [vmem:[%s1 + $0x438] sm:$0xff]
  %v165 = vld [vmem:[%s1 + $0x440] sm:$0xff]
  %v166 = vld [vmem:[%s1 + $0x448] sm:$0xff]
  %v167 = vld [vmem:[%s1 + $0x450] sm:$0xff]
  %v168 = vld [vmem:[%s1 + $0x458] sm:$0xff]
  %v169 = vld [vmem:[%s1 + $0x460] sm:$0xff]
  %v170 = vld [vmem:[%s1 + $0x468] sm:$0xff]
  %v171 = vld [vmem:[%s1 + $0x470] sm:$0xff]
  %v172 = vld [vmem:[%s1 + $0x478] sm:$0xff]
  %v173 = vld [vmem:[%s1 + $0x480] sm:$0xff]
  %v174 = vld [vmem:[%s1 + $0x488] sm:$0xff]
  %v175 = vld [vmem:[%s1 + $0x490] sm:$0xff]
  %v176 = vld [vmem:[%s1 + $0x498] sm:$0xff]
  %v177 = vld [vmem:[%s1 + $0x4a0] sm:$0xff]
  %v178 = vld [vmem:[%s1 + $0x4a8] sm:$0xff]
  %v179 = vld [vmem:[%s1 + $0x4b0] sm:$0xff]
  %v180 = vld [vmem:[%s1 + $0x4b8] sm:$0xff]
  %v181 = vld [vmem:[%s1 + $0x4c0] sm:$0xff]
  %v182 = vld [vmem:[%s1 + $0x4c8] sm:$0xff]
  %v183 = vld [vmem:[%s1 + $0x4d0] sm:$0xff]
  %v184 = vld [vmem:[%s1 + $0x4d8] sm:$0xff]
  %v185 = vld [vmem:[%s1 + $0x4e0] sm:$0xff]
  %v186 = vld [vmem:[%s1 + $0x4e8] sm:$0xff]
  %v187 = vld [vmem:[%s1 + $0x4f0] sm:$0xff]
  %v188 = vld [vmem:[%s1 + $0x4f8] sm:$0xff]
  %v189 = vld [vmem:[%s1 + $0x500] sm:$0xff]
  %v190 = vld [vmem:[%s1 + $0x508] sm:$0xff]
  %v191 = vld [vmem:[%s1 + $0x510] sm:$0xff]
  %v192 = vld [vmem:[%s1 + $0x518] sm:$0xff]
  %v193 = vld [vmem:[%s1 + $0x520] sm:$0xff]
  %v194 = vld [vmem:[%s1 + $0x528] sm:$0xff]
  %v195 = vld [vmem:[%s1 + $0x530] sm:$0xff]
  %v196 = vld [vmem:[%s1 + $0x538] sm:$0xff]
  %v197 = vld [vmem:[%s1 + $0x540] sm:$0xff]
  %v198 = vld [vmem:[%s1 + $0x548] sm:$0xff]
  %v199 = vld [vmem:[%s1 + $0x550] sm:$0xff]
  %v200 = vld [vmem:[%s1 + $0x558] sm:$0xff]
  %v201 = vld [vmem:[%s1 + $0x560] sm:$0xff]
  %v202 = vld [vmem:[%s1 + $0x568] sm:$0xff]
  %v203 = vld [vmem:[%s1 + $0x570] sm:$0xff]
  %v204 = vld [vmem:[%s1 + $0x578] sm:$0xff]
  %v205 = vld [vmem:[%s1 + $0x580] sm:$0xff]
  %v206 = vld [vmem:[%s1 + $0x588] sm:$0xff]
  %v207 = vld [vmem:[%s1 + $0x590] sm:$0xff]
  %v208 = vld [vmem:[%s1 + $0x598] sm:$0xff]
  %v209 = vld [vmem:[%s1 + $0x5a0] sm:$0xff]
  %v210 = vld [vmem:[%s1 + $0x5a8] sm:$0xff]
  %v211 = vld [vmem:[%s1 + $0x5b0] sm:$0xff]
  %v212 = vld [vmem:[%s1 + $0x5b8] sm:$0xff]
  %v213 = vld [vmem:[%s1 + $0x5c0] sm:$0xff]
  %v214 = vld [vmem:[%s1 + $0x5c8] sm:$0xff]
  %v215 = vld [vmem:[%s1 + $0x5d0] sm:$0xff]
  %v216 = vld [vmem:[%s1 + $0x5d8] sm:$0xff]
  %v217 = vld [vmem:[%s1 + $0x5e0] sm:$0xff]
  %v218 = vld [vmem:[%s1 + $0x5e8] sm:$0xff]
  %v219 = vld [vmem:[%s1 + $0x5f0] sm:$0xff]
  %v220 = vld [vmem:[%s1 + $0x5f8] sm:$0xff]
  %v221 = vld [vmem:[%s1 + $0x600] sm:$0xff]
  %v222 = vld [vmem:[%s1 + $0x608] sm:$0xff]
  %v223 = vld [vmem:[%s1 + $0x610] sm:$0xff]
  %v224 = vld [vmem:[%s1 + $0x618] sm:$0xff]
  %v225 = vld [vmem:[%s1 + $0x620] sm:$0xff]
  %v226 = vld [vmem:[%s1 + $0x628] sm:$0xff]
  %v227 = vld [vmem:[%s1 + $0x630] sm:$0xff]
  %v228 = vld [vmem:[%s1 + $0x638] sm:$0xff]
  %v229 = vld [vmem:[%s2] sm:$0xf]
  %v231 = vlaneseq
  %v232 = vshrl.u32 %v231, 7
  %v233 = vsub.s32 0, %v232
  %v234 = vrot.slane %v229, %v233
  %v235 = vlaneseq
  %v236 = vshrl.u32 %v235, 7
  %v237 = vsub.s32 1, %v236
  %v238 = vrot.slane %v229, %v237
  %v239 = vlaneseq
  %v240 = vshrl.u32 %v239, 7
  %v241 = vsub.s32 2, %v240
  %v242 = vrot.slane %v229, %v241
  %v243 = vlaneseq
  %v244 = vshrl.u32 %v243, 7
  %v245 = vsub.s32 3, %v244
  %v246 = vrot.slane %v229, %v245
  %v259 = vunpack.c.l.b16 %v21
  %v260 = vunpack.c.h.b16 %v21
  %v261 = vunpack.c.l.b16 %v22
  %v262 = vunpack.c.h.b16 %v22
  %v263 = vunpack.c.l.b16 %v23
  %v264 = vunpack.c.h.b16 %v23
  %v265 = vunpack.c.l.b16 %v24
  %v266 = vunpack.c.l.b16 %v25
  %v267 = vunpack.c.h.b16 %v25
  %v268 = vunpack.c.l.b16 %v26
  %v269 = vunpack.c.h.b16 %v26
  %v270 = vunpack.c.l.b16 %v27
  %v271 = vunpack.c.h.b16 %v27
  %v272 = vunpack.c.l.b16 %v28
  %v273 = vpack.c.b16 %v266, %v259
  %v274 = vpack.c.b16 %v267, %v260
  %v275 = vpack.c.b16 %v268, %v261
  %v276 = vpack.c.b16 %v269, %v262
  %v277 = vpack.c.b16 %v270, %v263
  %v278 = vpack.c.b16 %v271, %v264
  %v279 = vpack.c.b16 %v272, %v265
  %v486 = vunpack.c.l.b16 %v29
  %v487 = vunpack.c.h.b16 %v29
  %v488 = vunpack.c.l.b16 %v30
  %v489 = vunpack.c.h.b16 %v30
  %v490 = vunpack.c.l.b16 %v31
  %v491 = vunpack.c.h.b16 %v31
  %v492 = vunpack.c.l.b16 %v32
  %v493 = vunpack.c.h.b16 %v32
  %v494 = vunpack.c.l.b16 %v33
  %v495 = vunpack.c.h.b16 %v33
  %v496 = vunpack.c.l.b16 %v34
  %v497 = vunpack.c.h.b16 %v34
  %v498 = vunpack.c.l.b16 %v35
  %v499 = vunpack.c.h.b16 %v35
  %v500 = vunpack.c.l.b16 %v36
  %v501 = vunpack.c.h.b16 %v36
  %v502 = vunpack.c.l.b16 %v37
  %v503 = vunpack.c.h.b16 %v37
  %v504 = vunpack.c.l.b16 %v38
  %v505 = vunpack.c.h.b16 %v38
  %v506 = vunpack.c.l.b16 %v39
  %v507 = vunpack.c.h.b16 %v39
  %v508 = vunpack.c.l.b16 %v40
  %v509 = vunpack.c.h.b16 %v40
  %v510 = vunpack.c.l.b16 %v41
  %v511 = vunpack.c.h.b16 %v41
  %v512 = vunpack.c.l.b16 %v42
  %v513 = vunpack.c.h.b16 %v42
  %v514 = vunpack.c.l.b16 %v43
  %v515 = vunpack.c.h.b16 %v43
  %v516 = vunpack.c.l.b16 %v44
  %v517 = vunpack.c.h.b16 %v44
  %v518 = vunpack.c.l.b16 %v45
  %v519 = vunpack.c.h.b16 %v45
  %v520 = vunpack.c.l.b16 %v46
  %v521 = vunpack.c.h.b16 %v46
  %v522 = vunpack.c.l.b16 %v47
  %v523 = vunpack.c.h.b16 %v47
  %v524 = vunpack.c.l.b16 %v48
  %v525 = vunpack.c.h.b16 %v48
  %v526 = vunpack.c.l.b16 %v49
  %v527 = vunpack.c.h.b16 %v49
  %v528 = vunpack.c.l.b16 %v50
  %v529 = vunpack.c.h.b16 %v50
  %v530 = vunpack.c.l.b16 %v51
  %v531 = vunpack.c.h.b16 %v51
  %v532 = vunpack.c.l.b16 %v52
  %v533 = vunpack.c.h.b16 %v52
  %v534 = vunpack.c.l.b16 %v53
  %v535 = vunpack.c.h.b16 %v53
  %v536 = vunpack.c.l.b16 %v54
  %v537 = vunpack.c.h.b16 %v54
  %v538 = vunpack.c.l.b16 %v55
  %v539 = vunpack.c.h.b16 %v55
  %v540 = vunpack.c.l.b16 %v56
  %v541 = vunpack.c.h.b16 %v56
  %v542 = vunpack.c.l.b16 %v57
  %v543 = vunpack.c.h.b16 %v57
  %v544 = vunpack.c.l.b16 %v58
  %v545 = vunpack.c.h.b16 %v58
  %v546 = vunpack.c.l.b16 %v59
  %v547 = vunpack.c.h.b16 %v59
  %v548 = vunpack.c.l.b16 %v60
  %v549 = vunpack.c.h.b16 %v60
  %v550 = vunpack.c.l.b16 %v61
  %v551 = vunpack.c.h.b16 %v61
  %v552 = vunpack.c.l.b16 %v62
  %v553 = vunpack.c.h.b16 %v62
  %v554 = vunpack.c.l.b16 %v63
  %v555 = vunpack.c.h.b16 %v63
  %v556 = vunpack.c.l.b16 %v64
  %v557 = vunpack.c.h.b16 %v64
  %v558 = vunpack.c.l.b16 %v65
  %v559 = vunpack.c.h.b16 %v65
  %v560 = vunpack.c.l.b16 %v66
  %v561 = vunpack.c.h.b16 %v66
  %v562 = vunpack.c.l.b16 %v67
  %v563 = vunpack.c.h.b16 %v67
  %v564 = vunpack.c.l.b16 %v68
  %v565 = vunpack.c.h.b16 %v68
  %v566 = vunpack.c.l.b16 %v69
  %v567 = vunpack.c.h.b16 %v69
  %v568 = vunpack.c.l.b16 %v70
  %v569 = vunpack.c.h.b16 %v70
  %v570 = vunpack.c.l.b16 %v71
  %v571 = vunpack.c.h.b16 %v71
  %v572 = vunpack.c.l.b16 %v72
  %v573 = vunpack.c.h.b16 %v72
  %v574 = vunpack.c.l.b16 %v73
  %v575 = vunpack.c.h.b16 %v73
  %v576 = vunpack.c.l.b16 %v74
  %v577 = vunpack.c.h.b16 %v74
  %v578 = vunpack.c.l.b16 %v75
  %v579 = vunpack.c.h.b16 %v75
  %v580 = vunpack.c.l.b16 %v76
  %v581 = vunpack.c.h.b16 %v76
  %v582 = vunpack.c.l.b16 %v77
  %v583 = vunpack.c.h.b16 %v77
  %v584 = vunpack.c.l.b16 %v78
  %v585 = vunpack.c.h.b16 %v78
  %v586 = vunpack.c.l.b16 %v79
  %v587 = vunpack.c.h.b16 %v79
  %v588 = vunpack.c.l.b16 %v80
  %v589 = vunpack.c.h.b16 %v80
  %v590 = vunpack.c.l.b16 %v81
  %v591 = vunpack.c.h.b16 %v81
  %v592 = vunpack.c.l.b16 %v82
  %v593 = vunpack.c.h.b16 %v82
  %v594 = vunpack.c.l.b16 %v83
  %v595 = vunpack.c.h.b16 %v83
  %v596 = vunpack.c.l.b16 %v84
  %v597 = vunpack.c.h.b16 %v84
  %v598 = vunpack.c.l.b16 %v85
  %v599 = vunpack.c.h.b16 %v85
  %v600 = vunpack.c.l.b16 %v86
  %v601 = vunpack.c.h.b16 %v86
  %v602 = vunpack.c.l.b16 %v87
  %v603 = vunpack.c.h.b16 %v87
  %v604 = vunpack.c.l.b16 %v88
  %v605 = vunpack.c.h.b16 %v88
  %v606 = vunpack.c.l.b16 %v89
  %v607 = vunpack.c.h.b16 %v89
  %v608 = vunpack.c.l.b16 %v90
  %v609 = vunpack.c.h.b16 %v90
  %v610 = vunpack.c.l.b16 %v91
  %v611 = vunpack.c.h.b16 %v91
  %v612 = vunpack.c.l.b16 %v92
  %v613 = vunpack.c.h.b16 %v92
  %v614 = vunpack.c.l.b16 %v93
  %v615 = vunpack.c.h.b16 %v93
  %v616 = vunpack.c.l.b16 %v94
  %v617 = vunpack.c.h.b16 %v94
  %v618 = vunpack.c.l.b16 %v95
  %v619 = vunpack.c.h.b16 %v95
  %v620 = vunpack.c.l.b16 %v96
  %v621 = vunpack.c.h.b16 %v96
  %v622 = vunpack.c.l.b16 %v97
  %v623 = vunpack.c.h.b16 %v97
  %v624 = vunpack.c.l.b16 %v98
  %v625 = vunpack.c.h.b16 %v98
  %v626 = vunpack.c.l.b16 %v99
  %v627 = vunpack.c.h.b16 %v99
  %v628 = vunpack.c.l.b16 %v100
  %v629 = vunpack.c.h.b16 %v100
  %v630 = vunpack.c.l.b16 %v101
  %v631 = vunpack.c.h.b16 %v101
  %v632 = vunpack.c.l.b16 %v102
  %v633 = vunpack.c.h.b16 %v102
  %v634 = vunpack.c.l.b16 %v103
  %v635 = vunpack.c.h.b16 %v103
  %v636 = vunpack.c.l.b16 %v104
  %v637 = vunpack.c.h.b16 %v104
  %v638 = vunpack.c.l.b16 %v105
  %v639 = vunpack.c.h.b16 %v105
  %v640 = vunpack.c.l.b16 %v106
  %v641 = vunpack.c.h.b16 %v106
  %v642 = vunpack.c.l.b16 %v107
  %v643 = vunpack.c.h.b16 %v107
  %v644 = vunpack.c.l.b16 %v108
  %v645 = vunpack.c.h.b16 %v108
  %v646 = vunpack.c.l.b16 %v109
  %v647 = vunpack.c.h.b16 %v109
  %v648 = vunpack.c.l.b16 %v110
  %v649 = vunpack.c.h.b16 %v110
  %v650 = vunpack.c.l.b16 %v111
  %v651 = vunpack.c.h.b16 %v111
  %v652 = vunpack.c.l.b16 %v112
  %v653 = vunpack.c.h.b16 %v112
  %v654 = vunpack.c.l.b16 %v113
  %v655 = vunpack.c.h.b16 %v113
  %v656 = vunpack.c.l.b16 %v114
  %v657 = vunpack.c.h.b16 %v114
  %v658 = vunpack.c.l.b16 %v115
  %v659 = vunpack.c.h.b16 %v115
  %v660 = vunpack.c.l.b16 %v116
  %v661 = vunpack.c.h.b16 %v116
  %v662 = vunpack.c.l.b16 %v117
  %v663 = vunpack.c.h.b16 %v117
  %v664 = vunpack.c.l.b16 %v118
  %v665 = vunpack.c.h.b16 %v118
  %v666 = vunpack.c.l.b16 %v119
  %v667 = vunpack.c.h.b16 %v119
  %v668 = vunpack.c.l.b16 %v120
  %v669 = vunpack.c.h.b16 %v120
  %v670 = vunpack.c.l.b16 %v121
  %v671 = vunpack.c.h.b16 %v121
  %v672 = vunpack.c.l.b16 %v122
  %v673 = vunpack.c.h.b16 %v122
  %v674 = vunpack.c.l.b16 %v123
  %v675 = vunpack.c.h.b16 %v123
  %v676 = vunpack.c.l.b16 %v124
  %v677 = vunpack.c.h.b16 %v124
  %v678 = vunpack.c.l.b16 %v125
  %v679 = vunpack.c.h.b16 %v125
  %v680 = vunpack.c.l.b16 %v126
  %v681 = vunpack.c.h.b16 %v126
  %v682 = vunpack.c.l.b16 %v127
  %v683 = vunpack.c.h.b16 %v127
  %v684 = vunpack.c.l.b16 %v128
  %v685 = vunpack.c.h.b16 %v128
  %v686 = vunpack.c.l.b16 %v129
  %v687 = vunpack.c.h.b16 %v129
  %v688 = vunpack.c.l.b16 %v130
  %v689 = vunpack.c.h.b16 %v130
  %v690 = vunpack.c.l.b16 %v131
  %v691 = vunpack.c.h.b16 %v131
  %v692 = vunpack.c.l.b16 %v132
  %v693 = vunpack.c.h.b16 %v132
  %v694 = vunpack.c.l.b16 %v133
  %v695 = vunpack.c.h.b16 %v133
  %v696 = vunpack.c.l.b16 %v134
  %v697 = vunpack.c.h.b16 %v134
  %v698 = vunpack.c.l.b16 %v135
  %v699 = vunpack.c.h.b16 %v135
  %v700 = vunpack.c.l.b16 %v136
  %v701 = vunpack.c.h.b16 %v136
  %v702 = vunpack.c.l.b16 %v137
  %v703 = vunpack.c.h.b16 %v137
  %v704 = vunpack.c.l.b16 %v138
  %v705 = vunpack.c.h.b16 %v138
  %v706 = vunpack.c.l.b16 %v139
  %v707 = vunpack.c.h.b16 %v139
  %v708 = vunpack.c.l.b16 %v140
  %v709 = vunpack.c.h.b16 %v140
  %v710 = vunpack.c.l.b16 %v141
  %v711 = vunpack.c.h.b16 %v141
  %v712 = vunpack.c.l.b16 %v142
  %v713 = vunpack.c.h.b16 %v142
  %v714 = vunpack.c.l.b16 %v143
  %v715 = vunpack.c.h.b16 %v143
  %v716 = vunpack.c.l.b16 %v144
  %v717 = vunpack.c.h.b16 %v144
  %v718 = vunpack.c.l.b16 %v145
  %v719 = vunpack.c.h.b16 %v145
  %v720 = vunpack.c.l.b16 %v146
  %v721 = vunpack.c.h.b16 %v146
  %v722 = vunpack.c.l.b16 %v147
  %v723 = vunpack.c.h.b16 %v147
  %v724 = vunpack.c.l.b16 %v148
  %v725 = vunpack.c.h.b16 %v148
  %v726 = vunpack.c.l.b16 %v149
  %v727 = vunpack.c.h.b16 %v149
  %v728 = vunpack.c.l.b16 %v150
  %v729 = vunpack.c.h.b16 %v150
  %v730 = vunpack.c.l.b16 %v151
  %v731 = vunpack.c.h.b16 %v151
  %v732 = vunpack.c.l.b16 %v152
  %v733 = vunpack.c.h.b16 %v152
  %v734 = vunpack.c.l.b16 %v153
  %v735 = vunpack.c.h.b16 %v153
  %v736 = vunpack.c.l.b16 %v154
  %v737 = vunpack.c.h.b16 %v154
  %v738 = vunpack.c.l.b16 %v155
  %v739 = vunpack.c.h.b16 %v155
  %v740 = vunpack.c.l.b16 %v156
  %v741 = vunpack.c.h.b16 %v156
  %v742 = vunpack.c.l.b16 %v157
  %v743 = vunpack.c.h.b16 %v157
  %v744 = vunpack.c.l.b16 %v158
  %v745 = vunpack.c.h.b16 %v158
  %v746 = vunpack.c.l.b16 %v159
  %v747 = vunpack.c.h.b16 %v159
  %v748 = vunpack.c.l.b16 %v160
  %v749 = vunpack.c.h.b16 %v160
  %v750 = vunpack.c.l.b16 %v161
  %v751 = vunpack.c.h.b16 %v161
  %v752 = vunpack.c.l.b16 %v162
  %v753 = vunpack.c.h.b16 %v162
  %v754 = vunpack.c.l.b16 %v163
  %v755 = vunpack.c.h.b16 %v163
  %v756 = vunpack.c.l.b16 %v164
  %v757 = vunpack.c.h.b16 %v164
  %v758 = vunpack.c.l.b16 %v165
  %v759 = vunpack.c.h.b16 %v165
  %v760 = vunpack.c.l.b16 %v166
  %v761 = vunpack.c.h.b16 %v166
  %v762 = vunpack.c.l.b16 %v167
  %v763 = vunpack.c.h.b16 %v167
  %v764 = vunpack.c.l.b16 %v168
  %v765 = vunpack.c.h.b16 %v168
  %v766 = vunpack.c.l.b16 %v169
  %v767 = vunpack.c.h.b16 %v169
  %v768 = vunpack.c.l.b16 %v170
  %v769 = vunpack.c.h.b16 %v170
  %v770 = vunpack.c.l.b16 %v171
  %v771 = vunpack.c.h.b16 %v171
  %v772 = vunpack.c.l.b16 %v172
  %v773 = vunpack.c.h.b16 %v172
  %v774 = vunpack.c.l.b16 %v173
  %v775 = vunpack.c.h.b16 %v173
  %v776 = vunpack.c.l.b16 %v174
  %v777 = vunpack.c.h.b16 %v174
  %v778 = vunpack.c.l.b16 %v175
  %v779 = vunpack.c.h.b16 %v175
  %v780 = vunpack.c.l.b16 %v176
  %v781 = vunpack.c.h.b16 %v176
  %v782 = vunpack.c.l.b16 %v177
  %v783 = vunpack.c.h.b16 %v177
  %v784 = vunpack.c.l.b16 %v178
  %v785 = vunpack.c.h.b16 %v178
  %v786 = vunpack.c.l.b16 %v179
  %v787 = vunpack.c.h.b16 %v179
  %v788 = vunpack.c.l.b16 %v180
  %v789 = vunpack.c.h.b16 %v180
  %v790 = vunpack.c.l.b16 %v181
  %v791 = vunpack.c.h.b16 %v181
  %v792 = vunpack.c.l.b16 %v182
  %v793 = vunpack.c.h.b16 %v182
  %v794 = vunpack.c.l.b16 %v183
  %v795 = vunpack.c.h.b16 %v183
  %v796 = vunpack.c.l.b16 %v184
  %v797 = vunpack.c.h.b16 %v184
  %v798 = vunpack.c.l.b16 %v185
  %v799 = vunpack.c.h.b16 %v185
  %v800 = vunpack.c.l.b16 %v186
  %v801 = vunpack.c.h.b16 %v186
  %v802 = vunpack.c.l.b16 %v187
  %v803 = vunpack.c.h.b16 %v187
  %v804 = vunpack.c.l.b16 %v188
  %v805 = vunpack.c.h.b16 %v188
  %v806 = vunpack.c.l.b16 %v189
  %v807 = vunpack.c.h.b16 %v189
  %v808 = vunpack.c.l.b16 %v190
  %v809 = vunpack.c.h.b16 %v190
  %v810 = vunpack.c.l.b16 %v191
  %v811 = vunpack.c.h.b16 %v191
  %v812 = vunpack.c.l.b16 %v192
  %v813 = vunpack.c.h.b16 %v192
  %v814 = vunpack.c.l.b16 %v193
  %v815 = vunpack.c.h.b16 %v193
  %v816 = vunpack.c.l.b16 %v194
  %v817 = vunpack.c.h.b16 %v194
  %v818 = vunpack.c.l.b16 %v195
  %v819 = vunpack.c.h.b16 %v195
  %v820 = vunpack.c.l.b16 %v196
  %v821 = vunpack.c.h.b16 %v196
  %v822 = vunpack.c.l.b16 %v197
  %v823 = vunpack.c.h.b16 %v197
  %v824 = vunpack.c.l.b16 %v198
  %v825 = vunpack.c.h.b16 %v198
  %v826 = vunpack.c.l.b16 %v199
  %v827 = vunpack.c.h.b16 %v199
  %v828 = vunpack.c.l.b16 %v200
  %v829 = vunpack.c.h.b16 %v200
  %v830 = vunpack.c.l.b16 %v201
  %v831 = vunpack.c.h.b16 %v201
  %v832 = vunpack.c.l.b16 %v202
  %v833 = vunpack.c.h.b16 %v202
  %v834 = vunpack.c.l.b16 %v203
  %v835 = vunpack.c.h.b16 %v203
  %v836 = vunpack.c.l.b16 %v204
  %v837 = vunpack.c.h.b16 %v204
  %v838 = vunpack.c.l.b16 %v205
  %v839 = vunpack.c.h.b16 %v205
  %v840 = vunpack.c.l.b16 %v206
  %v841 = vunpack.c.h.b16 %v206
  %v842 = vunpack.c.l.b16 %v207
  %v843 = vunpack.c.h.b16 %v207
  %v844 = vunpack.c.l.b16 %v208
  %v845 = vunpack.c.h.b16 %v208
  %v846 = vunpack.c.l.b16 %v209
  %v847 = vunpack.c.h.b16 %v209
  %v848 = vunpack.c.l.b16 %v210
  %v849 = vunpack.c.h.b16 %v210
  %v850 = vunpack.c.l.b16 %v211
  %v851 = vunpack.c.h.b16 %v211
  %v852 = vunpack.c.l.b16 %v212
  %v853 = vunpack.c.h.b16 %v212
  %v854 = vunpack.c.l.b16 %v213
  %v855 = vunpack.c.h.b16 %v213
  %v856 = vunpack.c.l.b16 %v214
  %v857 = vunpack.c.h.b16 %v214
  %v858 = vunpack.c.l.b16 %v215
  %v859 = vunpack.c.h.b16 %v215
  %v860 = vunpack.c.l.b16 %v216
  %v861 = vunpack.c.h.b16 %v216
  %v862 = vunpack.c.l.b16 %v217
  %v863 = vunpack.c.h.b16 %v217
  %v864 = vunpack.c.l.b16 %v218
  %v865 = vunpack.c.h.b16 %v218
  %v866 = vunpack.c.l.b16 %v219
  %v867 = vunpack.c.h.b16 %v219
  %v868 = vunpack.c.l.b16 %v220
  %v869 = vunpack.c.h.b16 %v220
  %v870 = vunpack.c.l.b16 %v221
  %v871 = vunpack.c.h.b16 %v221
  %v872 = vunpack.c.l.b16 %v222
  %v873 = vunpack.c.h.b16 %v222
  %v874 = vunpack.c.l.b16 %v223
  %v875 = vunpack.c.h.b16 %v223
  %v876 = vunpack.c.l.b16 %v224
  %v877 = vunpack.c.h.b16 %v224
  %v878 = vunpack.c.l.b16 %v225
  %v879 = vunpack.c.h.b16 %v225
  %v880 = vunpack.c.l.b16 %v226
  %v881 = vunpack.c.h.b16 %v226
  %v882 = vunpack.c.l.b16 %v227
  %v883 = vunpack.c.h.b16 %v227
  %v884 = vunpack.c.l.b16 %v228
  %v885 = vunpack.c.h.b16 %v228
  %v886 = vpack.c.b16 %v490, %v486
  %v887 = vpack.c.b16 %v491, %v487
  %v888 = vpack.c.b16 %v492, %v488
  %v889 = vpack.c.b16 %v493, %v489
  %v890 = vpack.c.b16 %v498, %v494
  %v891 = vpack.c.b16 %v499, %v495
  %v892 = vpack.c.b16 %v500, %v496
  %v893 = vpack.c.b16 %v501, %v497
  %v894 = vpack.c.b16 %v506, %v502
  %v895 = vpack.c.b16 %v507, %v503
  %v896 = vpack.c.b16 %v508, %v504
  %v897 = vpack.c.b16 %v509, %v505
  %v898 = vpack.c.b16 %v514, %v510
  %v899 = vpack.c.b16 %v515, %v511
  %v900 = vpack.c.b16 %v516, %v512
  %v901 = vpack.c.b16 %v517, %v513
  %v902 = vpack.c.b16 %v522, %v518
  %v903 = vpack.c.b16 %v523, %v519
  %v904 = vpack.c.b16 %v524, %v520
  %v905 = vpack.c.b16 %v525, %v521
  %v906 = vpack.c.b16 %v530, %v526
  %v907 = vpack.c.b16 %v531, %v527
  %v908 = vpack.c.b16 %v532, %v528
  %v909 = vpack.c.b16 %v533, %v529
  %v910 = vpack.c.b16 %v538, %v534
  %v911 = vpack.c.b16 %v539, %v535
  %v912 = vpack.c.b16 %v540, %v536
  %v913 = vpack.c.b16 %v541, %v537
  %v914 = vpack.c.b16 %v546, %v542
  %v915 = vpack.c.b16 %v547, %v543
  %v916 = vpack.c.b16 %v548, %v544
  %v917 = vpack.c.b16 %v549, %v545
  %v918 = vpack.c.b16 %v554, %v550
  %v919 = vpack.c.b16 %v555, %v551
  %v920 = vpack.c.b16 %v556, %v552
  %v921 = vpack.c.b16 %v557, %v553
  %v922 = vpack.c.b16 %v562, %v558
  %v923 = vpack.c.b16 %v563, %v559
  %v924 = vpack.c.b16 %v564, %v560
  %v925 = vpack.c.b16 %v565, %v561
  %v926 = vpack.c.b16 %v570, %v566
  %v927 = vpack.c.b16 %v571, %v567
  %v928 = vpack.c.b16 %v572, %v568
  %v929 = vpack.c.b16 %v573, %v569
  %v930 = vpack.c.b16 %v578, %v574
  %v931 = vpack.c.b16 %v579, %v575
  %v932 = vpack.c.b16 %v580, %v576
  %v933 = vpack.c.b16 %v581, %v577
  %v934 = vpack.c.b16 %v586, %v582
  %v935 = vpack.c.b16 %v587, %v583
  %v936 = vpack.c.b16 %v588, %v584
  %v937 = vpack.c.b16 %v589, %v585
  %v938 = vpack.c.b16 %v594, %v590
  %v939 = vpack.c.b16 %v595, %v591
  %v940 = vpack.c.b16 %v596, %v592
  %v941 = vpack.c.b16 %v597, %v593
  %v942 = vpack.c.b16 %v602, %v598
  %v943 = vpack.c.b16 %v603, %v599
  %v944 = vpack.c.b16 %v604, %v600
  %v945 = vpack.c.b16 %v605, %v601
  %v946 = vpack.c.b16 %v610, %v606
  %v947 = vpack.c.b16 %v611, %v607
  %v948 = vpack.c.b16 %v612, %v608
  %v949 = vpack.c.b16 %v613, %v609
  %v950 = vpack.c.b16 %v618, %v614
  %v951 = vpack.c.b16 %v619, %v615
  %v952 = vpack.c.b16 %v620, %v616
  %v953 = vpack.c.b16 %v621, %v617
  %v954 = vpack.c.b16 %v626, %v622
  %v955 = vpack.c.b16 %v627, %v623
  %v956 = vpack.c.b16 %v628, %v624
  %v957 = vpack.c.b16 %v629, %v625
  %v958 = vpack.c.b16 %v634, %v630
  %v959 = vpack.c.b16 %v635, %v631
  %v960 = vpack.c.b16 %v636, %v632
  %v961 = vpack.c.b16 %v637, %v633
  %v962 = vpack.c.b16 %v642, %v638
  %v963 = vpack.c.b16 %v643, %v639
  %v964 = vpack.c.b16 %v644, %v640
  %v965 = vpack.c.b16 %v645, %v641
  %v966 = vpack.c.b16 %v650, %v646
  %v967 = vpack.c.b16 %v651, %v647
  %v968 = vpack.c.b16 %v652, %v648
  %v969 = vpack.c.b16 %v653, %v649
  %v970 = vpack.c.b16 %v658, %v654
  %v971 = vpack.c.b16 %v659, %v655
  %v972 = vpack.c.b16 %v660, %v656
  %v973 = vpack.c.b16 %v661, %v657
  %v974 = vpack.c.b16 %v666, %v662
  %v975 = vpack.c.b16 %v667, %v663
  %v976 = vpack.c.b16 %v668, %v664
  %v977 = vpack.c.b16 %v669, %v665
  %v978 = vpack.c.b16 %v674, %v670
  %v979 = vpack.c.b16 %v675, %v671
  %v980 = vpack.c.b16 %v676, %v672
  %v981 = vpack.c.b16 %v677, %v673
  %v982 = vpack.c.b16 %v682, %v678
  %v983 = vpack.c.b16 %v683, %v679
  %v984 = vpack.c.b16 %v684, %v680
  %v985 = vpack.c.b16 %v685, %v681
  %v986 = vpack.c.b16 %v690, %v686
  %v987 = vpack.c.b16 %v691, %v687
  %v988 = vpack.c.b16 %v692, %v688
  %v989 = vpack.c.b16 %v693, %v689
  %v990 = vpack.c.b16 %v698, %v694
  %v991 = vpack.c.b16 %v699, %v695
  %v992 = vpack.c.b16 %v700, %v696
  %v993 = vpack.c.b16 %v701, %v697
  %v994 = vpack.c.b16 %v706, %v702
  %v995 = vpack.c.b16 %v707, %v703
  %v996 = vpack.c.b16 %v708, %v704
  %v997 = vpack.c.b16 %v709, %v705
  %v998 = vpack.c.b16 %v714, %v710
  %v999 = vpack.c.b16 %v715, %v711
  %v1000 = vpack.c.b16 %v716, %v712
  %v1001 = vpack.c.b16 %v717, %v713
  %v1002 = vpack.c.b16 %v722, %v718
  %v1003 = vpack.c.b16 %v723, %v719
  %v1004 = vpack.c.b16 %v724, %v720
  %v1005 = vpack.c.b16 %v725, %v721
  %v1006 = vpack.c.b16 %v730, %v726
  %v1007 = vpack.c.b16 %v731, %v727
  %v1008 = vpack.c.b16 %v732, %v728
  %v1009 = vpack.c.b16 %v733, %v729
  %v1010 = vpack.c.b16 %v738, %v734
  %v1011 = vpack.c.b16 %v739, %v735
  %v1012 = vpack.c.b16 %v740, %v736
  %v1013 = vpack.c.b16 %v741, %v737
  %v1014 = vpack.c.b16 %v746, %v742
  %v1015 = vpack.c.b16 %v747, %v743
  %v1016 = vpack.c.b16 %v748, %v744
  %v1017 = vpack.c.b16 %v749, %v745
  %v1018 = vpack.c.b16 %v754, %v750
  %v1019 = vpack.c.b16 %v755, %v751
  %v1020 = vpack.c.b16 %v756, %v752
  %v1021 = vpack.c.b16 %v757, %v753
  %v1022 = vpack.c.b16 %v762, %v758
  %v1023 = vpack.c.b16 %v763, %v759
  %v1024 = vpack.c.b16 %v764, %v760
  %v1025 = vpack.c.b16 %v765, %v761
  %v1026 = vpack.c.b16 %v770, %v766
  %v1027 = vpack.c.b16 %v771, %v767
  %v1028 = vpack.c.b16 %v772, %v768
  %v1029 = vpack.c.b16 %v773, %v769
  %v1030 = vpack.c.b16 %v778, %v774
  %v1031 = vpack.c.b16 %v779, %v775
  %v1032 = vpack.c.b16 %v780, %v776
  %v1033 = vpack.c.b16 %v781, %v777
  %v1034 = vpack.c.b16 %v786, %v782
  %v1035 = vpack.c.b16 %v787, %v783
  %v1036 = vpack.c.b16 %v788, %v784
  %v1037 = vpack.c.b16 %v789, %v785
  %v1038 = vpack.c.b16 %v794, %v790
  %v1039 = vpack.c.b16 %v795, %v791
  %v1040 = vpack.c.b16 %v796, %v792
  %v1041 = vpack.c.b16 %v797, %v793
  %v1042 = vpack.c.b16 %v802, %v798
  %v1043 = vpack.c.b16 %v803, %v799
  %v1044 = vpack.c.b16 %v804, %v800
  %v1045 = vpack.c.b16 %v805, %v801
  %v1046 = vpack.c.b16 %v810, %v806
  %v1047 = vpack.c.b16 %v811, %v807
  %v1048 = vpack.c.b16 %v812, %v808
  %v1049 = vpack.c.b16 %v813, %v809
  %v1050 = vpack.c.b16 %v818, %v814
  %v1051 = vpack.c.b16 %v819, %v815
  %v1052 = vpack.c.b16 %v820, %v816
  %v1053 = vpack.c.b16 %v821, %v817
  %v1054 = vpack.c.b16 %v826, %v822
  %v1055 = vpack.c.b16 %v827, %v823
  %v1056 = vpack.c.b16 %v828, %v824
  %v1057 = vpack.c.b16 %v829, %v825
  %v1058 = vpack.c.b16 %v834, %v830
  %v1059 = vpack.c.b16 %v835, %v831
  %v1060 = vpack.c.b16 %v836, %v832
  %v1061 = vpack.c.b16 %v837, %v833
  %v1062 = vpack.c.b16 %v842, %v838
  %v1063 = vpack.c.b16 %v843, %v839
  %v1064 = vpack.c.b16 %v844, %v840
  %v1065 = vpack.c.b16 %v845, %v841
  %v1066 = vpack.c.b16 %v850, %v846
  %v1067 = vpack.c.b16 %v851, %v847
  %v1068 = vpack.c.b16 %v852, %v848
  %v1069 = vpack.c.b16 %v853, %v849
  %v1070 = vpack.c.b16 %v858, %v854
  %v1071 = vpack.c.b16 %v859, %v855
  %v1072 = vpack.c.b16 %v860, %v856
  %v1073 = vpack.c.b16 %v861, %v857
  %v1074 = vpack.c.b16 %v866, %v862
  %v1075 = vpack.c.b16 %v867, %v863
  %v1076 = vpack.c.b16 %v868, %v864
  %v1077 = vpack.c.b16 %v869, %v865
  %v1078 = vpack.c.b16 %v874, %v870
  %v1079 = vpack.c.b16 %v875, %v871
  %v1080 = vpack.c.b16 %v876, %v872
  %v1081 = vpack.c.b16 %v877, %v873
  %v1082 = vpack.c.b16 %v882, %v878
  %v1083 = vpack.c.b16 %v883, %v879
  %v1084 = vpack.c.b16 %v884, %v880
  %v1085 = vpack.c.b16 %v885, %v881
  %vm1286 = vcmask 261120
  %v1288 = vsel %vm1286, %v279, 0
  %1290 = vmatprep.subr.bf16.mxu0 %v887
  %1291 = vmatpush1.bf16.msra.mxu0 %v886
  %1292 = vmatprep.subr.bf16.mxu0 %v891
  %1293 = vmatpush1.bf16.msra.mxu0 %v890
  %1294 = vmatprep.subr.bf16.mxu0 %v895
  %1295 = vmatpush1.bf16.msra.mxu0 %v894
  %1296 = vmatprep.subr.bf16.mxu0 %v899
  %1297 = vmatpush1.bf16.msra.mxu0 %v898
  %1298 = vmatprep.subr.bf16.mxu0 %v903
  %1299 = vmatpush1.bf16.msra.mxu0 %v902
  %1300 = vmatprep.subr.bf16.mxu0 %v907
  %1301 = vmatpush1.bf16.msra.mxu0 %v906
  %1302 = vmatprep.subr.bf16.mxu0 %v911
  %1303 = vmatpush1.bf16.msra.mxu0 %v910
  %1304 = vmatprep.subr.bf16.mxu0 %v915
  %1305 = vmatpush1.bf16.msra.mxu0 %v914
  %1306 = vmatprep.subr.bf16.mxu0 %v919
  %1307 = vmatpush1.bf16.msra.mxu0 %v918
  %1308 = vmatprep.subr.bf16.mxu0 %v923
  %1309 = vmatpush1.bf16.msra.mxu0 %v922
  %1310 = vmatprep.subr.bf16.mxu0 %v927
  %1311 = vmatpush1.bf16.msra.mxu0 %v926
  %1312 = vmatprep.subr.bf16.mxu0 %v931
  %1313 = vmatpush1.bf16.msra.mxu0 %v930
  %1314 = vmatprep.subr.bf16.mxu0 %v935
  %1315 = vmatpush1.bf16.msra.mxu0 %v934
  %1316 = vmatprep.subr.bf16.mxu0 %v939
  %1317 = vmatpush1.bf16.msra.mxu0 %v938
  %1318 = vmatprep.subr.bf16.mxu0 %v943
  %1319 = vmatpush1.bf16.msra.mxu0 %v942
  %1320 = vmatprep.subr.bf16.mxu0 %v947
  %1321 = vmatpush1.bf16.msra.mxu0 %v946
  %1322 = vmatprep.mubr.bf16.mxu0 %v274
  %1323 = vmatmul.mubr.bf16.gmra.mrb[0].mxu0 %v273
  %v1324 = vpop.f32.mrb[0].mxu0
  %v1325 = vadd.f32 %v234, %v1324
  %v1326 = vpop.f32.mrb[0].mxu0
  %v1327 = vadd.f32 %v238, %v1326
  %v1328 = vpop.f32.mrb[0].mxu0
  %v1329 = vadd.f32 %v234, %v1328
  %v1330 = vpop.f32.mrb[0].mxu0
  %v1331 = vadd.f32 %v238, %v1330
  %1332 = vdwg.mxu0
  %1333 = vmatprep.subr.bf16.mxu0 %v951
  %1334 = vmatpush1.bf16.msra.mxu0 %v950
  %1335 = vmatprep.subr.bf16.mxu0 %v955
  %1336 = vmatpush1.bf16.msra.mxu0 %v954
  %1337 = vmatprep.subr.bf16.mxu0 %v959
  %1338 = vmatpush1.bf16.msra.mxu0 %v958
  %1339 = vmatprep.subr.bf16.mxu0 %v963
  %1340 = vmatpush1.bf16.msra.mxu0 %v962
  %1341 = vmatprep.subr.bf16.mxu0 %v967
  %1342 = vmatpush1.bf16.msra.mxu0 %v966
  %1343 = vmatprep.subr.bf16.mxu0 %v971
  %1344 = vmatpush1.bf16.msra.mxu0 %v970
  %1345 = vmatprep.subr.bf16.mxu0 %v975
  %1346 = vmatpush1.bf16.msra.mxu0 %v974
  %1347 = vmatprep.subr.bf16.mxu0 %v979
  %1348 = vmatpush1.bf16.msra.mxu0 %v978
  %1349 = vmatprep.subr.bf16.mxu0 %v983
  %1350 = vmatpush1.bf16.msra.mxu0 %v982
  %1351 = vmatprep.subr.bf16.mxu0 %v987
  %1352 = vmatpush1.bf16.msra.mxu0 %v986
  %1353 = vmatprep.subr.bf16.mxu0 %v991
  %1354 = vmatpush1.bf16.msra.mxu0 %v990
  %1355 = vmatprep.subr.bf16.mxu0 %v995
  %1356 = vmatpush1.bf16.msra.mxu0 %v994
  %1357 = vmatprep.subr.bf16.mxu0 %v999
  %1358 = vmatpush1.bf16.msra.mxu0 %v998
  %1359 = vmatprep.subr.bf16.mxu0 %v1003
  %1360 = vmatpush1.bf16.msra.mxu0 %v1002
  %1361 = vmatprep.subr.bf16.mxu0 %v1007
  %1362 = vmatpush1.bf16.msra.mxu0 %v1006
  %1363 = vmatprep.subr.bf16.mxu0 %v1011
  %1364 = vmatpush1.bf16.msra.mxu0 %v1010
  %1365 = vmatprep.mubr.bf16.mxu0 %v276
  %1366 = vmatmul.mubr.bf16.gmra.mrb[0].mxu0 %v275
  %v1367 = vpop.f32.mrb[0].mxu0
  %v1368 = vadd.f32 %v1325, %v1367
  %v1369 = vpop.f32.mrb[0].mxu0
  %v1370 = vadd.f32 %v1327, %v1369
  %v1371 = vpop.f32.mrb[0].mxu0
  %v1372 = vadd.f32 %v1329, %v1371
  %v1373 = vpop.f32.mrb[0].mxu0
  %v1374 = vadd.f32 %v1331, %v1373
  %1375 = vdwg.mxu0
  %1376 = vmatprep.subr.bf16.mxu0 %v1015
  %1377 = vmatpush1.bf16.msra.mxu0 %v1014
  %1378 = vmatprep.subr.bf16.mxu0 %v1019
  %1379 = vmatpush1.bf16.msra.mxu0 %v1018
  %1380 = vmatprep.subr.bf16.mxu0 %v1023
  %1381 = vmatpush1.bf16.msra.mxu0 %v1022
  %1382 = vmatprep.subr.bf16.mxu0 %v1027
  %1383 = vmatpush1.bf16.msra.mxu0 %v1026
  %1384 = vmatprep.subr.bf16.mxu0 %v1031
  %1385 = vmatpush1.bf16.msra.mxu0 %v1030
  %1386 = vmatprep.subr.bf16.mxu0 %v1035
  %1387 = vmatpush1.bf16.msra.mxu0 %v1034
  %1388 = vmatprep.subr.bf16.mxu0 %v1039
  %1389 = vmatpush1.bf16.msra.mxu0 %v1038
  %1390 = vmatprep.subr.bf16.mxu0 %v1043
  %1391 = vmatpush1.bf16.msra.mxu0 %v1042
  %1392 = vmatprep.subr.bf16.mxu0 %v1047
  %1393 = vmatpush1.bf16.msra.mxu0 %v1046
  %1394 = vmatprep.subr.bf16.mxu0 %v1051
  %1395 = vmatpush1.bf16.msra.mxu0 %v1050
  %1396 = vmatprep.subr.bf16.mxu0 %v1055
  %1397 = vmatpush1.bf16.msra.mxu0 %v1054
  %1398 = vmatprep.subr.bf16.mxu0 %v1059
  %1399 = vmatpush1.bf16.msra.mxu0 %v1058
  %1400 = vmatprep.subr.bf16.mxu0 %v1063
  %1401 = vmatpush1.bf16.msra.mxu0 %v1062
  %1402 = vmatprep.subr.bf16.mxu0 %v1067
  %1403 = vmatpush1.bf16.msra.mxu0 %v1066
  %1404 = vmatprep.subr.bf16.mxu0 %v1071
  %1405 = vmatpush1.bf16.msra.mxu0 %v1070
  %1406 = vmatprep.subr.bf16.mxu0 %v1075
  %1407 = vmatpush1.bf16.msra.mxu0 %v1074
  %1408 = vmatprep.mubr.bf16.mxu0 %v278
  %1409 = vmatmul.mubr.bf16.gmra.mrb[0].mxu0 %v277
  %v1410 = vpop.f32.mrb[0].mxu0
  %v1411 = vadd.f32 %v1368, %v1410
  %v1412 = vpop.f32.mrb[0].mxu0
  %v1413 = vadd.f32 %v1370, %v1412
  %v1414 = vpop.f32.mrb[0].mxu0
  %v1415 = vadd.f32 %v1372, %v1414
  %v1416 = vpop.f32.mrb[0].mxu0
  %v1417 = vadd.f32 %v1374, %v1416
  %1418 = vdwg.mxu0
  %1419 = vmatprep.subr.bf16.mxu0 %v1079
  %1420 = vmatpush1.bf16.msra.mxu0 %v1078
  %1421 = vmatprep.subr.bf16.mxu0 %v1083
  %1422 = vmatpush1.bf16.msra.mxu0 %v1082
  %1423 = vmatprep.subr.bf16.mxu0 0
  %1424 = vmatpush1.bf16.msra.mxu0 0
  %1425 = vmatprep.subr.bf16.mxu0 0
  %1426 = vmatpush1.bf16.msra.mxu0 0
  %1427 = vmatprep.subr.bf16.mxu0 0
  %1428 = vmatpush1.bf16.msra.mxu0 0
  %1429 = vmatprep.subr.bf16.mxu0 0
  %1430 = vmatpush1.bf16.msra.mxu0 0
  %1431 = vmatprep.subr.bf16.mxu0 0
  %1432 = vmatpush1.bf16.msra.mxu0 0
  %1433 = vmatprep.subr.bf16.mxu0 0
  %1434 = vmatpush1.bf16.msra.mxu0 0
  %1435 = vmatprep.subr.bf16.mxu0 0
  %1436 = vmatpush1.bf16.msra.mxu0 0
  %1437 = vmatprep.subr.bf16.mxu0 0
  %1438 = vmatpush1.bf16.msra.mxu0 0
  %1439 = vmatprep.subr.bf16.mxu0 0
  %1440 = vmatpush1.bf16.msra.mxu0 0
  %1441 = vmatprep.subr.bf16.mxu0 0
  %1442 = vmatpush1.bf16.msra.mxu0 0
  %1443 = vmatprep.subr.bf16.mxu0 0
  %1444 = vmatpush1.bf16.msra.mxu0 0
  %1445 = vmatprep.subr.bf16.mxu0 0
  %1446 = vmatpush1.bf16.msra.mxu0 0
  %1447 = vmatprep.subr.bf16.mxu0 0
  %1448 = vmatpush1.bf16.msra.mxu0 0
  %1449 = vmatprep.subr.bf16.mxu0 0
  %1450 = vmatpush1.bf16.msra.mxu0 0
  %1451 = vmatprep.mubr.bf16.mxu0 0
  %1452 = vmatmul.mubr.bf16.gmra.mrb[0].mxu0 %v1288
  %v1453 = vpop.f32.mrb[0].mxu0
  %v1454 = vadd.f32 %v1411, %v1453
  %v1455 = vpop.f32.mrb[0].mxu0
  %v1456 = vadd.f32 %v1413, %v1455
  %v1457 = vpop.f32.mrb[0].mxu0
  %v1458 = vadd.f32 %v1415, %v1457
  %v1459 = vpop.f32.mrb[0].mxu0
  %v1460 = vadd.f32 %v1417, %v1459
  %1461 = vdwg.mxu0
  %1462 = vmatprep.subr.bf16.mxu0 %v889
  %1463 = vmatpush1.bf16.msra.mxu0 %v888
  %1464 = vmatprep.subr.bf16.mxu0 %v893
  %1465 = vmatpush1.bf16.msra.mxu0 %v892
  %1466 = vmatprep.subr.bf16.mxu0 %v897
  %1467 = vmatpush1.bf16.msra.mxu0 %v896
  %1468 = vmatprep.subr.bf16.mxu0 %v901
  %1469 = vmatpush1.bf16.msra.mxu0 %v900
  %1470 = vmatprep.subr.bf16.mxu0 %v905
  %1471 = vmatpush1.bf16.msra.mxu0 %v904
  %1472 = vmatprep.subr.bf16.mxu0 %v909
  %1473 = vmatpush1.bf16.msra.mxu0 %v908
  %1474 = vmatprep.subr.bf16.mxu0 %v913
  %1475 = vmatpush1.bf16.msra.mxu0 %v912
  %1476 = vmatprep.subr.bf16.mxu0 %v917
  %1477 = vmatpush1.bf16.msra.mxu0 %v916
  %1478 = vmatprep.subr.bf16.mxu0 %v921
  %1479 = vmatpush1.bf16.msra.mxu0 %v920
  %1480 = vmatprep.subr.bf16.mxu0 %v925
  %1481 = vmatpush1.bf16.msra.mxu0 %v924
  %1482 = vmatprep.subr.bf16.mxu0 %v929
  %1483 = vmatpush1.bf16.msra.mxu0 %v928
  %1484 = vmatprep.subr.bf16.mxu0 %v933
  %1485 = vmatpush1.bf16.msra.mxu0 %v932
  %1486 = vmatprep.subr.bf16.mxu0 %v937
  %1487 = vmatpush1.bf16.msra.mxu0 %v936
  %1488 = vmatprep.subr.bf16.mxu0 %v941
  %1489 = vmatpush1.bf16.msra.mxu0 %v940
  %1490 = vmatprep.subr.bf16.mxu0 %v945
  %1491 = vmatpush1.bf16.msra.mxu0 %v944
  %1492 = vmatprep.subr.bf16.mxu0 %v949
  %1493 = vmatpush1.bf16.msra.mxu0 %v948
  %1494 = vmatprep.mubr.bf16.mxu0 %v274
  %1495 = vmatmul.mubr.bf16.gmra.mrb[0].mxu0 %v273
  %v1496 = vpop.f32.mrb[0].mxu0
  %v1497 = vadd.f32 %v242, %v1496
  %v1498 = vpop.f32.mrb[0].mxu0
  %v1499 = vadd.f32 %v246, %v1498
  %v1500 = vpop.f32.mrb[0].mxu0
  %v1501 = vadd.f32 %v242, %v1500
  %v1502 = vpop.f32.mrb[0].mxu0
  %v1503 = vadd.f32 %v246, %v1502
  %1504 = vdwg.mxu0
  %1505 = vmatprep.subr.bf16.mxu0 %v953
  %1506 = vmatpush1.bf16.msra.mxu0 %v952
  %1507 = vmatprep.subr.bf16.mxu0 %v957
  %1508 = vmatpush1.bf16.msra.mxu0 %v956
  %1509 = vmatprep.subr.bf16.mxu0 %v961
  %1510 = vmatpush1.bf16.msra.mxu0 %v960
  %1511 = vmatprep.subr.bf16.mxu0 %v965
  %1512 = vmatpush1.bf16.msra.mxu0 %v964
  %1513 = vmatprep.subr.bf16.mxu0 %v969
  %1514 = vmatpush1.bf16.msra.mxu0 %v968
  %1515 = vmatprep.subr.bf16.mxu0 %v973
  %1516 = vmatpush1.bf16.msra.mxu0 %v972
  %1517 = vmatprep.subr.bf16.mxu0 %v977
  %1518 = vmatpush1.bf16.msra.mxu0 %v976
  %1519 = vmatprep.subr.bf16.mxu0 %v981
  %1520 = vmatpush1.bf16.msra.mxu0 %v980
  %1521 = vmatprep.subr.bf16.mxu0 %v985
  %1522 = vmatpush1.bf16.msra.mxu0 %v984
  %1523 = vmatprep.subr.bf16.mxu0 %v989
  %1524 = vmatpush1.bf16.msra.mxu0 %v988
  %1525 = vmatprep.subr.bf16.mxu0 %v993
  %1526 = vmatpush1.bf16.msra.mxu0 %v992
  %1527 = vmatprep.subr.bf16.mxu0 %v997
  %1528 = vmatpush1.bf16.msra.mxu0 %v996
  %1529 = vmatprep.subr.bf16.mxu0 %v1001
  %1530 = vmatpush1.bf16.msra.mxu0 %v1000
  %1531 = vmatprep.subr.bf16.mxu0 %v1005
  %1532 = vmatpush1.bf16.msra.mxu0 %v1004
  %1533 = vmatprep.subr.bf16.mxu0 %v1009
  %1534 = vmatpush1.bf16.msra.mxu0 %v1008
  %1535 = vmatprep.subr.bf16.mxu0 %v1013
  %1536 = vmatpush1.bf16.msra.mxu0 %v1012
  %1537 = vmatprep.mubr.bf16.mxu0 %v276
  %1538 = vmatmul.mubr.bf16.gmra.mrb[0].mxu0 %v275
  %v1539 = vpop.f32.mrb[0].mxu0
  %v1540 = vadd.f32 %v1497, %v1539
  %v1541 = vpop.f32.mrb[0].mxu0
  %v1542 = vadd.f32 %v1499, %v1541
  %v1543 = vpop.f32.mrb[0].mxu0
  %v1544 = vadd.f32 %v1501, %v1543
  %v1545 = vpop.f32.mrb[0].mxu0
  %v1546 = vadd.f32 %v1503, %v1545
  %1547 = vdwg.mxu0
  %1548 = vmatprep.subr.bf16.mxu0 %v1017
  %1549 = vmatpush1.bf16.msra.mxu0 %v1016
  %1550 = vmatprep.subr.bf16.mxu0 %v1021
  %1551 = vmatpush1.bf16.msra.mxu0 %v1020
  %1552 = vmatprep.subr.bf16.mxu0 %v1025
  %1553 = vmatpush1.bf16.msra.mxu0 %v1024
  %1554 = vmatprep.subr.bf16.mxu0 %v1029
  %1555 = vmatpush1.bf16.msra.mxu0 %v1028
  %1556 = vmatprep.subr.bf16.mxu0 %v1033
  %1557 = vmatpush1.bf16.msra.mxu0 %v1032
  %1558 = vmatprep.subr.bf16.mxu0 %v1037
  %1559 = vmatpush1.bf16.msra.mxu0 %v1036
  %1560 = vmatprep.subr.bf16.mxu0 %v1041
  %1561 = vmatpush1.bf16.msra.mxu0 %v1040
  %1562 = vmatprep.subr.bf16.mxu0 %v1045
  %1563 = vmatpush1.bf16.msra.mxu0 %v1044
  %1564 = vmatprep.subr.bf16.mxu0 %v1049
  %1565 = vmatpush1.bf16.msra.mxu0 %v1048
  %1566 = vmatprep.subr.bf16.mxu0 %v1053
  %1567 = vmatpush1.bf16.msra.mxu0 %v1052
  %1568 = vmatprep.subr.bf16.mxu0 %v1057
  %1569 = vmatpush1.bf16.msra.mxu0 %v1056
  %1570 = vmatprep.subr.bf16.mxu0 %v1061
  %1571 = vmatpush1.bf16.msra.mxu0 %v1060
  %1572 = vmatprep.subr.bf16.mxu0 %v1065
  %1573 = vmatpush1.bf16.msra.mxu0 %v1064
  %1574 = vmatprep.subr.bf16.mxu0 %v1069
  %1575 = vmatpush1.bf16.msra.mxu0 %v1068
  %1576 = vmatprep.subr.bf16.mxu0 %v1073
  %1577 = vmatpush1.bf16.msra.mxu0 %v1072
  %1578 = vmatprep.subr.bf16.mxu0 %v1077
  %1579 = vmatpush1.bf16.msra.mxu0 %v1076
  %1580 = vmatprep.mubr.bf16.mxu0 %v278
  %1581 = vmatmul.mubr.bf16.gmra.mrb[0].mxu0 %v277
  %v1582 = vpop.f32.mrb[0].mxu0
  %v1583 = vadd.f32 %v1540, %v1582
  %v1584 = vpop.f32.mrb[0].mxu0
  %v1585 = vadd.f32 %v1542, %v1584
  %v1586 = vpop.f32.mrb[0].mxu0
  %v1587 = vadd.f32 %v1544, %v1586
  %v1588 = vpop.f32.mrb[0].mxu0
  %v1589 = vadd.f32 %v1546, %v1588
  %1590 = vdwg.mxu0
  %1591 = vmatprep.subr.bf16.mxu0 %v1081
  %1592 = vmatpush1.bf16.msra.mxu0 %v1080
  %1593 = vmatprep.subr.bf16.mxu0 %v1085
  %1594 = vmatpush1.bf16.msra.mxu0 %v1084
  %1595 = vmatprep.subr.bf16.mxu0 0
  %1596 = vmatpush1.bf16.msra.mxu0 0
  %1597 = vmatprep.subr.bf16.mxu0 0
  %1598 = vmatpush1.bf16.msra.mxu0 0
  %1599 = vmatprep.subr.bf16.mxu0 0
  %1600 = vmatpush1.bf16.msra.mxu0 0
  %1601 = vmatprep.subr.bf16.mxu0 0
  %1602 = vmatpush1.bf16.msra.mxu0 0
  %1603 = vmatprep.subr.bf16.mxu0 0
  %1604 = vmatpush1.bf16.msra.mxu0 0
  %1605 = vmatprep.subr.bf16.mxu0 0
  %1606 = vmatpush1.bf16.msra.mxu0 0
  %1607 = vmatprep.subr.bf16.mxu0 0
  %1608 = vmatpush1.bf16.msra.mxu0 0
  %1609 = vmatprep.subr.bf16.mxu0 0
  %1610 = vmatpush1.bf16.msra.mxu0 0
  %1611 = vmatprep.subr.bf16.mxu0 0
  %1612 = vmatpush1.bf16.msra.mxu0 0
  %1613 = vmatprep.subr.bf16.mxu0 0
  %1614 = vmatpush1.bf16.msra.mxu0 0
  %1615 = vmatprep.subr.bf16.mxu0 0
  %1616 = vmatpush1.bf16.msra.mxu0 0
  %1617 = vmatprep.subr.bf16.mxu0 0
  %1618 = vmatpush1.bf16.msra.mxu0 0
  %1619 = vmatprep.subr.bf16.mxu0 0
  %1620 = vmatpush1.bf16.msra.mxu0 0
  %1621 = vmatprep.subr.bf16.mxu0 0
  %1622 = vmatpush1.bf16.msra.mxu0 0
  %1623 = vmatprep.mubr.bf16.mxu0 0
  %1624 = vmatmul.mubr.bf16.gmra.mrb[0].mxu0 %v1288
  %v1625 = vpop.f32.mrb[0].mxu0
  %v1626 = vadd.f32 %v1583, %v1625
  %v1627 = vpop.f32.mrb[0].mxu0
  %v1628 = vadd.f32 %v1585, %v1627
  %v1629 = vpop.f32.mrb[0].mxu0
  %v1630 = vadd.f32 %v1587, %v1629
  %v1631 = vpop.f32.mrb[0].mxu0
  %v1632 = vadd.f32 %v1589, %v1631
  %1633 = vdwg.mxu0
  %v1634 = vmax.f32 %v1454, 0.0
  %v1635 = vmax.f32 %v1456, 0.0
  %v1636 = vmax.f32 %v1626, 0.0
  %v1637 = vmax.f32 %v1628, 0.0
  %v1638 = vmax.f32 %v1458, 0.0
  %v1639 = vmax.f32 %v1460, 0.0
  %v1640 = vmax.f32 %v1630, 0.0
  %v1641 = vmax.f32 %v1632, 0.0
  %v1642 = vpack.c.bf16 %v1638, %v1634
  %v1643 = vpack.c.bf16 %v1639, %v1635
  %v1644 = vpack.c.bf16 %v1640, %v1636
  %v1645 = vpack.c.bf16 %v1641, %v1637
  %v1646 = vld [vmem:[%s3] sm:$0xf]
  %v1647 = vld [vmem:[%s3 + $0x4] sm:$0xf]
  %v1648 = vld [vmem:[%s3 + $0x8] sm:$0xf]
  %v1649 = vld [vmem:[%s3 + $0xc] sm:$0xf]
  %v1650 = vld [vmem:[%s3 + $0x10] sm:$0xf]
  %v1651 = vld [vmem:[%s3 + $0x14] sm:$0xf]
  %v1652 = vld [vmem:[%s3 + $0x18] sm:$0xf]
  %v1653 = vld [vmem:[%s3 + $0x1c] sm:$0xf]
  %v1654 = vld [vmem:[%s3 + $0x20] sm:$0xf]
  %v1655 = vld [vmem:[%s3 + $0x24] sm:$0xf]
  %v1656 = vld [vmem:[%s3 + $0x28] sm:$0xf]
  %v1657 = vld [vmem:[%s3 + $0x2c] sm:$0xf]
  %v1658 = vld [vmem:[%s3 + $0x30] sm:$0xf]
  %v1659 = vld [vmem:[%s3 + $0x34] sm:$0xf]
  %v1660 = vld [vmem:[%s3 + $0x38] sm:$0xf]
  %v1661 = vld [vmem:[%s3 + $0x3c] sm:$0xf]
  %v1662 = vld [vmem:[%s3 + $0x40] sm:$0xf]
  %v1663 = vld [vmem:[%s3 + $0x44] sm:$0xf]
  %v1664 = vld [vmem:[%s3 + $0x48] sm:$0xf]
  %v1665 = vld [vmem:[%s3 + $0x4c] sm:$0xf]
  %v1666 = vld [vmem:[%s3 + $0x50] sm:$0xf]
  %v1667 = vld [vmem:[%s3 + $0x54] sm:$0xf]
  %v1668 = vld [vmem:[%s3 + $0x58] sm:$0xf]
  %v1669 = vld [vmem:[%s3 + $0x5c] sm:$0xf]
  %v1670 = vld [vmem:[%s3 + $0x60] sm:$0xf]
  %v1671 = vld [vmem:[%s3 + $0x64] sm:$0xf]
  %v1672 = vld [vmem:[%s3 + $0x68] sm:$0xf]
  %v1673 = vld [vmem:[%s3 + $0x6c] sm:$0xf]
  %v1674 = vld [vmem:[%s3 + $0x70] sm:$0xf]
  %v1675 = vld [vmem:[%s3 + $0x74] sm:$0xf]
  %v1676 = vld [vmem:[%s3 + $0x78] sm:$0xf]
  %v1677 = vld [vmem:[%s3 + $0x7c] sm:$0xf]
  %v1678 = vld [vmem:[%s3 + $0x80] sm:$0xf]
  %v1679 = vld [vmem:[%s3 + $0x84] sm:$0xf]
  %v1680 = vld [vmem:[%s3 + $0x88] sm:$0xf]
  %v1681 = vld [vmem:[%s3 + $0x8c] sm:$0xf]
  %v1682 = vld [vmem:[%s3 + $0x90] sm:$0xf]
  %v1683 = vld [vmem:[%s3 + $0x94] sm:$0xf]
  %v1684 = vld [vmem:[%s3 + $0x98] sm:$0xf]
  %v1685 = vld [vmem:[%s3 + $0x9c] sm:$0xf]
  %v1686 = vld [vmem:[%s3 + $0xa0] sm:$0xf]
  %v1687 = vld [vmem:[%s3 + $0xa4] sm:$0xf]
  %v1688 = vld [vmem:[%s3 + $0xa8] sm:$0xf]
  %v1689 = vld [vmem:[%s3 + $0xac] sm:$0xf]
  %v1690 = vld [vmem:[%s3 + $0xb0] sm:$0xf]
  %v1691 = vld [vmem:[%s3 + $0xb4] sm:$0xf]
  %v1692 = vld [vmem:[%s3 + $0xb8] sm:$0xf]
  %v1693 = vld [vmem:[%s3 + $0xbc] sm:$0xf]
  %v1694 = vld [vmem:[%s3 + $0xc0] sm:$0xf]
  %v1695 = vld [vmem:[%s3 + $0xc4] sm:$0xf]
  %v1696 = vld [vmem:[%s3 + $0xc8] sm:$0xf]
  %v1697 = vld [vmem:[%s3 + $0xcc] sm:$0xf]
  %v1698 = vld [vmem:[%s3 + $0xd0] sm:$0xf]
  %v1699 = vld [vmem:[%s3 + $0xd4] sm:$0xf]
  %v1700 = vld [vmem:[%s3 + $0xd8] sm:$0xf]
  %v1701 = vld [vmem:[%s3 + $0xdc] sm:$0xf]
  %v1702 = vld [vmem:[%s3 + $0xe0] sm:$0xf]
  %v1703 = vld [vmem:[%s3 + $0xe4] sm:$0xf]
  %v1704 = vld [vmem:[%s3 + $0xe8] sm:$0xf]
  %v1705 = vld [vmem:[%s3 + $0xec] sm:$0xf]
  %v1706 = vld [vmem:[%s3 + $0xf0] sm:$0xf]
  %v1707 = vld [vmem:[%s3 + $0xf4] sm:$0xf]
  %v1708 = vld [vmem:[%s3 + $0xf8] sm:$0x3]
  %v1709 = vld [vmem:[%s4] sm:$0x1]
  %v1711 = vlaneseq
  %v1712 = vshrl.u32 %v1711, 7
  %v1713 = vsub.s32 0, %v1712
  %v1714 = vrot.slane %v1709, %v1713
  %v1779 = vunpack.c.l.b16 %v1646
  %v1780 = vunpack.c.l.b16 %v1647
  %v1781 = vunpack.c.l.b16 %v1648
  %v1782 = vunpack.c.l.b16 %v1649
  %v1783 = vunpack.c.l.b16 %v1650
  %v1784 = vunpack.c.l.b16 %v1651
  %v1785 = vunpack.c.l.b16 %v1652
  %v1786 = vunpack.c.l.b16 %v1653
  %v1787 = vunpack.c.l.b16 %v1654
  %v1788 = vunpack.c.l.b16 %v1655
  %v1789 = vunpack.c.l.b16 %v1656
  %v1790 = vunpack.c.l.b16 %v1657
  %v1791 = vunpack.c.l.b16 %v1658
  %v1792 = vunpack.c.l.b16 %v1659
  %v1793 = vunpack.c.l.b16 %v1660
  %v1794 = vunpack.c.l.b16 %v1661
  %v1795 = vunpack.c.l.b16 %v1662
  %v1796 = vunpack.c.l.b16 %v1663
  %v1797 = vunpack.c.l.b16 %v1664
  %v1798 = vunpack.c.l.b16 %v1665
  %v1799 = vunpack.c.l.b16 %v1666
  %v1800 = vunpack.c.l.b16 %v1667
  %v1801 = vunpack.c.l.b16 %v1668
  %v1802 = vunpack.c.l.b16 %v1669
  %v1803 = vunpack.c.l.b16 %v1670
  %v1804 = vunpack.c.l.b16 %v1671
  %v1805 = vunpack.c.l.b16 %v1672
  %v1806 = vunpack.c.l.b16 %v1673
  %v1807 = vunpack.c.l.b16 %v1674
  %v1808 = vunpack.c.l.b16 %v1675
  %v1809 = vunpack.c.l.b16 %v1676
  %v1810 = vunpack.c.l.b16 %v1677
  %v1811 = vunpack.c.l.b16 %v1678
  %v1812 = vunpack.c.l.b16 %v1679
  %v1813 = vunpack.c.l.b16 %v1680
  %v1814 = vunpack.c.l.b16 %v1681
  %v1815 = vunpack.c.l.b16 %v1682
  %v1816 = vunpack.c.l.b16 %v1683
  %v1817 = vunpack.c.l.b16 %v1684
  %v1818 = vunpack.c.l.b16 %v1685
  %v1819 = vunpack.c.l.b16 %v1686
  %v1820 = vunpack.c.l.b16 %v1687
  %v1821 = vunpack.c.l.b16 %v1688
  %v1822 = vunpack.c.l.b16 %v1689
  %v1823 = vunpack.c.l.b16 %v1690
  %v1824 = vunpack.c.l.b16 %v1691
  %v1825 = vunpack.c.l.b16 %v1692
  %v1826 = vunpack.c.l.b16 %v1693
  %v1827 = vunpack.c.l.b16 %v1694
  %v1828 = vunpack.c.l.b16 %v1695
  %v1829 = vunpack.c.l.b16 %v1696
  %v1830 = vunpack.c.l.b16 %v1697
  %v1831 = vunpack.c.l.b16 %v1698
  %v1832 = vunpack.c.l.b16 %v1699
  %v1833 = vunpack.c.l.b16 %v1700
  %v1834 = vunpack.c.l.b16 %v1701
  %v1835 = vunpack.c.l.b16 %v1702
  %v1836 = vunpack.c.l.b16 %v1703
  %v1837 = vunpack.c.l.b16 %v1704
  %v1838 = vunpack.c.l.b16 %v1705
  %v1839 = vunpack.c.l.b16 %v1706
  %v1840 = vunpack.c.l.b16 %v1707
  %v1841 = vunpack.c.l.b16 %v1708
  %v1842 = vpack.c.b16 %v1780, %v1779
  %v1843 = vpack.c.b16 %v1782, %v1781
  %v1844 = vpack.c.b16 %v1784, %v1783
  %v1845 = vpack.c.b16 %v1786, %v1785
  %v1846 = vpack.c.b16 %v1788, %v1787
  %v1847 = vpack.c.b16 %v1790, %v1789
  %v1848 = vpack.c.b16 %v1792, %v1791
  %v1849 = vpack.c.b16 %v1794, %v1793
  %v1850 = vpack.c.b16 %v1796, %v1795
  %v1851 = vpack.c.b16 %v1798, %v1797
  %v1852 = vpack.c.b16 %v1800, %v1799
  %v1853 = vpack.c.b16 %v1802, %v1801
  %v1854 = vpack.c.b16 %v1804, %v1803
  %v1855 = vpack.c.b16 %v1806, %v1805
  %v1856 = vpack.c.b16 %v1808, %v1807
  %v1857 = vpack.c.b16 %v1810, %v1809
  %v1858 = vpack.c.b16 %v1812, %v1811
  %v1859 = vpack.c.b16 %v1814, %v1813
  %v1860 = vpack.c.b16 %v1816, %v1815
  %v1861 = vpack.c.b16 %v1818, %v1817
  %v1862 = vpack.c.b16 %v1820, %v1819
  %v1863 = vpack.c.b16 %v1822, %v1821
  %v1864 = vpack.c.b16 %v1824, %v1823
  %v1865 = vpack.c.b16 %v1826, %v1825
  %v1866 = vpack.c.b16 %v1828, %v1827
  %v1867 = vpack.c.b16 %v1830, %v1829
  %v1868 = vpack.c.b16 %v1832, %v1831
  %v1869 = vpack.c.b16 %v1834, %v1833
  %v1870 = vpack.c.b16 %v1836, %v1835
  %v1871 = vpack.c.b16 %v1838, %v1837
  %v1872 = vpack.c.b16 %v1840, %v1839
  %v1873 = vpack.c.b16 %v1841, %v1841
  %vm1905 = vcmask 949248
  %v1907 = vsel %vm1905, %v1645, 0
  %vm1909 = vcmask 1041408
  %v1911 = vsel %vm1909, %v1873, 0
  %1913 = vmatprep.subr.bf16.mxu0 0
  %1914 = vmatpush1.bf16.msra.mxu0 %v1842
  %1915 = vmatprep.subr.bf16.mxu0 0
  %1916 = vmatpush1.bf16.msra.mxu0 %v1843
  %1917 = vmatprep.subr.bf16.mxu0 0
  %1918 = vmatpush1.bf16.msra.mxu0 %v1844
  %1919 = vmatprep.subr.bf16.mxu0 0
  %1920 = vmatpush1.bf16.msra.mxu0 %v1845
  %1921 = vmatprep.subr.bf16.mxu0 0
  %1922 = vmatpush1.bf16.msra.mxu0 %v1846
  %1923 = vmatprep.subr.bf16.mxu0 0
  %1924 = vmatpush1.bf16.msra.mxu0 %v1847
  %1925 = vmatprep.subr.bf16.mxu0 0
  %1926 = vmatpush1.bf16.msra.mxu0 %v1848
  %1927 = vmatprep.subr.bf16.mxu0 0
  %1928 = vmatpush1.bf16.msra.mxu0 %v1849
  %1929 = vmatprep.subr.bf16.mxu0 0
  %1930 = vmatpush1.bf16.msra.mxu0 %v1850
  %1931 = vmatprep.subr.bf16.mxu0 0
  %1932 = vmatpush1.bf16.msra.mxu0 %v1851
  %1933 = vmatprep.subr.bf16.mxu0 0
  %1934 = vmatpush1.bf16.msra.mxu0 %v1852
  %1935 = vmatprep.subr.bf16.mxu0 0
  %1936 = vmatpush1.bf16.msra.mxu0 %v1853
  %1937 = vmatprep.subr.bf16.mxu0 0
  %1938 = vmatpush1.bf16.msra.mxu0 %v1854
  %1939 = vmatprep.subr.bf16.mxu0 0
  %1940 = vmatpush1.bf16.msra.mxu0 %v1855
  %1941 = vmatprep.subr.bf16.mxu0 0
  %1942 = vmatpush1.bf16.msra.mxu0 %v1856
  %1943 = vmatprep.subr.bf16.mxu0 0
  %1944 = vmatpush1.bf16.msra.mxu0 %v1857
  %1945 = vmatprep.mubr.bf16.mxu0 %v1643
  %1946 = vmatmul.mubr.bf16.gmra.mrb[0].mxu0 %v1642
  %v1947 = vpop.f32.mrb[0].mxu0
  %v1948 = vadd.f32 %v1714, %v1947
  %v1949 = vpop.f32.mrb[0].mxu0
  %v1950 = vpop.f32.mrb[0].mxu0
  %v1951 = vadd.f32 %v1714, %v1950
  %v1952 = vpop.f32.mrb[0].mxu0
  %1953 = vdwg.mxu0
  %1954 = vmatprep.subr.bf16.mxu0 0
  %1955 = vmatpush1.bf16.msra.mxu0 %v1858
  %1956 = vmatprep.subr.bf16.mxu0 0
  %1957 = vmatpush1.bf16.msra.mxu0 %v1859
  %1958 = vmatprep.subr.bf16.mxu0 0
  %1959 = vmatpush1.bf16.msra.mxu0 %v1860
  %1960 = vmatprep.subr.bf16.mxu0 0
  %1961 = vmatpush1.bf16.msra.mxu0 %v1861
  %1962 = vmatprep.subr.bf16.mxu0 0
  %1963 = vmatpush1.bf16.msra.mxu0 %v1862
  %1964 = vmatprep.subr.bf16.mxu0 0
  %1965 = vmatpush1.bf16.msra.mxu0 %v1863
  %1966 = vmatprep.subr.bf16.mxu0 0
  %1967 = vmatpush1.bf16.msra.mxu0 %v1864
  %1968 = vmatprep.subr.bf16.mxu0 0
  %1969 = vmatpush1.bf16.msra.mxu0 %v1865
  %1970 = vmatprep.subr.bf16.mxu0 0
  %1971 = vmatpush1.bf16.msra.mxu0 %v1866
  %1972 = vmatprep.subr.bf16.mxu0 0
  %1973 = vmatpush1.bf16.msra.mxu0 %v1867
  %1974 = vmatprep.subr.bf16.mxu0 0
  %1975 = vmatpush1.bf16.msra.mxu0 %v1868
  %1976 = vmatprep.subr.bf16.mxu0 0
  %1977 = vmatpush1.bf16.msra.mxu0 %v1869
  %1978 = vmatprep.subr.bf16.mxu0 0
  %1979 = vmatpush1.bf16.msra.mxu0 %v1870
  %1980 = vmatprep.subr.bf16.mxu0 0
  %1981 = vmatpush1.bf16.msra.mxu0 %v1871
  %1982 = vmatprep.subr.bf16.mxu0 0
  %1983 = vmatpush1.bf16.msra.mxu0 %v1872
  %1984 = vmatprep.subr.bf16.mxu0 0
  %1985 = vmatpush1.bf16.msra.mxu0 %v1911
  %1986 = vmatprep.mubr.bf16.mxu0 %v1907
  %1987 = vmatmul.mubr.bf16.gmra.mrb[0].mxu0 %v1644
  %v1988 = vpop.f32.mrb[0].mxu0
  %v1989 = vadd.f32 %v1948, %v1988
  %v1990 = vpop.f32.mrb[0].mxu0
  %v1991 = vpop.f32.mrb[0].mxu0
  %v1992 = vadd.f32 %v1951, %v1991
  %v1993 = vpop.f32.mrb[0].mxu0
  %1994 = vdwg.mxu0
  %vm1995 = vcmask 80896
  %v1996 = vsel %vm1995, %v1989, -inf
  %1997 = vmax.xlane.f32.xlu0 %v1996
  %v1998 = vpop.xlane.xlu0 %1997
  %v1999 = vsel %vm1995, %v1992, -inf
  %2000 = vmax.xlane.f32.xlu0 %v1999
  %v2001 = vpop.xlane.xlu0 %2000
  %v2002 = vsub.f32 %v1989, %v1998
  %v2003 = vsub.f32 %v1992, %v2001
  %v2004 = vmul.f32 %v2002, 1.442695
  %v2005 = vpow.pop %v2004
  %v2006 = vmul.f32 %v2003, 1.442695
  %v2007 = vpow.pop %v2006
  %v2008 = vsel %vm1995, %v2005, 0.0
  %2009 = vadd.xlane.f32.xlu0 %v2008
  %v2010 = vpop.xlane.xlu0 %2009
  %v2011 = vsel %vm1995, %v2007, 0.0
  %2012 = vadd.xlane.f32.xlu0 %v2011
  %v2013 = vpop.xlane.xlu0 %2012
  %v2014 = vlog2.pop %v2010
  %v2015 = vmul.f32 %v2014, 0.6931472
  %v2016 = vlog2.pop %v2013
  %v2017 = vmul.f32 %v2016, 0.6931472
  %v2018 = vadd.f32 %v1998, %v2015
  %v2019 = vadd.f32 %v2001, %v2017
  %v2020 = vsub.f32 %v1989, %v2018
  %v2021 = vsub.f32 %v1992, %v2019
  %2022 = vst.msk [vmem:[%s5] sm:$0xff] %vm1995, %v2020
  %2023 = vst.msk [vmem:[%s5 + $0x8] sm:$0xff] %vm1995, %v2021
  // Predicated region
  $region22: #{net_forward.5} parent=0 // pred_check
    _
  $region23: #{net_forward.5} parent=0 // pred_check_branch
    %2025 = sbr.rel (0) target = $region25
  $region24: #{net_forward.5} parent=0 // pred_region
    _
  $region25: #{net_forward.5} parent=0 // pred_fallthru
    _
  // Predicated region
  $region26: #{net_forward.5} parent=0 // pred_check
    _
  $region27: #{net_forward.5} parent=0 // pred_check_branch
    %2027 = sbr.rel (0) target = $region29
  $region28: #{net_forward.5} parent=0 // pred_region
    _
  $region29: #{net_forward.5} parent=0 // pred_fallthru
    _

</llo_original>
